<compile_context>
chip_gen: v6e
topology: v6e:2x2x1
jax: 0.10.0
libtpu: 0.0.40
codegen_flags: <defaults>
</compile_context>

<pallas_src>
import math

import jax
import jax.numpy as jnp
import numpy as np
from jax.experimental import pallas as pl
from jax.experimental.pallas import tpu as pltpu

EPS = 1e-5            # layer_norm_eps
VPU_NDFT_MAX_N = 8    # use the VPU MAC form of the N-axis DFT up to this batch


def _round_up(x, m):
    return (x + m - 1) // m * m


def _pad_to(x, shape):
    return jnp.pad(x, [(0, t - s) for s, t in zip(x.shape, shape)])


def dft_cos_sin(n):
    k = jnp.arange(n, dtype=jnp.float32)
    theta = (2.0 * jnp.pi / n) * jnp.outer(k, k)
    return jnp.cos(theta), jnp.sin(theta)


def _vmem_capacity_bytes():
    try:
        cap = getattr(pltpu.get_tpu_info(), "vmem_capacity_bytes", None)
        if cap:
            return int(cap)
    except Exception:
        pass
    return 64 * 1024 * 1024            # conservative default (v7x-sized VMEM)


def _pick_tile(S, Np, Ep, Dhp, P):
    """VMEM-model-based tile size + scoped VMEM limit (generation aware)."""
    cap = _vmem_capacity_bytes()
    small_vmem = cap <= 96 * 1024 * 1024            # v7x-class: 64 MiB per TC
    budget = int(cap * 0.60)                        # scoped VMEM we ask for

    # Fixed (row-count independent) VMEM: weights & invariants, double-buffered.
    fixed = 2 * 2 * (Ep * Dhp * 2)                  # fc1 + fc2 blocks (bf16) x2 buffers
    fixed += 2 * (Ep * 2 * Ep * 2)                  # [C_E | S_E] (bf16), conservative x2
    fixed += 2 * (Np * 2 * Np * 4)                  # [C_N | -S_N] (f32)
    fixed += 2 * (8 * P * 4) + 2 * (2 * Ep * 4)     # packed per-layer vectors + final LN
    fixed += 2 * 1024 * 1024                        # compiler scratch / misc margin

    # Per activation-row (Rt = tile_s * Np) bytes.
    per_row = (4 * Ep * (2 + 2)                     # x-in + out blocks, f32, x2 buffers each
               + 4 * (2 * Ep)                       # u = [X C_E | X S_E] (f32)
               + 4 * Ep * 3                         # fft / h / x1 / x2-class live temps
               + 4 * Dhp + 2 * Dhp)                 # fc1 f32 result + bf16 relu copy

    rt_cap = 512 if small_vmem else 2048            # flops/byte target per generation
    rt = max(Np, min((budget - fixed) // per_row, rt_cap))
    tile_s = max(1, min(S, rt // Np))
    if small_vmem and S >= 2:                       # keep both v7x TensorCores busy
        tile_s = min(tile_s, -(-S // 2))

    used = fixed + tile_s * Np * per_row + 4 * 1024 * 1024
    vmem_limit = max(32 * 1024 * 1024, min(int(cap * 0.60), used))
    return tile_s, vmem_limit


def fnet_forward(src, params, *, tile_s=None):
    """src: (S, N, E) float32; returns (S, N, E) float32."""
    S, N, E = src.shape
    L, _, Dh = params['w1'].shape

    Np = _round_up(N, 8)          # batch padded to sublane multiple
    Ep = _round_up(E, 128)        # feature padded to lane multiple
    Dhp = _round_up(Dh, 128)
    P = max(Ep, Dhp)

    auto_ts, vmem_limit = _pick_tile(S, Np, Ep, Dhp, P)
    if tile_s is None:
        tile_s = auto_ts
    n_tiles = -(-S // tile_s)
    Sp = n_tiles * tile_s
    Rt = tile_s * Np              # rows per tile (flattened (s, n))
    inv_e = 1.0 / float(E)        # LN statistics use the TRUE feature count
    pad_e = float(Ep - E)

    # ----- operands -----------------------------------------------------------
    x_pad = _pad_to(src.astype(jnp.float32), (Sp, Np, Ep))

    cE, sE = dft_cos_sin(E)
    we = jnp.concatenate([_pad_to(cE, (Ep, Ep)), _pad_to(sE, (Ep, Ep))],
                         axis=1).astype(jnp.bfloat16)              # (Ep, 2Ep)
    cN, sN = dft_cos_sin(N)
    wn = jnp.concatenate([_pad_to(cN, (Np, Np)), -_pad_to(sN, (Np, Np))],
                         axis=1).astype(jnp.float32)               # (Np, 2Np) = [C_N | -S_N]

    w1 = _pad_to(params['w1'], (L, Ep, Dhp)).astype(jnp.bfloat16)
    w2 = _pad_to(params['w2'], (L, Dhp, Ep)).astype(jnp.bfloat16)

    def _rowP(v):                                  # (L, 1, *) -> (L, 1, P) f32
        return _pad_to(v.astype(jnp.float32), (L, 1, P))

    # one packed per-layer small-vector operand -> a single DMA per grid step
    vecs = jnp.concatenate([_rowP(params['lnf_w']), _rowP(params['lnf_b']),
                            _rowP(params['ln1_w']), _rowP(params['ln1_b']),
                            _rowP(params['ln2_w']), _rowP(params['ln2_b']),
                            _rowP(params['b2']),    _rowP(params['b1'])],
                           axis=1)                                  # (L, 8, P)
    lne = jnp.concatenate([_pad_to(params['lne_w'], (1, Ep)),
                           _pad_to(params['lne_b'], (1, Ep))],
                          axis=0).astype(jnp.float32)               # (2, Ep)

    # ----- kernel -------------------------------------------------------------
    def _ln(x, w, b):
        # Centered two-pass LayerNorm.  Padded feature columns of x are exactly
        # zero, so subtracting (Ep - E)*mu^2 recovers the exact sum of squared
        # deviations over the TRUE E features.  Padded w/b are zero, so padded
        # columns stay exactly zero on output.
        mu = jnp.sum(x, axis=-1, keepdims=True) * inv_e
        xc = x - mu
        var = (jnp.sum(xc * xc, axis=-1, keepdims=True) - pad_e * mu * mu) * inv_e
        var = jnp.maximum(var, 0.0)
        return xc * jax.lax.rsqrt(var + EPS) * w + b

    def kernel(x_ref, we_ref, wn_ref, vec_ref, lne_ref, w1_ref, w2_ref, out_ref):
        layer = pl.program_id(1)
        last = pl.num_programs(1) - 1

        # The output block (constant index over the layer axis) carries the f32
        # hidden state across layers; initialize it from the input on layer 0.
        @pl.when(layer == 0)
        def _():
            out_ref[...] = x_ref[...]

        x = out_ref[...].reshape(Rt, Ep)           # f32 hidden

        vec = vec_ref[...]                         # (8, P) per-layer small vectors
        lnf_w, lnf_b = vec[0:1, :Ep], vec[1:2, :Ep]
        ln1_w, ln1_b = vec[2:3, :Ep], vec[3:4, :Ep]
        ln2_w, ln2_b = vec[4:5, :Ep], vec[5:6, :Ep]
        b2, b1 = vec[6:7, :Ep], vec[7:8, :Dhp]

        # ---- Fourier mixing: Re(F_N X F_E) = C_N (X C_E) + (-S_N)(X S_E) -----
        u = jnp.dot(x.astype(jnp.bfloat16), we_ref[...],
                    preferred_element_type=jnp.float32)            # (Rt, 2Ep)
        u3 = u.reshape(tile_s, Np, 2 * Ep)
        xc_, xs_ = u3[:, :, :Ep], u3[:, :, Ep:]
        wn_m = wn_ref[...]                                         # (Np, 2Np)

        if N <= VPU_NDFT_MAX_N:
            # Tiny batch: unrolled VPU broadcast-MAC over the TRUE batch rows
            # (no MXU issue; padded batch rows never feed into valid rows).
            fft3 = jnp.zeros((tile_s, Np, Ep), jnp.float32)
            for n in range(N):
                c_col = wn_m[:, n:n + 1].reshape(1, Np, 1)              # C_N[:, n]
                ms_col = wn_m[:, Np + n:Np + n + 1].reshape(1, Np, 1)   # -S_N[:, n]
                fft3 = fft3 + c_col * xc_[:, n:n + 1, :] + ms_col * xs_[:, n:n + 1, :]
        else:
            # One fused batched matmul with [C_N | -S_N] over stacked [xc; xs].
            xcs = jnp.concatenate([xc_.astype(jnp.bfloat16),
                                   xs_.astype(jnp.bfloat16)], axis=1)   # (tile_s, 2Np, Ep)
            wnb = jnp.broadcast_to(wn_m.astype(jnp.bfloat16)[None],
                                   (tile_s, Np, 2 * Np))
            fft3 = jnp.einsum('smn,sne->sme', wnb, xcs,
                              preferred_element_type=jnp.float32)
        fft = fft3.reshape(Rt, Ep)

        # FNetBasicOutput LayerNorm, then residual + norm1
        h = _ln(x + fft, lnf_w, lnf_b)
        x1 = _ln(x + h, ln1_w, ln1_b)

        # ---- feed-forward (Mlp: fc1 -> relu -> fc2), residual + norm2 --------
        t = jnp.dot(x1.astype(jnp.bfloat16), w1_ref[...],
                    preferred_element_type=jnp.float32) + b1
        t = jnp.maximum(t, 0.0).astype(jnp.bfloat16)   # shrink the big intermediate
        ff = jnp.dot(t, w2_ref[...], preferred_element_type=jnp.float32) + b2
        x2 = _ln(x1 + ff, ln2_w, ln2_b)

        # exactly one store per iteration
        @pl.when(layer != last)
        def _():
            out_ref[...] = x2.reshape(tile_s, Np, Ep)

        @pl.when(layer == last)
        def _():
            lne_v = lne_ref[...]
            out_ref[...] = _ln(x2, lne_v[0:1, :], lne_v[1:2, :]).reshape(tile_s, Np, Ep)

    # ----- cost estimate (advisory) -------------------------------------------
    flops = L * Sp * Np * (2 * Ep * (2 * Ep)       # fused E-axis DFT
                           + 2 * (2 * Np) * Ep     # fused N-axis DFT
                           + 4 * Ep * Dhp)         # fc1 + fc2
    trans = (3 * L + 1) * Sp * Np                  # one rsqrt per LN per row
    per_layer_stream = 2 * Ep * Dhp * 2 + 8 * P * 4
    bytes_acc = (n_tiles * L * per_layer_stream        # weights re-streamed per seq tile
                 + 2 * Sp * Np * Ep * 4                # activations in + out
                 + Ep * 2 * Ep * 2 + Np * 2 * Np * 4 + 2 * Ep * 4)

    # NOTE: for very long sequences with large Dh on 128-MiB parts, flipping to
    # a layers-outer structure (activations round-tripped via HBM) can cut the
    # repeated weight streaming; not needed at these sizes.
    def _run(single_buffer_invariants):
        def cspec(shape):                          # grid-/layer-invariant operand
            nd = len(shape)
            idx = lambda s, l, _nd=nd: (0,) * _nd
            if single_buffer_invariants:
                return pl.BlockSpec(shape, idx, pipeline_mode=pl.Buffered(1))
            return pl.BlockSpec(shape, idx)

        def pspec(r, c):                           # per-layer stacked parameter (L, r, c)
            return pl.BlockSpec((pl.Squeezed(), r, c), lambda s, l: (l, 0, 0))

        grid_spec = pltpu.PrefetchScalarGridSpec(
            num_scalar_prefetch=0,
            grid=(n_tiles, L),
            in_specs=[
                pl.BlockSpec((tile_s, Np, Ep), lambda s, l: (s, 0, 0)),   # x
                cspec((Ep, 2 * Ep)),            # [C_E | S_E]
                cspec((Np, 2 * Np)),            # [C_N | -S_N]
                pspec(8, P),                    # packed per-layer vectors
                cspec((2, Ep)),                 # final encoder LN (w; b)
                pspec(Ep, Dhp),                 # fc1 weight
                pspec(Dhp, Ep),                 # fc2 weight
            ],
            out_specs=pl.BlockSpec((tile_s, Np, Ep), lambda s, l: (s, 0, 0)),
        )
        return pl.pallas_call(
            kernel,
            out_shape=jax.ShapeDtypeStruct((Sp, Np, Ep), jnp.float32),
            grid_spec=grid_spec,
            compiler_params=pltpu.CompilerParams(
                dimension_semantics=("parallel", "arbitrary"),
                vmem_limit_bytes=int(vmem_limit)),
            cost_estimate=pl.CostEstimate(flops=int(flops),
                                          transcendentals=int(trans),
                                          bytes_accessed=int(bytes_acc)),
        )(x_pad, we, wn, vecs, lne, w1, w2)

    try:
        out = _run(True)
    except Exception:
        # fallback: default (double) buffering for the invariant operands
        out = _run(False)

    return out[:S, :N, :E]


# ------------------------------ reference ------------------------------------
def _layernorm_ref(x, w, b):
    mu = jnp.mean(x, axis=-1, keepdims=True)
    xc = x - mu
    var = jnp.mean(xc * xc, axis=-1, keepdims=True)
    return xc * jax.lax.rsqrt(var + EPS) * w + b


def init_params(key, E, Dh, L):
    """Deterministic synthetic init: xavier_uniform for 2-D weights, PyTorch
    default uniform for Linear biases, ones/zeros for LayerNorms."""
    keys = jax.random.split(key, 4 * L)

    def xavier(k, fan_in, fan_out, shape):
        bound = math.sqrt(6.0 / (fan_in + fan_out))
        return jax.random.uniform(k, shape, jnp.float32, -bound, bound)

    w1 = jnp.stack([xavier(keys[4 * l + 0], E, Dh, (E, Dh)) for l in range(L)])
    b1 = jnp.stack([jax.random.uniform(keys[4 * l + 1], (1, Dh), jnp.float32,
                                       -1.0 / math.sqrt(E), 1.0 / math.sqrt(E))
                    for l in range(L)])
    w2 = jnp.stack([xavier(keys[4 * l + 2], Dh, E, (Dh, E)) for l in range(L)])
    b2 = jnp.stack([jax.random.uniform(keys[4 * l + 3], (1, E), jnp.float32,
                                       -1.0 / math.sqrt(Dh), 1.0 / math.sqrt(Dh))
                    for l in range(L)])
    ones = jnp.ones((L, 1, E), jnp.float32)
    zeros = jnp.zeros((L, 1, E), jnp.float32)
    return dict(
        w1=w1, b1=b1, w2=w2, b2=b2,
        lnf_w=ones, lnf_b=zeros,
        ln1_w=ones, ln1_b=zeros,
        ln2_w=ones, ln2_b=zeros,
        lne_w=jnp.ones((1, E), jnp.float32),
        lne_b=jnp.zeros((1, E), jnp.float32),
    )


def fnet_reference(src, params):
    """Pure-JAX reference mirroring the PyTorch forward (inference mode)."""
    x = src.astype(jnp.float32)
    L = params['w1'].shape[0]
    for l in range(L):
        fft_real = jnp.real(jnp.fft.fftn(x.astype(jnp.complex64), axes=(1, 2)))
        h = _layernorm_ref(x + fft_real, params['lnf_w'][l], params['lnf_b'][l])
        x1 = _layernorm_ref(x + h, params['ln1_w'][l], params['ln1_b'][l])
        t = jnp.maximum(x1 @ params['w1'][l] + params['b1'][l], 0.0)
        ff = t @ params['w2'][l] + params['b2'][l]
        x = _layernorm_ref(x1 + ff, params['ln2_w'][l], params['ln2_b'][l])
    return _layernorm_ref(x, params['lne_w'], params['lne_b'])


if __name__ == "__main__":
    def _check(S, N, E, Dh, L):
        key = jax.random.PRNGKey(0)
        k_src, k_par = jax.random.split(key)
        src = jax.random.normal(k_src, (S, N, E), jnp.float32)       # (S, N, E)
        params = init_params(k_par, E, Dh, L)
        out = jax.block_until_ready(fnet_forward(src, params))
        ref = fnet_reference(src, params)
        # Tolerance is loosened vs an all-f32 version because MXU operands
        # (DFT matrices, fc weights, activations) are bf16 with f32 accumulation.
        np.testing.assert_allclose(np.asarray(out), np.asarray(ref),
                                   rtol=5e-2, atol=5e-2)

    # small batch  -> VPU (broadcast-MAC) N-axis DFT path
    _check(S=8, N=2, E=32, Dh=64, L=2)
    # larger batch -> fused [C_N | -S_N] batched-matmul N-axis DFT path
    _check(S=8, N=12, E=32, Dh=64, L=2)
    print("KERNEL_OK")
</pallas_src>

<mosaic_0001>
module attributes {stable_mosaic.version = 11 : i64} {
  func.func @kernel(%arg0: i32, %arg1: i32, %arg2: memref<4x8x128xf32, #tpu.memory_space<vmem>>, %arg3: memref<128x256xbf16, #tpu.memory_space<vmem>>, %arg4: memref<8x16xf32, #tpu.memory_space<vmem>>, %arg5: memref<1x8x128xf32, #tpu.memory_space<vmem>>, %arg6: memref<2x128xf32, #tpu.memory_space<vmem>>, %arg7: memref<1x128x128xbf16, #tpu.memory_space<vmem>>, %arg8: memref<1x128x128xbf16, #tpu.memory_space<vmem>>, %arg9: memref<4x8x128xf32, #tpu.memory_space<vmem>>) attributes {dimension_semantics = [#tpu.dimension_semantics<parallel>, #tpu.dimension_semantics<arbitrary>], iteration_bounds = array<i64: 2, 2>, scalar_prefetch = 0 : i64, scratch_operands = 0 : i64, tpu.core_type = #tpu.core_type<tc>, window_params = [{transform_indices = @transform_0, window_bounds = array<i64: 4, 8, 128>}, {pipeline_mode = #tpu.pipeline_mode<synchronous>, transform_indices = @transform_1, window_bounds = array<i64: 128, 256>}, {pipeline_mode = #tpu.pipeline_mode<synchronous>, transform_indices = @transform_2, window_bounds = array<i64: 8, 16>}, {transform_indices = @transform_3, window_bounds = array<i64: 1, 8, 128>}, {pipeline_mode = #tpu.pipeline_mode<synchronous>, transform_indices = @transform_4, window_bounds = array<i64: 2, 128>}, {transform_indices = @transform_5, window_bounds = array<i64: 1, 128, 128>}, {transform_indices = @transform_6, window_bounds = array<i64: 1, 128, 128>}, {transform_indices = @transform_7, window_bounds = array<i64: 4, 8, 128>}]} {
    %c0_i32 = arith.constant 0 : i32
    %0 = arith.cmpi eq, %arg1, %c0_i32 : i32
    %1 = arith.extui %0 : i1 to i32
    %c0_i32_0 = arith.constant 0 : i32
    %2 = arith.cmpi ne, %1, %c0_i32_0 : i32
    scf.if %2 {
      %c0_44 = arith.constant 0 : index
      %c0_45 = arith.constant 0 : index
      %c0_46 = arith.constant 0 : index
      %153 = vector.load %arg2[%c0_44, %c0_45, %c0_46] : memref<4x8x128xf32, #tpu.memory_space<vmem>>, vector<4x8x128xf32>
      %c0_47 = arith.constant 0 : index
      %c0_48 = arith.constant 0 : index
      %c0_49 = arith.constant 0 : index
      %154 = vector.load %arg9[%c0_47, %c0_48, %c0_49] : memref<4x8x128xf32, #tpu.memory_space<vmem>>, vector<4x8x128xf32>
      tpu.vector_store %arg9[%c0_47, %c0_48, %c0_49], %153 {strides = array<i32>} : memref<4x8x128xf32, #tpu.memory_space<vmem>>, vector<4x8x128xf32>,
    } else {
    }
    %c0 = arith.constant 0 : index
    %c0_1 = arith.constant 0 : index
    %c0_2 = arith.constant 0 : index
    %3 = vector.load %arg9[%c0, %c0_1, %c0_2] : memref<4x8x128xf32, #tpu.memory_space<vmem>>, vector<4x8x128xf32>
    %4 = vector.shape_cast %3 : vector<4x8x128xf32> to vector<32x128xf32>
    %c0_3 = arith.constant 0 : index
    %c0_4 = arith.constant 0 : index
    %c0_5 = arith.constant 0 : index
    %5 = vector.load %arg5[%c0_3, %c0_4, %c0_5] : memref<1x8x128xf32, #tpu.memory_space<vmem>>, vector<1x8x128xf32>
    %6 = vector.shape_cast %5 : vector<1x8x128xf32> to vector<8x128xf32>
    %7 = vector.extract_strided_slice %6 {offsets = [0, 0], sizes = [1, 128], strides = [1, 1]} : vector<8x128xf32> to vector<1x128xf32>
    %8 = vector.extract_strided_slice %6 {offsets = [1, 0], sizes = [1, 128], strides = [1, 1]} : vector<8x128xf32> to vector<1x128xf32>
    %9 = vector.extract_strided_slice %6 {offsets = [2, 0], sizes = [1, 128], strides = [1, 1]} : vector<8x128xf32> to vector<1x128xf32>
    %10 = vector.extract_strided_slice %6 {offsets = [3, 0], sizes = [1, 128], strides = [1, 1]} : vector<8x128xf32> to vector<1x128xf32>
    %11 = vector.extract_strided_slice %6 {offsets = [4, 0], sizes = [1, 128], strides = [1, 1]} : vector<8x128xf32> to vector<1x128xf32>
    %12 = vector.extract_strided_slice %6 {offsets = [5, 0], sizes = [1, 128], strides = [1, 1]} : vector<8x128xf32> to vector<1x128xf32>
    %13 = vector.extract_strided_slice %6 {offsets = [6, 0], sizes = [1, 128], strides = [1, 1]} : vector<8x128xf32> to vector<1x128xf32>
    %14 = vector.extract_strided_slice %6 {offsets = [7, 0], sizes = [1, 128], strides = [1, 1]} : vector<8x128xf32> to vector<1x128xf32>
    %15 = arith.truncf %4 : vector<32x128xf32> to vector<32x128xbf16>
    %c0_6 = arith.constant 0 : index
    %c0_7 = arith.constant 0 : index
    %16 = vector.load %arg3[%c0_6, %c0_7] : memref<128x256xbf16, #tpu.memory_space<vmem>>, vector<128x256xbf16>
    %cst = arith.constant dense<0.000000e+00> : vector<32x256xf32>
    %17 = tpu.matmul %15, %16, %cst {dimension_numbers = #tpu.dot_dimension_numbers<[1], [0], [0], [1], [0, 0, 1, 1], [], []>} : vector<32x128xbf16>, vector<128x256xbf16>, vector<32x256xf32> -> vector<32x256xf32>
    %18 = vector.shape_cast %17 : vector<32x256xf32> to vector<4x8x256xf32>
    %19 = vector.extract_strided_slice %18 {offsets = [0, 0, 0], sizes = [4, 8, 128], strides = [1, 1, 1]} : vector<4x8x256xf32> to vector<4x8x128xf32>
    %20 = vector.extract_strided_slice %18 {offsets = [0, 0, 128], sizes = [4, 8, 128], strides = [1, 1, 1]} : vector<4x8x256xf32> to vector<4x8x128xf32>
    %c0_8 = arith.constant 0 : index
    %c0_9 = arith.constant 0 : index
    %21 = vector.load %arg4[%c0_8, %c0_9] : memref<8x16xf32, #tpu.memory_space<vmem>>, vector<8x16xf32>
    %cst_10 = arith.constant 0.000000e+00 : f32
    %22 = vector.broadcast %cst_10 : f32 to vector<4x8x128xf32>
    %23 = vector.extract_strided_slice %21 {offsets = [0, 0], sizes = [8, 1], strides = [1, 1]} : vector<8x16xf32> to vector<8x1xf32>
    %24 = vector.shape_cast %23 : vector<8x1xf32> to vector<1x8x1xf32>
    %25 = vector.extract_strided_slice %21 {offsets = [0, 8], sizes = [8, 1], strides = [1, 1]} : vector<8x16xf32> to vector<8x1xf32>
    %26 = vector.shape_cast %25 : vector<8x1xf32> to vector<1x8x1xf32>
    %27 = vector.extract_strided_slice %19 {offsets = [0, 0, 0], sizes = [4, 1, 128], strides = [1, 1, 1]} : vector<4x8x128xf32> to vector<4x1x128xf32>
    %28 = vector.broadcast %24 : vector<1x8x1xf32> to vector<4x8x128xf32>
    %29 = vector.broadcast %27 : vector<4x1x128xf32> to vector<4x8x128xf32>
    %30 = arith.mulf %28, %29 : vector<4x8x128xf32>
    %31 = arith.addf %22, %30 : vector<4x8x128xf32>
    %32 = vector.extract_strided_slice %20 {offsets = [0, 0, 0], sizes = [4, 1, 128], strides = [1, 1, 1]} : vector<4x8x128xf32> to vector<4x1x128xf32>
    %33 = vector.broadcast %26 : vector<1x8x1xf32> to vector<4x8x128xf32>
    %34 = vector.broadcast %32 : vector<4x1x128xf32> to vector<4x8x128xf32>
    %35 = arith.mulf %33, %34 : vector<4x8x128xf32>
    %36 = arith.addf %31, %35 : vector<4x8x128xf32>
    %37 = vector.extract_strided_slice %21 {offsets = [0, 1], sizes = [8, 1], strides = [1, 1]} : vector<8x16xf32> to vector<8x1xf32>
    %38 = vector.shape_cast %37 : vector<8x1xf32> to vector<1x8x1xf32>
    %39 = vector.extract_strided_slice %21 {offsets = [0, 9], sizes = [8, 1], strides = [1, 1]} : vector<8x16xf32> to vector<8x1xf32>
    %40 = vector.shape_cast %39 : vector<8x1xf32> to vector<1x8x1xf32>
    %41 = vector.extract_strided_slice %19 {offsets = [0, 1, 0], sizes = [4, 1, 128], strides = [1, 1, 1]} : vector<4x8x128xf32> to vector<4x1x128xf32>
    %42 = vector.broadcast %38 : vector<1x8x1xf32> to vector<4x8x128xf32>
    %43 = vector.broadcast %41 : vector<4x1x128xf32> to vector<4x8x128xf32>
    %44 = arith.mulf %42, %43 : vector<4x8x128xf32>
    %45 = arith.addf %36, %44 : vector<4x8x128xf32>
    %46 = vector.extract_strided_slice %20 {offsets = [0, 1, 0], sizes = [4, 1, 128], strides = [1, 1, 1]} : vector<4x8x128xf32> to vector<4x1x128xf32>
    %47 = vector.broadcast %40 : vector<1x8x1xf32> to vector<4x8x128xf32>
    %48 = vector.broadcast %46 : vector<4x1x128xf32> to vector<4x8x128xf32>
    %49 = arith.mulf %47, %48 : vector<4x8x128xf32>
    %50 = arith.addf %45, %49 : vector<4x8x128xf32>
    %51 = vector.shape_cast %50 : vector<4x8x128xf32> to vector<32x128xf32>
    %52 = arith.addf %4, %51 : vector<32x128xf32>
    %cst_11 = arith.constant dense<0.000000e+00> : vector<32xf32>
    %53 = vector.multi_reduction <add>, %52, %cst_11 [1] : vector<32x128xf32> to vector<32xf32>
    %54 = vector.shape_cast %53 : vector<32xf32> to vector<32x1xf32>
    %cst_12 = arith.constant 3.125000e-02 : f32
    %55 = vector.broadcast %cst_12 : f32 to vector<32x1xf32>
    %56 = arith.mulf %54, %55 : vector<32x1xf32>
    %57 = vector.broadcast %56 : vector<32x1xf32> to vector<32x128xf32>
    %58 = arith.subf %52, %57 : vector<32x128xf32>
    %59 = arith.mulf %58, %58 : vector<32x128xf32>
    %cst_13 = arith.constant dense<0.000000e+00> : vector<32xf32>
    %60 = vector.multi_reduction <add>, %59, %cst_13 [1] : vector<32x128xf32> to vector<32xf32>
    %61 = vector.shape_cast %60 : vector<32xf32> to vector<32x1xf32>
    %cst_14 = arith.constant 9.600000e+01 : f32
    %62 = vector.broadcast %cst_14 : f32 to vector<32x1xf32>
    %63 = arith.mulf %62, %56 : vector<32x1xf32>
    %64 = arith.mulf %63, %56 : vector<32x1xf32>
    %65 = arith.subf %61, %64 : vector<32x1xf32>
    %cst_15 = arith.constant 3.125000e-02 : f32
    %66 = vector.broadcast %cst_15 : f32 to vector<32x1xf32>
    %67 = arith.mulf %65, %66 : vector<32x1xf32>
    %cst_16 = arith.constant 0.000000e+00 : f32
    %68 = vector.broadcast %cst_16 : f32 to vector<32x1xf32>
    %69 = arith.maximumf %67, %68 : vector<32x1xf32>
    %cst_17 = arith.constant 9.99999974E-6 : f32
    %70 = vector.broadcast %cst_17 : f32 to vector<32x1xf32>
    %71 = arith.addf %69, %70 : vector<32x1xf32>
    %72 = math.rsqrt %71 : vector<32x1xf32>
    %73 = vector.broadcast %72 : vector<32x1xf32> to vector<32x128xf32>
    %74 = arith.mulf %58, %73 : vector<32x128xf32>
    %75 = vector.broadcast %7 : vector<1x128xf32> to vector<32x128xf32>
    %76 = arith.mulf %74, %75 : vector<32x128xf32>
    %77 = vector.broadcast %8 : vector<1x128xf32> to vector<32x128xf32>
    %78 = arith.addf %76, %77 : vector<32x128xf32>
    %79 = arith.addf %4, %78 : vector<32x128xf32>
    %cst_18 = arith.constant dense<0.000000e+00> : vector<32xf32>
    %80 = vector.multi_reduction <add>, %79, %cst_18 [1] : vector<32x128xf32> to vector<32xf32>
    %81 = vector.shape_cast %80 : vector<32xf32> to vector<32x1xf32>
    %cst_19 = arith.constant 3.125000e-02 : f32
    %82 = vector.broadcast %cst_19 : f32 to vector<32x1xf32>
    %83 = arith.mulf %81, %82 : vector<32x1xf32>
    %84 = vector.broadcast %83 : vector<32x1xf32> to vector<32x128xf32>
    %85 = arith.subf %79, %84 : vector<32x128xf32>
    %86 = arith.mulf %85, %85 : vector<32x128xf32>
    %cst_20 = arith.constant dense<0.000000e+00> : vector<32xf32>
    %87 = vector.multi_reduction <add>, %86, %cst_20 [1] : vector<32x128xf32> to vector<32xf32>
    %88 = vector.shape_cast %87 : vector<32xf32> to vector<32x1xf32>
    %cst_21 = arith.constant 9.600000e+01 : f32
    %89 = vector.broadcast %cst_21 : f32 to vector<32x1xf32>
    %90 = arith.mulf %89, %83 : vector<32x1xf32>
    %91 = arith.mulf %90, %83 : vector<32x1xf32>
    %92 = arith.subf %88, %91 : vector<32x1xf32>
    %cst_22 = arith.constant 3.125000e-02 : f32
    %93 = vector.broadcast %cst_22 : f32 to vector<32x1xf32>
    %94 = arith.mulf %92, %93 : vector<32x1xf32>
    %cst_23 = arith.constant 0.000000e+00 : f32
    %95 = vector.broadcast %cst_23 : f32 to vector<32x1xf32>
    %96 = arith.maximumf %94, %95 : vector<32x1xf32>
    %cst_24 = arith.constant 9.99999974E-6 : f32
    %97 = vector.broadcast %cst_24 : f32 to vector<32x1xf32>
    %98 = arith.addf %96, %97 : vector<32x1xf32>
    %99 = math.rsqrt %98 : vector<32x1xf32>
    %100 = vector.broadcast %99 : vector<32x1xf32> to vector<32x128xf32>
    %101 = arith.mulf %85, %100 : vector<32x128xf32>
    %102 = vector.broadcast %9 : vector<1x128xf32> to vector<32x128xf32>
    %103 = arith.mulf %101, %102 : vector<32x128xf32>
    %104 = vector.broadcast %10 : vector<1x128xf32> to vector<32x128xf32>
    %105 = arith.addf %103, %104 : vector<32x128xf32>
    %106 = arith.truncf %105 : vector<32x128xf32> to vector<32x128xbf16>
    %c0_25 = arith.constant 0 : index
    %c0_26 = arith.constant 0 : index
    %c0_27 = arith.constant 0 : index
    %107 = vector.load %arg7[%c0_25, %c0_26, %c0_27] : memref<1x128x128xbf16, #tpu.memory_space<vmem>>, vector<1x128x128xbf16>
    %108 = vector.shape_cast %107 : vector<1x128x128xbf16> to vector<128x128xbf16>
    %cst_28 = arith.constant dense<0.000000e+00> : vector<32x128xf32>
    %109 = tpu.matmul %106, %108, %cst_28 {dimension_numbers = #tpu.dot_dimension_numbers<[1], [0], [0], [1], [0, 0, 1, 1], [], []>} : vector<32x128xbf16>, vector<128x128xbf16>, vector<32x128xf32> -> vector<32x128xf32>
    %110 = vector.broadcast %14 : vector<1x128xf32> to vector<32x128xf32>
    %111 = arith.addf %109, %110 : vector<32x128xf32>
    %cst_29 = arith.constant 0.000000e+00 : f32
    %112 = vector.broadcast %cst_29 : f32 to vector<32x128xf32>
    %113 = arith.maximumf %111, %112 : vector<32x128xf32>
    %114 = arith.truncf %113 : vector<32x128xf32> to vector<32x128xbf16>
    %c0_30 = arith.constant 0 : index
    %c0_31 = arith.constant 0 : index
    %c0_32 = arith.constant 0 : index
    %115 = vector.load %arg8[%c0_30, %c0_31, %c0_32] : memref<1x128x128xbf16, #tpu.memory_space<vmem>>, vector<1x128x128xbf16>
    %116 = vector.shape_cast %115 : vector<1x128x128xbf16> to vector<128x128xbf16>
    %cst_33 = arith.constant dense<0.000000e+00> : vector<32x128xf32>
    %117 = tpu.matmul %114, %116, %cst_33 {dimension_numbers = #tpu.dot_dimension_numbers<[1], [0], [0], [1], [0, 0, 1, 1], [], []>} : vector<32x128xbf16>, vector<128x128xbf16>, vector<32x128xf32> -> vector<32x128xf32>
    %118 = vector.broadcast %13 : vector<1x128xf32> to vector<32x128xf32>
    %119 = arith.addf %117, %118 : vector<32x128xf32>
    %120 = arith.addf %105, %119 : vector<32x128xf32>
    %cst_34 = arith.constant dense<0.000000e+00> : vector<32xf32>
    %121 = vector.multi_reduction <add>, %120, %cst_34 [1] : vector<32x128xf32> to vector<32xf32>
    %122 = vector.shape_cast %121 : vector<32xf32> to vector<32x1xf32>
    %cst_35 = arith.constant 3.125000e-02 : f32
    %123 = vector.broadcast %cst_35 : f32 to vector<32x1xf32>
    %124 = arith.mulf %122, %123 : vector<32x1xf32>
    %125 = vector.broadcast %124 : vector<32x1xf32> to vector<32x128xf32>
    %126 = arith.subf %120, %125 : vector<32x128xf32>
    %127 = arith.mulf %126, %126 : vector<32x128xf32>
    %cst_36 = arith.constant dense<0.000000e+00> : vector<32xf32>
    %128 = vector.multi_reduction <add>, %127, %cst_36 [1] : vector<32x128xf32> to vector<32xf32>
    %129 = vector.shape_cast %128 : vector<32xf32> to vector<32x1xf32>
    %cst_37 = arith.constant 9.600000e+01 : f32
    %130 = vector.broadcast %cst_37 : f32 to vector<32x1xf32>
    %131 = arith.mulf %130, %124 : vector<32x1xf32>
    %132 = arith.mulf %131, %124 : vector<32x1xf32>
    %133 = arith.subf %129, %132 : vector<32x1xf32>
    %cst_38 = arith.constant 3.125000e-02 : f32
    %134 = vector.broadcast %cst_38 : f32 to vector<32x1xf32>
    %135 = arith.mulf %133, %134 : vector<32x1xf32>
    %cst_39 = arith.constant 0.000000e+00 : f32
    %136 = vector.broadcast %cst_39 : f32 to vector<32x1xf32>
    %137 = arith.maximumf %135, %136 : vector<32x1xf32>
    %cst_40 = arith.constant 9.99999974E-6 : f32
    %138 = vector.broadcast %cst_40 : f32 to vector<32x1xf32>
    %139 = arith.addf %137, %138 : vector<32x1xf32>
    %140 = math.rsqrt %139 : vector<32x1xf32>
    %141 = vector.broadcast %140 : vector<32x1xf32> to vector<32x128xf32>
    %142 = arith.mulf %126, %141 : vector<32x128xf32>
    %143 = vector.broadcast %11 : vector<1x128xf32> to vector<32x128xf32>
    %144 = arith.mulf %142, %143 : vector<32x128xf32>
    %145 = vector.broadcast %12 : vector<1x128xf32> to vector<32x128xf32>
    %146 = arith.addf %144, %145 : vector<32x128xf32>
    %c1_i32 = arith.constant 1 : i32
    %147 = arith.cmpi ne, %arg1, %c1_i32 : i32
    %148 = arith.extui %147 : i1 to i32
    %c0_i32_41 = arith.constant 0 : i32
    %149 = arith.cmpi ne, %148, %c0_i32_41 : i32
    scf.if %149 {
      %153 = vector.shape_cast %146 : vector<32x128xf32> to vector<4x8x128xf32>
      %c0_44 = arith.constant 0 : index
      %c0_45 = arith.constant 0 : index
      %c0_46 = arith.constant 0 : index
      %154 = vector.load %arg9[%c0_44, %c0_45, %c0_46] : memref<4x8x128xf32, #tpu.memory_space<vmem>>, vector<4x8x128xf32>
      tpu.vector_store %arg9[%c0_44, %c0_45, %c0_46], %153 {strides = array<i32>} : memref<4x8x128xf32, #tpu.memory_space<vmem>>, vector<4x8x128xf32>,
    } else {
    }
    %c1_i32_42 = arith.constant 1 : i32
    %150 = arith.cmpi eq, %arg1, %c1_i32_42 : i32
    %151 = arith.extui %150 : i1 to i32
    %c0_i32_43 = arith.constant 0 : i32
    %152 = arith.cmpi ne, %151, %c0_i32_43 : i32
    scf.if %152 {
      %c0_44 = arith.constant 0 : index
      %c0_45 = arith.constant 0 : index
      %153 = vector.load %arg6[%c0_44, %c0_45] : memref<2x128xf32, #tpu.memory_space<vmem>>, vector<2x128xf32>
      %154 = vector.extract_strided_slice %153 {offsets = [0, 0], sizes = [1, 128], strides = [1, 1]} : vector<2x128xf32> to vector<1x128xf32>
      %155 = vector.extract_strided_slice %153 {offsets = [1, 0], sizes = [1, 128], strides = [1, 1]} : vector<2x128xf32> to vector<1x128xf32>
      %cst_46 = arith.constant dense<0.000000e+00> : vector<32xf32>
      %156 = vector.multi_reduction <add>, %146, %cst_46 [1] : vector<32x128xf32> to vector<32xf32>
      %157 = vector.shape_cast %156 : vector<32xf32> to vector<32x1xf32>
      %cst_47 = arith.constant 3.125000e-02 : f32
      %158 = vector.broadcast %cst_47 : f32 to vector<32x1xf32>
      %159 = arith.mulf %157, %158 : vector<32x1xf32>
      %160 = vector.broadcast %159 : vector<32x1xf32> to vector<32x128xf32>
      %161 = arith.subf %146, %160 : vector<32x128xf32>
      %162 = arith.mulf %161, %161 : vector<32x128xf32>
      %cst_48 = arith.constant dense<0.000000e+00> : vector<32xf32>
      %163 = vector.multi_reduction <add>, %162, %cst_48 [1] : vector<32x128xf32> to vector<32xf32>
      %164 = vector.shape_cast %163 : vector<32xf32> to vector<32x1xf32>
      %cst_49 = arith.constant 9.600000e+01 : f32
      %165 = vector.broadcast %cst_49 : f32 to vector<32x1xf32>
      %166 = arith.mulf %165, %159 : vector<32x1xf32>
      %167 = arith.mulf %166, %159 : vector<32x1xf32>
      %168 = arith.subf %164, %167 : vector<32x1xf32>
      %cst_50 = arith.constant 3.125000e-02 : f32
      %169 = vector.broadcast %cst_50 : f32 to vector<32x1xf32>
      %170 = arith.mulf %168, %169 : vector<32x1xf32>
      %cst_51 = arith.constant 0.000000e+00 : f32
      %171 = vector.broadcast %cst_51 : f32 to vector<32x1xf32>
      %172 = arith.maximumf %170, %171 : vector<32x1xf32>
      %cst_52 = arith.constant 9.99999974E-6 : f32
      %173 = vector.broadcast %cst_52 : f32 to vector<32x1xf32>
      %174 = arith.addf %172, %173 : vector<32x1xf32>
      %175 = math.rsqrt %174 : vector<32x1xf32>
      %176 = vector.broadcast %175 : vector<32x1xf32> to vector<32x128xf32>
      %177 = arith.mulf %161, %176 : vector<32x128xf32>
      %178 = vector.broadcast %154 : vector<1x128xf32> to vector<32x128xf32>
      %179 = arith.mulf %177, %178 : vector<32x128xf32>
      %180 = vector.broadcast %155 : vector<1x128xf32> to vector<32x128xf32>
      %181 = arith.addf %179, %180 : vector<32x128xf32>
      %182 = vector.shape_cast %181 : vector<32x128xf32> to vector<4x8x128xf32>
      %c0_53 = arith.constant 0 : index
      %c0_54 = arith.constant 0 : index
      %c0_55 = arith.constant 0 : index
      %183 = vector.load %arg9[%c0_53, %c0_54, %c0_55] : memref<4x8x128xf32, #tpu.memory_space<vmem>>, vector<4x8x128xf32>
      tpu.vector_store %arg9[%c0_53, %c0_54, %c0_55], %182 {strides = array<i32>} : memref<4x8x128xf32, #tpu.memory_space<vmem>>, vector<4x8x128xf32>,
    } else {
    }
    return
  }
  func.func @transform_0(%arg0: i32, %arg1: i32) -> (i32, i32, i32) {
    %c0_i32 = arith.constant 0 : i32
    %c0_i32_0 = arith.constant 0 : i32
    %c0_i32_1 = arith.constant 0 : i32
    return %arg0, %c0_i32, %c0_i32_0 : i32, i32, i32
  }
  func.func @transform_1(%arg0: i32, %arg1: i32) -> (i32, i32) {
    %c0_i32 = arith.constant 0 : i32
    %c0_i32_0 = arith.constant 0 : i32
    %c0_i32_1 = arith.constant 0 : i32
    return %c0_i32, %c0_i32_0 : i32, i32
  }
  func.func @transform_2(%arg0: i32, %arg1: i32) -> (i32, i32) {
    %c0_i32 = arith.constant 0 : i32
    %c0_i32_0 = arith.constant 0 : i32
    %c0_i32_1 = arith.constant 0 : i32
    return %c0_i32, %c0_i32_0 : i32, i32
  }
  func.func @transform_3(%arg0: i32, %arg1: i32) -> (i32, i32, i32) {
    %c0_i32 = arith.constant 0 : i32
    %c0_i32_0 = arith.constant 0 : i32
    %c0_i32_1 = arith.constant 0 : i32
    return %arg1, %c0_i32, %c0_i32_0 : i32, i32, i32
  }
  func.func @transform_4(%arg0: i32, %arg1: i32) -> (i32, i32) {
    %c0_i32 = arith.constant 0 : i32
    %c0_i32_0 = arith.constant 0 : i32
    %c0_i32_1 = arith.constant 0 : i32
    return %c0_i32, %c0_i32_0 : i32, i32
  }
  func.func @transform_5(%arg0: i32, %arg1: i32) -> (i32, i32, i32) {
    %c0_i32 = arith.constant 0 : i32
    %c0_i32_0 = arith.constant 0 : i32
    %c0_i32_1 = arith.constant 0 : i32
    return %arg1, %c0_i32, %c0_i32_0 : i32, i32, i32
  }
  func.func @transform_6(%arg0: i32, %arg1: i32) -> (i32, i32, i32) {
    %c0_i32 = arith.constant 0 : i32
    %c0_i32_0 = arith.constant 0 : i32
    %c0_i32_1 = arith.constant 0 : i32
    return %arg1, %c0_i32, %c0_i32_0 : i32, i32, i32
  }
  func.func @transform_7(%arg0: i32, %arg1: i32) -> (i32, i32, i32) {
    %c0_i32 = arith.constant 0 : i32
    %c0_i32_0 = arith.constant 0 : i32
    %c0_i32_1 = arith.constant 0 : i32
    return %arg0, %c0_i32, %c0_i32_0 : i32, i32, i32
  }
}

module attributes {stable_mosaic.version = 11 : i64} {
  func.func @kernel(%arg0: i32, %arg1: i32, %arg2: memref<4x8x128xf32, #tpu.memory_space<vmem>>, %arg3: memref<128x256xbf16, #tpu.memory_space<vmem>>, %arg4: memref<8x16xf32, #tpu.memory_space<vmem>>, %arg5: memref<1x8x128xf32, #tpu.memory_space<vmem>>, %arg6: memref<2x128xf32, #tpu.memory_space<vmem>>, %arg7: memref<1x128x128xbf16, #tpu.memory_space<vmem>>, %arg8: memref<1x128x128xbf16, #tpu.memory_space<vmem>>, %arg9: memref<4x8x128xf32, #tpu.memory_space<vmem>>) attributes {dimension_semantics = [#tpu.dimension_semantics<parallel>, #tpu.dimension_semantics<arbitrary>], iteration_bounds = array<i64: 2, 2>, scalar_prefetch = 0 : i64, scratch_operands = 0 : i64, tpu.core_type = #tpu.core_type<tc>, window_params = [{transform_indices = @transform_0, window_bounds = array<i64: 4, 8, 128>}, {pipeline_mode = #tpu.pipeline_mode<synchronous>, transform_indices = @transform_1, window_bounds = array<i64: 128, 256>}, {pipeline_mode = #tpu.pipeline_mode<synchronous>, transform_indices = @transform_2, window_bounds = array<i64: 8, 16>}, {transform_indices = @transform_3, window_bounds = array<i64: 1, 8, 128>}, {pipeline_mode = #tpu.pipeline_mode<synchronous>, transform_indices = @transform_4, window_bounds = array<i64: 2, 128>}, {transform_indices = @transform_5, window_bounds = array<i64: 1, 128, 128>}, {transform_indices = @transform_6, window_bounds = array<i64: 1, 128, 128>}, {transform_indices = @transform_7, window_bounds = array<i64: 4, 8, 128>}]} {
    %c0_i32 = arith.constant 0 : i32
    %0 = arith.cmpi eq, %arg1, %c0_i32 : i32
    %1 = arith.extui %0 : i1 to i32
    %c0_i32_0 = arith.constant 0 : i32
    %2 = arith.cmpi ne, %1, %c0_i32_0 : i32
    scf.if %2 {
      %c0_44 = arith.constant 0 : index
      %c0_45 = arith.constant 0 : index
      %c0_46 = arith.constant 0 : index
      %153 = vector.load %arg2[%c0_44, %c0_45, %c0_46] : memref<4x8x128xf32, #tpu.memory_space<vmem>>, vector<4x8x128xf32>
      %c0_47 = arith.constant 0 : index
      %c0_48 = arith.constant 0 : index
      %c0_49 = arith.constant 0 : index
      %154 = vector.load %arg9[%c0_47, %c0_48, %c0_49] : memref<4x8x128xf32, #tpu.memory_space<vmem>>, vector<4x8x128xf32>
      tpu.vector_store %arg9[%c0_47, %c0_48, %c0_49], %153 {strides = array<i32>} : memref<4x8x128xf32, #tpu.memory_space<vmem>>, vector<4x8x128xf32>,
    } else {
    }
    %c0 = arith.constant 0 : index
    %c0_1 = arith.constant 0 : index
    %c0_2 = arith.constant 0 : index
    %3 = vector.load %arg9[%c0, %c0_1, %c0_2] : memref<4x8x128xf32, #tpu.memory_space<vmem>>, vector<4x8x128xf32>
    %4 = vector.shape_cast %3 : vector<4x8x128xf32> to vector<32x128xf32>
    %c0_3 = arith.constant 0 : index
    %c0_4 = arith.constant 0 : index
    %c0_5 = arith.constant 0 : index
    %5 = vector.load %arg5[%c0_3, %c0_4, %c0_5] : memref<1x8x128xf32, #tpu.memory_space<vmem>>, vector<1x8x128xf32>
    %6 = vector.shape_cast %5 : vector<1x8x128xf32> to vector<8x128xf32>
    %7 = vector.extract_strided_slice %6 {offsets = [0, 0], sizes = [1, 128], strides = [1, 1]} : vector<8x128xf32> to vector<1x128xf32>
    %8 = vector.extract_strided_slice %6 {offsets = [1, 0], sizes = [1, 128], strides = [1, 1]} : vector<8x128xf32> to vector<1x128xf32>
    %9 = vector.extract_strided_slice %6 {offsets = [2, 0], sizes = [1, 128], strides = [1, 1]} : vector<8x128xf32> to vector<1x128xf32>
    %10 = vector.extract_strided_slice %6 {offsets = [3, 0], sizes = [1, 128], strides = [1, 1]} : vector<8x128xf32> to vector<1x128xf32>
    %11 = vector.extract_strided_slice %6 {offsets = [4, 0], sizes = [1, 128], strides = [1, 1]} : vector<8x128xf32> to vector<1x128xf32>
    %12 = vector.extract_strided_slice %6 {offsets = [5, 0], sizes = [1, 128], strides = [1, 1]} : vector<8x128xf32> to vector<1x128xf32>
    %13 = vector.extract_strided_slice %6 {offsets = [6, 0], sizes = [1, 128], strides = [1, 1]} : vector<8x128xf32> to vector<1x128xf32>
    %14 = vector.extract_strided_slice %6 {offsets = [7, 0], sizes = [1, 128], strides = [1, 1]} : vector<8x128xf32> to vector<1x128xf32>
    %15 = arith.truncf %4 : vector<32x128xf32> to vector<32x128xbf16>
    %c0_6 = arith.constant 0 : index
    %c0_7 = arith.constant 0 : index
    %16 = vector.load %arg3[%c0_6, %c0_7] : memref<128x256xbf16, #tpu.memory_space<vmem>>, vector<128x256xbf16>
    %cst = arith.constant dense<0.000000e+00> : vector<32x256xf32>
    %17 = tpu.matmul %15, %16, %cst {dimension_numbers = #tpu.dot_dimension_numbers<[1], [0], [0], [1], [0, 0, 1, 1], [], []>} : vector<32x128xbf16>, vector<128x256xbf16>, vector<32x256xf32> -> vector<32x256xf32>
    %18 = vector.shape_cast %17 : vector<32x256xf32> to vector<4x8x256xf32>
    %19 = vector.extract_strided_slice %18 {offsets = [0, 0, 0], sizes = [4, 8, 128], strides = [1, 1, 1]} : vector<4x8x256xf32> to vector<4x8x128xf32>
    %20 = vector.extract_strided_slice %18 {offsets = [0, 0, 128], sizes = [4, 8, 128], strides = [1, 1, 1]} : vector<4x8x256xf32> to vector<4x8x128xf32>
    %c0_8 = arith.constant 0 : index
    %c0_9 = arith.constant 0 : index
    %21 = vector.load %arg4[%c0_8, %c0_9] : memref<8x16xf32, #tpu.memory_space<vmem>>, vector<8x16xf32>
    %cst_10 = arith.constant 0.000000e+00 : f32
    %22 = vector.broadcast %cst_10 : f32 to vector<4x8x128xf32>
    %23 = vector.extract_strided_slice %21 {offsets = [0, 0], sizes = [8, 1], strides = [1, 1]} : vector<8x16xf32> to vector<8x1xf32>
    %24 = vector.shape_cast %23 : vector<8x1xf32> to vector<1x8x1xf32>
    %25 = vector.extract_strided_slice %21 {offsets = [0, 8], sizes = [8, 1], strides = [1, 1]} : vector<8x16xf32> to vector<8x1xf32>
    %26 = vector.shape_cast %25 : vector<8x1xf32> to vector<1x8x1xf32>
    %27 = vector.extract_strided_slice %19 {offsets = [0, 0, 0], sizes = [4, 1, 128], strides = [1, 1, 1]} : vector<4x8x128xf32> to vector<4x1x128xf32>
    %28 = vector.broadcast %24 : vector<1x8x1xf32> to vector<4x8x128xf32>
    %29 = vector.broadcast %27 : vector<4x1x128xf32> to vector<4x8x128xf32>
    %30 = arith.mulf %28, %29 : vector<4x8x128xf32>
    %31 = arith.addf %22, %30 : vector<4x8x128xf32>
    %32 = vector.extract_strided_slice %20 {offsets = [0, 0, 0], sizes = [4, 1, 128], strides = [1, 1, 1]} : vector<4x8x128xf32> to vector<4x1x128xf32>
    %33 = vector.broadcast %26 : vector<1x8x1xf32> to vector<4x8x128xf32>
    %34 = vector.broadcast %32 : vector<4x1x128xf32> to vector<4x8x128xf32>
    %35 = arith.mulf %33, %34 : vector<4x8x128xf32>
    %36 = arith.addf %31, %35 : vector<4x8x128xf32>
    %37 = vector.extract_strided_slice %21 {offsets = [0, 1], sizes = [8, 1], strides = [1, 1]} : vector<8x16xf32> to vector<8x1xf32>
    %38 = vector.shape_cast %37 : vector<8x1xf32> to vector<1x8x1xf32>
    %39 = vector.extract_strided_slice %21 {offsets = [0, 9], sizes = [8, 1], strides = [1, 1]} : vector<8x16xf32> to vector<8x1xf32>
    %40 = vector.shape_cast %39 : vector<8x1xf32> to vector<1x8x1xf32>
    %41 = vector.extract_strided_slice %19 {offsets = [0, 1, 0], sizes = [4, 1, 128], strides = [1, 1, 1]} : vector<4x8x128xf32> to vector<4x1x128xf32>
    %42 = vector.broadcast %38 : vector<1x8x1xf32> to vector<4x8x128xf32>
    %43 = vector.broadcast %41 : vector<4x1x128xf32> to vector<4x8x128xf32>
    %44 = arith.mulf %42, %43 : vector<4x8x128xf32>
    %45 = arith.addf %36, %44 : vector<4x8x128xf32>
    %46 = vector.extract_strided_slice %20 {offsets = [0, 1, 0], sizes = [4, 1, 128], strides = [1, 1, 1]} : vector<4x8x128xf32> to vector<4x1x128xf32>
    %47 = vector.broadcast %40 : vector<1x8x1xf32> to vector<4x8x128xf32>
    %48 = vector.broadcast %46 : vector<4x1x128xf32> to vector<4x8x128xf32>
    %49 = arith.mulf %47, %48 : vector<4x8x128xf32>
    %50 = arith.addf %45, %49 : vector<4x8x128xf32>
    %51 = vector.shape_cast %50 : vector<4x8x128xf32> to vector<32x128xf32>
    %52 = arith.addf %4, %51 : vector<32x128xf32>
    %cst_11 = arith.constant dense<0.000000e+00> : vector<32xf32>
    %53 = vector.multi_reduction <add>, %52, %cst_11 [1] : vector<32x128xf32> to vector<32xf32>
    %54 = vector.shape_cast %53 : vector<32xf32> to vector<32x1xf32>
    %cst_12 = arith.constant 3.125000e-02 : f32
    %55 = vector.broadcast %cst_12 : f32 to vector<32x1xf32>
    %56 = arith.mulf %54, %55 : vector<32x1xf32>
    %57 = vector.broadcast %56 : vector<32x1xf32> to vector<32x128xf32>
    %58 = arith.subf %52, %57 : vector<32x128xf32>
    %59 = arith.mulf %58, %58 : vector<32x128xf32>
    %cst_13 = arith.constant dense<0.000000e+00> : vector<32xf32>
    %60 = vector.multi_reduction <add>, %59, %cst_13 [1] : vector<32x128xf32> to vector<32xf32>
    %61 = vector.shape_cast %60 : vector<32xf32> to vector<32x1xf32>
    %cst_14 = arith.constant 9.600000e+01 : f32
    %62 = vector.broadcast %cst_14 : f32 to vector<32x1xf32>
    %63 = arith.mulf %62, %56 : vector<32x1xf32>
    %64 = arith.mulf %63, %56 : vector<32x1xf32>
    %65 = arith.subf %61, %64 : vector<32x1xf32>
    %cst_15 = arith.constant 3.125000e-02 : f32
    %66 = vector.broadcast %cst_15 : f32 to vector<32x1xf32>
    %67 = arith.mulf %65, %66 : vector<32x1xf32>
    %cst_16 = arith.constant 0.000000e+00 : f32
    %68 = vector.broadcast %cst_16 : f32 to vector<32x1xf32>
    %69 = arith.maximumf %67, %68 : vector<32x1xf32>
    %cst_17 = arith.constant 9.99999974E-6 : f32
    %70 = vector.broadcast %cst_17 : f32 to vector<32x1xf32>
    %71 = arith.addf %69, %70 : vector<32x1xf32>
    %72 = math.rsqrt %71 : vector<32x1xf32>
    %73 = vector.broadcast %72 : vector<32x1xf32> to vector<32x128xf32>
    %74 = arith.mulf %58, %73 : vector<32x128xf32>
    %75 = vector.broadcast %7 : vector<1x128xf32> to vector<32x128xf32>
    %76 = arith.mulf %74, %75 : vector<32x128xf32>
    %77 = vector.broadcast %8 : vector<1x128xf32> to vector<32x128xf32>
    %78 = arith.addf %76, %77 : vector<32x128xf32>
    %79 = arith.addf %4, %78 : vector<32x128xf32>
    %cst_18 = arith.constant dense<0.000000e+00> : vector<32xf32>
    %80 = vector.multi_reduction <add>, %79, %cst_18 [1] : vector<32x128xf32> to vector<32xf32>
    %81 = vector.shape_cast %80 : vector<32xf32> to vector<32x1xf32>
    %cst_19 = arith.constant 3.125000e-02 : f32
    %82 = vector.broadcast %cst_19 : f32 to vector<32x1xf32>
    %83 = arith.mulf %81, %82 : vector<32x1xf32>
    %84 = vector.broadcast %83 : vector<32x1xf32> to vector<32x128xf32>
    %85 = arith.subf %79, %84 : vector<32x128xf32>
    %86 = arith.mulf %85, %85 : vector<32x128xf32>
    %cst_20 = arith.constant dense<0.000000e+00> : vector<32xf32>
    %87 = vector.multi_reduction <add>, %86, %cst_20 [1] : vector<32x128xf32> to vector<32xf32>
    %88 = vector.shape_cast %87 : vector<32xf32> to vector<32x1xf32>
    %cst_21 = arith.constant 9.600000e+01 : f32
    %89 = vector.broadcast %cst_21 : f32 to vector<32x1xf32>
    %90 = arith.mulf %89, %83 : vector<32x1xf32>
    %91 = arith.mulf %90, %83 : vector<32x1xf32>
    %92 = arith.subf %88, %91 : vector<32x1xf32>
    %cst_22 = arith.constant 3.125000e-02 : f32
    %93 = vector.broadcast %cst_22 : f32 to vector<32x1xf32>
    %94 = arith.mulf %92, %93 : vector<32x1xf32>
    %cst_23 = arith.constant 0.000000e+00 : f32
    %95 = vector.broadcast %cst_23 : f32 to vector<32x1xf32>
    %96 = arith.maximumf %94, %95 : vector<32x1xf32>
    %cst_24 = arith.constant 9.99999974E-6 : f32
    %97 = vector.broadcast %cst_24 : f32 to vector<32x1xf32>
    %98 = arith.addf %96, %97 : vector<32x1xf32>
    %99 = math.rsqrt %98 : vector<32x1xf32>
    %100 = vector.broadcast %99 : vector<32x1xf32> to vector<32x128xf32>
    %101 = arith.mulf %85, %100 : vector<32x128xf32>
    %102 = vector.broadcast %9 : vector<1x128xf32> to vector<32x128xf32>
    %103 = arith.mulf %101, %102 : vector<32x128xf32>
    %104 = vector.broadcast %10 : vector<1x128xf32> to vector<32x128xf32>
    %105 = arith.addf %103, %104 : vector<32x128xf32>
    %106 = arith.truncf %105 : vector<32x128xf32> to vector<32x128xbf16>
    %c0_25 = arith.constant 0 : index
    %c0_26 = arith.constant 0 : index
    %c0_27 = arith.constant 0 : index
    %107 = vector.load %arg7[%c0_25, %c0_26, %c0_27] : memref<1x128x128xbf16, #tpu.memory_space<vmem>>, vector<1x128x128xbf16>
    %108 = vector.shape_cast %107 : vector<1x128x128xbf16> to vector<128x128xbf16>
    %cst_28 = arith.constant dense<0.000000e+00> : vector<32x128xf32>
    %109 = tpu.matmul %106, %108, %cst_28 {dimension_numbers = #tpu.dot_dimension_numbers<[1], [0], [0], [1], [0, 0, 1, 1], [], []>} : vector<32x128xbf16>, vector<128x128xbf16>, vector<32x128xf32> -> vector<32x128xf32>
    %110 = vector.broadcast %14 : vector<1x128xf32> to vector<32x128xf32>
    %111 = arith.addf %109, %110 : vector<32x128xf32>
    %cst_29 = arith.constant 0.000000e+00 : f32
    %112 = vector.broadcast %cst_29 : f32 to vector<32x128xf32>
    %113 = arith.maximumf %111, %112 : vector<32x128xf32>
    %114 = arith.truncf %113 : vector<32x128xf32> to vector<32x128xbf16>
    %c0_30 = arith.constant 0 : index
    %c0_31 = arith.constant 0 : index
    %c0_32 = arith.constant 0 : index
    %115 = vector.load %arg8[%c0_30, %c0_31, %c0_32] : memref<1x128x128xbf16, #tpu.memory_space<vmem>>, vector<1x128x128xbf16>
    %116 = vector.shape_cast %115 : vector<1x128x128xbf16> to vector<128x128xbf16>
    %cst_33 = arith.constant dense<0.000000e+00> : vector<32x128xf32>
    %117 = tpu.matmul %114, %116, %cst_33 {dimension_numbers = #tpu.dot_dimension_numbers<[1], [0], [0], [1], [0, 0, 1, 1], [], []>} : vector<32x128xbf16>, vector<128x128xbf16>, vector<32x128xf32> -> vector<32x128xf32>
    %118 = vector.broadcast %13 : vector<1x128xf32> to vector<32x128xf32>
    %119 = arith.addf %117, %118 : vector<32x128xf32>
    %120 = arith.addf %105, %119 : vector<32x128xf32>
    %cst_34 = arith.constant dense<0.000000e+00> : vector<32xf32>
    %121 = vector.multi_reduction <add>, %120, %cst_34 [1] : vector<32x128xf32> to vector<32xf32>
    %122 = vector.shape_cast %121 : vector<32xf32> to vector<32x1xf32>
    %cst_35 = arith.constant 3.125000e-02 : f32
    %123 = vector.broadcast %cst_35 : f32 to vector<32x1xf32>
    %124 = arith.mulf %122, %123 : vector<32x1xf32>
    %125 = vector.broadcast %124 : vector<32x1xf32> to vector<32x128xf32>
    %126 = arith.subf %120, %125 : vector<32x128xf32>
    %127 = arith.mulf %126, %126 : vector<32x128xf32>
    %cst_36 = arith.constant dense<0.000000e+00> : vector<32xf32>
    %128 = vector.multi_reduction <add>, %127, %cst_36 [1] : vector<32x128xf32> to vector<32xf32>
    %129 = vector.shape_cast %128 : vector<32xf32> to vector<32x1xf32>
    %cst_37 = arith.constant 9.600000e+01 : f32
    %130 = vector.broadcast %cst_37 : f32 to vector<32x1xf32>
    %131 = arith.mulf %130, %124 : vector<32x1xf32>
    %132 = arith.mulf %131, %124 : vector<32x1xf32>
    %133 = arith.subf %129, %132 : vector<32x1xf32>
    %cst_38 = arith.constant 3.125000e-02 : f32
    %134 = vector.broadcast %cst_38 : f32 to vector<32x1xf32>
    %135 = arith.mulf %133, %134 : vector<32x1xf32>
    %cst_39 = arith.constant 0.000000e+00 : f32
    %136 = vector.broadcast %cst_39 : f32 to vector<32x1xf32>
    %137 = arith.maximumf %135, %136 : vector<32x1xf32>
    %cst_40 = arith.constant 9.99999974E-6 : f32
    %138 = vector.broadcast %cst_40 : f32 to vector<32x1xf32>
    %139 = arith.addf %137, %138 : vector<32x1xf32>
    %140 = math.rsqrt %139 : vector<32x1xf32>
    %141 = vector.broadcast %140 : vector<32x1xf32> to vector<32x128xf32>
    %142 = arith.mulf %126, %141 : vector<32x128xf32>
    %143 = vector.broadcast %11 : vector<1x128xf32> to vector<32x128xf32>
    %144 = arith.mulf %142, %143 : vector<32x128xf32>
    %145 = vector.broadcast %12 : vector<1x128xf32> to vector<32x128xf32>
    %146 = arith.addf %144, %145 : vector<32x128xf32>
    %c1_i32 = arith.constant 1 : i32
    %147 = arith.cmpi ne, %arg1, %c1_i32 : i32
    %148 = arith.extui %147 : i1 to i32
    %c0_i32_41 = arith.constant 0 : i32
    %149 = arith.cmpi ne, %148, %c0_i32_41 : i32
    scf.if %149 {
      %153 = vector.shape_cast %146 : vector<32x128xf32> to vector<4x8x128xf32>
      %c0_44 = arith.constant 0 : index
      %c0_45 = arith.constant 0 : index
      %c0_46 = arith.constant 0 : index
      %154 = vector.load %arg9[%c0_44, %c0_45, %c0_46] : memref<4x8x128xf32, #tpu.memory_space<vmem>>, vector<4x8x128xf32>
      tpu.vector_store %arg9[%c0_44, %c0_45, %c0_46], %153 {strides = array<i32>} : memref<4x8x128xf32, #tpu.memory_space<vmem>>, vector<4x8x128xf32>,
    } else {
    }
    %c1_i32_42 = arith.constant 1 : i32
    %150 = arith.cmpi eq, %arg1, %c1_i32_42 : i32
    %151 = arith.extui %150 : i1 to i32
    %c0_i32_43 = arith.constant 0 : i32
    %152 = arith.cmpi ne, %151, %c0_i32_43 : i32
    scf.if %152 {
      %c0_44 = arith.constant 0 : index
      %c0_45 = arith.constant 0 : index
      %153 = vector.load %arg6[%c0_44, %c0_45] : memref<2x128xf32, #tpu.memory_space<vmem>>, vector<2x128xf32>
      %154 = vector.extract_strided_slice %153 {offsets = [0, 0], sizes = [1, 128], strides = [1, 1]} : vector<2x128xf32> to vector<1x128xf32>
      %155 = vector.extract_strided_slice %153 {offsets = [1, 0], sizes = [1, 128], strides = [1, 1]} : vector<2x128xf32> to vector<1x128xf32>
      %cst_46 = arith.constant dense<0.000000e+00> : vector<32xf32>
      %156 = vector.multi_reduction <add>, %146, %cst_46 [1] : vector<32x128xf32> to vector<32xf32>
      %157 = vector.shape_cast %156 : vector<32xf32> to vector<32x1xf32>
      %cst_47 = arith.constant 3.125000e-02 : f32
      %158 = vector.broadcast %cst_47 : f32 to vector<32x1xf32>
      %159 = arith.mulf %157, %158 : vector<32x1xf32>
      %160 = vector.broadcast %159 : vector<32x1xf32> to vector<32x128xf32>
      %161 = arith.subf %146, %160 : vector<32x128xf32>
      %162 = arith.mulf %161, %161 : vector<32x128xf32>
      %cst_48 = arith.constant dense<0.000000e+00> : vector<32xf32>
      %163 = vector.multi_reduction <add>, %162, %cst_48 [1] : vector<32x128xf32> to vector<32xf32>
      %164 = vector.shape_cast %163 : vector<32xf32> to vector<32x1xf32>
      %cst_49 = arith.constant 9.600000e+01 : f32
      %165 = vector.broadcast %cst_49 : f32 to vector<32x1xf32>
      %166 = arith.mulf %165, %159 : vector<32x1xf32>
      %167 = arith.mulf %166, %159 : vector<32x1xf32>
      %168 = arith.subf %164, %167 : vector<32x1xf32>
      %cst_50 = arith.constant 3.125000e-02 : f32
      %169 = vector.broadcast %cst_50 : f32 to vector<32x1xf32>
      %170 = arith.mulf %168, %169 : vector<32x1xf32>
      %cst_51 = arith.constant 0.000000e+00 : f32
      %171 = vector.broadcast %cst_51 : f32 to vector<32x1xf32>
      %172 = arith.maximumf %170, %171 : vector<32x1xf32>
      %cst_52 = arith.constant 9.99999974E-6 : f32
      %173 = vector.broadcast %cst_52 : f32 to vector<32x1xf32>
      %174 = arith.addf %172, %173 : vector<32x1xf32>
      %175 = math.rsqrt %174 : vector<32x1xf32>
      %176 = vector.broadcast %175 : vector<32x1xf32> to vector<32x128xf32>
      %177 = arith.mulf %161, %176 : vector<32x128xf32>
      %178 = vector.broadcast %154 : vector<1x128xf32> to vector<32x128xf32>
      %179 = arith.mulf %177, %178 : vector<32x128xf32>
      %180 = vector.broadcast %155 : vector<1x128xf32> to vector<32x128xf32>
      %181 = arith.addf %179, %180 : vector<32x128xf32>
      %182 = vector.shape_cast %181 : vector<32x128xf32> to vector<4x8x128xf32>
      %c0_53 = arith.constant 0 : index
      %c0_54 = arith.constant 0 : index
      %c0_55 = arith.constant 0 : index
      %183 = vector.load %arg9[%c0_53, %c0_54, %c0_55] : memref<4x8x128xf32, #tpu.memory_space<vmem>>, vector<4x8x128xf32>
      tpu.vector_store %arg9[%c0_53, %c0_54, %c0_55], %182 {strides = array<i32>} : memref<4x8x128xf32, #tpu.memory_space<vmem>>, vector<4x8x128xf32>,
    } else {
    }
    return
  }
  func.func @transform_0(%arg0: i32, %arg1: i32) -> (i32, i32, i32) {
    %c0_i32 = arith.constant 0 : i32
    %c0_i32_0 = arith.constant 0 : i32
    %c0_i32_1 = arith.constant 0 : i32
    return %arg0, %c0_i32, %c0_i32_0 : i32, i32, i32
  }
  func.func @transform_1(%arg0: i32, %arg1: i32) -> (i32, i32) {
    %c0_i32 = arith.constant 0 : i32
    %c0_i32_0 = arith.constant 0 : i32
    %c0_i32_1 = arith.constant 0 : i32
    return %c0_i32, %c0_i32_0 : i32, i32
  }
  func.func @transform_2(%arg0: i32, %arg1: i32) -> (i32, i32) {
    %c0_i32 = arith.constant 0 : i32
    %c0_i32_0 = arith.constant 0 : i32
    %c0_i32_1 = arith.constant 0 : i32
    return %c0_i32, %c0_i32_0 : i32, i32
  }
  func.func @transform_3(%arg0: i32, %arg1: i32) -> (i32, i32, i32) {
    %c0_i32 = arith.constant 0 : i32
    %c0_i32_0 = arith.constant 0 : i32
    %c0_i32_1 = arith.constant 0 : i32
    return %arg1, %c0_i32, %c0_i32_0 : i32, i32, i32
  }
  func.func @transform_4(%arg0: i32, %arg1: i32) -> (i32, i32) {
    %c0_i32 = arith.constant 0 : i32
    %c0_i32_0 = arith.constant 0 : i32
    %c0_i32_1 = arith.constant 0 : i32
    return %c0_i32, %c0_i32_0 : i32, i32
  }
  func.func @transform_5(%arg0: i32, %arg1: i32) -> (i32, i32, i32) {
    %c0_i32 = arith.constant 0 : i32
    %c0_i32_0 = arith.constant 0 : i32
    %c0_i32_1 = arith.constant 0 : i32
    return %arg1, %c0_i32, %c0_i32_0 : i32, i32, i32
  }
  func.func @transform_6(%arg0: i32, %arg1: i32) -> (i32, i32, i32) {
    %c0_i32 = arith.constant 0 : i32
    %c0_i32_0 = arith.constant 0 : i32
    %c0_i32_1 = arith.constant 0 : i32
    return %arg1, %c0_i32, %c0_i32_0 : i32, i32, i32
  }
  func.func @transform_7(%arg0: i32, %arg1: i32) -> (i32, i32, i32) {
    %c0_i32 = arith.constant 0 : i32
    %c0_i32_0 = arith.constant 0 : i32
    %c0_i32_1 = arith.constant 0 : i32
    return %arg0, %c0_i32, %c0_i32_0 : i32, i32, i32
  }
}

</mosaic_0001>

<llo_original>
// kernel: tpu_custom_call.1
$region0: #{tpu_custom_call.1}
  #allocation0 [shape = 'u32[]', space=smem, size = 0x4, offset = 0x4, fixed_abs, tag = 'smem constant byte address 0x4 - core index']
  #allocation1 [shape = 'u32[144,128]{1,0:T(1,128)}', space=vmem, size = 0x12000, scoped, tag = 'internal scratch']
  %s0 = inlined_call_operand.hbm [shape: f32[8,8,128], index: 0, kind: input, shape index: {}]
  %s1 = inlined_call_operand.hbm [shape: bf16[128,256], index: 1, kind: input, shape index: {}]
  %s2 = inlined_call_operand.hbm [shape: f32[8,16], index: 2, kind: input, shape index: {}]
  %s3 = inlined_call_operand.hbm [shape: f32[2,8,128], index: 3, kind: input, shape index: {}]
  %s4 = inlined_call_operand.vmem [shape: f32[2,128], index: 4, kind: input, shape index: {}]
  %s5 = inlined_call_operand.hbm [shape: bf16[2,128,128], index: 5, kind: input, shape index: {}]
  %s6 = inlined_call_operand.hbm [shape: bf16[2,128,128], index: 6, kind: input, shape index: {}]
  %s7 = inlined_call_operand.hbm [shape: f32[8,8,128], index: 7, kind: output, shape index: {}]
  %s8 = sld [smem:[#allocation0]]
  $region97: #{tpu_custom_call.1} parent=0
    _
  %s10 = ssub.s32 1, %s8
  %s11 = scalar_select 0, %s10, %s8
  $region1: #{tpu_custom_call.1} parent=0
    #allocation2 [shape = 'u8[32768]{0}', space=vmem, size = 0x8000, scoped, tag = 'input window, operand 0']
    #allocation3 [shape = 's32[2]{0}', space=sflag, size = 0x8, scoped, tag = 'scoped memory for tpu_custom_call.1']
    #allocation4 [shape = 's32[2]{0}', space=sflag, size = 0x8, scoped, tag = 'scoped memory for tpu_custom_call.1']
    #allocation5 [shape = 'u8[65536]{0}', space=vmem, size = 0x10000, scoped, tag = 'input window, operand 1, single buffered']
    #allocation6 [shape = 's32[1]{0}', space=sflag, size = 0x4, scoped, tag = 'scoped memory for tpu_custom_call.1']
    #allocation7 [shape = 'u8[4096]{0}', space=vmem, size = 0x1000, scoped, tag = 'input window, operand 2, single buffered']
    #allocation8 [shape = 'u8[8192]{0}', space=vmem, size = 0x2000, scoped, tag = 'input window, operand 3']
    #allocation9 [shape = 's32[2]{0}', space=sflag, size = 0x8, scoped, tag = 'scoped memory for tpu_custom_call.1']
    #allocation10 [shape = 'u8[65536]{0}', space=vmem, size = 0x10000, scoped, tag = 'input window, operand 5']
    #allocation11 [shape = 'u8[65536]{0}', space=vmem, size = 0x10000, scoped, tag = 'input window, operand 6']
    #allocation12 [shape = 's32[2]{0}', space=sflag, size = 0x8, scoped, tag = 'scoped memory for tpu_custom_call.1']
    #allocation13 [shape = 'u8[32768]{0}', space=vmem, size = 0x8000, scoped, tag = 'output window, operand 0']
    %12 = vsyncpa [#allocation3], 0
    %s13 = scalar_lea.sflag [#allocation3], 1
    %14 = vsyncpa %s13, 0
    %15 = vsyncpa [#allocation6], 0
    %16 = vsyncpa [#allocation9], 0
    %s17 = scalar_lea.sflag [#allocation9], 1
    %18 = vsyncpa %s17, 0
    %19 = vsyncpa [#allocation12], 0
    %s20 = scalar_lea.sflag [#allocation12], 1
    %21 = vsyncpa %s20, 0
    %22 = vsyncpa [#allocation4], 0
    %s23 = scalar_lea.sflag [#allocation4], 1
    %24 = vsyncpa %s23, 0
    loop: start=0, step=1, limit=6
    $region2: #{tpu_custom_call.1} parent=1 // loop_pre_header
      _
    $region3: #{tpu_custom_call.1} parent=1 // loop_header
      %s26 = sphi 0, %s30
      %p27 = scmp.ge.s32.totalorder %s26, 6
      %s33 = sphi 0, %s45
      %s34 = sphi 0, %s41
      %s35 = sphi 0, %s33
      %s36 = sphi 0, %s34
      %s37 = sphi 0, %s35
      %s38 = sphi 0, %s36
      %s48 = sphi 0, %s50
      %s51 = sphi 0, %s48
      %s52 = sphi 0, %s51
      %s68 = sphi 0, %s52
      %s72 = sphi 0, %s72
      %s74 = sphi 0, %s72
      %s75 = sphi 0, %s74
      %s89 = sphi 0, %s75
      %s93 = sphi 0, %s93
      %s95 = sphi 0, %s93
      %s96 = sphi 0, %s95
      %s110 = sphi 0, %s96
      %s116 = sphi 0, %s118
      %s119 = sphi 0, %s116
      %s120 = sphi 0, %s119
      %s136 = sphi 0, %s120
      %s140 = sphi 0, %s140
      %s142 = sphi 0, %s140
      %s143 = sphi 0, %s142
      %s157 = sphi 0, %s143
      %s163 = sphi 0, %s165
      %s166 = sphi 0, %s163
      %s167 = sphi 0, %s166
      %s183 = sphi 0, %s167
      %s189 = sphi 0, %s191
      %s192 = sphi 0, %s189
      %s193 = sphi 0, %s192
      %s209 = sphi 0, %s193
      %s215 = sphi 0, %s217
      %s218 = sphi 0, %s215
      %s219 = sphi 0, %s218
      %s235 = sphi 0, %s219
    $region4: #{tpu_custom_call.1} parent=1 // loop_header_branch
      %29 = sbr.rel (%p27) target = $region8
    $region5: #{tpu_custom_call.1} parent=1 // loop_body
      %s31 = ssub.s32 %s26, 1
      %s32 = ssub.s32 %s26, 2
      %s39 = sadd.s32 1, %s34
      %p40 = scmp.ge.s32.totalorder %s39, 2
      %s41 = scalar_select %p40, 0, %s39
      %s42 = sadd.s32 1, %s33
      %s43 = scalar_select %p40, %s42, %s33
      %p44 = scmp.ge.s32.totalorder %s43, 2
      %s45 = scalar_select %p44, 0, %s43
      %s46 = ssub.s32 %s33, %s45
      %p47 = scmp.eq.s32.totalorder %s46, 0
      %s49 = sadd.s32 %s48, 1
      %s50 = scalar_select %p47, %s48, %s49
      %p53 = pneg %p47
      %p54 = scmp.eq.s32.totalorder %s26, 3
      %p55 = por %p53, %p54
      %p56 = scmp.ne.s32.totalorder %s48, %s51
      %p57 = scmp.eq.s32.totalorder %s26, 0
      %p58 = por %p56, %p57
      %p59 = scmp.ne.s32.totalorder %s48, %s51
      %p60 = scmp.eq.s32.totalorder %s31, 3
      %p61 = por %p59, %p60
      %p62 = scmp.ne.s32.totalorder %s51, %s52
      %p63 = scmp.eq.s32.totalorder %s31, 0
      %p64 = por %p62, %p63
      %p65 = scmp.ne.s32.totalorder %s51, %s52
      %p66 = scmp.eq.s32.totalorder %s32, 3
      %p67 = por %p65, %p66
      %p69 = scmp.ne.s32.totalorder %s52, %s68
      %p70 = scmp.eq.s32.totalorder %s32, 0
      %p71 = por %p69, %p70
      %s73 = sadd.s32 %s72, 1
      %p76 = scmp.eq.s32.totalorder %s26, 3
      %p77 = scmp.ne.s32.totalorder %s72, %s74
      %p78 = scmp.eq.s32.totalorder %s26, 0
      %p79 = por %p77, %p78
      %p80 = scmp.ne.s32.totalorder %s72, %s74
      %p81 = scmp.eq.s32.totalorder %s31, 3
      %p82 = por %p80, %p81
      %p83 = scmp.ne.s32.totalorder %s74, %s75
      %p84 = scmp.eq.s32.totalorder %s31, 0
      %p85 = por %p83, %p84
      %p86 = scmp.ne.s32.totalorder %s74, %s75
      %p87 = scmp.eq.s32.totalorder %s32, 3
      %p88 = por %p86, %p87
      %p90 = scmp.ne.s32.totalorder %s75, %s89
      %p91 = scmp.eq.s32.totalorder %s32, 0
      %p92 = por %p90, %p91
      %s94 = sadd.s32 %s93, 1
      %p97 = scmp.eq.s32.totalorder %s26, 3
      %p98 = scmp.ne.s32.totalorder %s93, %s95
      %p99 = scmp.eq.s32.totalorder %s26, 0
      %p100 = por %p98, %p99
      %p101 = scmp.ne.s32.totalorder %s93, %s95
      %p102 = scmp.eq.s32.totalorder %s31, 3
      %p103 = por %p101, %p102
      %p104 = scmp.ne.s32.totalorder %s95, %s96
      %p105 = scmp.eq.s32.totalorder %s31, 0
      %p106 = por %p104, %p105
      %p107 = scmp.ne.s32.totalorder %s95, %s96
      %p108 = scmp.eq.s32.totalorder %s32, 3
      %p109 = por %p107, %p108
      %p111 = scmp.ne.s32.totalorder %s96, %s110
      %p112 = scmp.eq.s32.totalorder %s32, 0
      %p113 = por %p111, %p112
      %s114 = ssub.s32 %s34, %s41
      %p115 = scmp.eq.s32.totalorder %s114, 0
      %s117 = sadd.s32 %s116, 1
      %s118 = scalar_select %p115, %s116, %s117
      %p121 = pneg %p115
      %p122 = scmp.eq.s32.totalorder %s26, 3
      %p123 = por %p121, %p122
      %p124 = scmp.ne.s32.totalorder %s116, %s119
      %p125 = scmp.eq.s32.totalorder %s26, 0
      %p126 = por %p124, %p125
      %p127 = scmp.ne.s32.totalorder %s116, %s119
      %p128 = scmp.eq.s32.totalorder %s31, 3
      %p129 = por %p127, %p128
      %p130 = scmp.ne.s32.totalorder %s119, %s120
      %p131 = scmp.eq.s32.totalorder %s31, 0
      %p132 = por %p130, %p131
      %p133 = scmp.ne.s32.totalorder %s119, %s120
      %p134 = scmp.eq.s32.totalorder %s32, 3
      %p135 = por %p133, %p134
      %p137 = scmp.ne.s32.totalorder %s120, %s136
      %p138 = scmp.eq.s32.totalorder %s32, 0
      %p139 = por %p137, %p138
      %s141 = sadd.s32 %s140, 1
      %p144 = scmp.eq.s32.totalorder %s26, 3
      %p145 = scmp.ne.s32.totalorder %s140, %s142
      %p146 = scmp.eq.s32.totalorder %s26, 0
      %p147 = por %p145, %p146
      %p148 = scmp.ne.s32.totalorder %s140, %s142
      %p149 = scmp.eq.s32.totalorder %s31, 3
      %p150 = por %p148, %p149
      %p151 = scmp.ne.s32.totalorder %s142, %s143
      %p152 = scmp.eq.s32.totalorder %s31, 0
      %p153 = por %p151, %p152
      %p154 = scmp.ne.s32.totalorder %s142, %s143
      %p155 = scmp.eq.s32.totalorder %s32, 3
      %p156 = por %p154, %p155
      %p158 = scmp.ne.s32.totalorder %s143, %s157
      %p159 = scmp.eq.s32.totalorder %s32, 0
      %p160 = por %p158, %p159
      %s161 = ssub.s32 %s34, %s41
      %p162 = scmp.eq.s32.totalorder %s161, 0
      %s164 = sadd.s32 %s163, 1
      %s165 = scalar_select %p162, %s163, %s164
      %p168 = pneg %p162
      %p169 = scmp.eq.s32.totalorder %s26, 3
      %p170 = por %p168, %p169
      %p171 = scmp.ne.s32.totalorder %s163, %s166
      %p172 = scmp.eq.s32.totalorder %s26, 0
      %p173 = por %p171, %p172
      %p174 = scmp.ne.s32.totalorder %s163, %s166
      %p175 = scmp.eq.s32.totalorder %s31, 3
      %p176 = por %p174, %p175
      %p177 = scmp.ne.s32.totalorder %s166, %s167
      %p178 = scmp.eq.s32.totalorder %s31, 0
      %p179 = por %p177, %p178
      %p180 = scmp.ne.s32.totalorder %s166, %s167
      %p181 = scmp.eq.s32.totalorder %s32, 3
      %p182 = por %p180, %p181
      %p184 = scmp.ne.s32.totalorder %s167, %s183
      %p185 = scmp.eq.s32.totalorder %s32, 0
      %p186 = por %p184, %p185
      %s187 = ssub.s32 %s34, %s41
      %p188 = scmp.eq.s32.totalorder %s187, 0
      %s190 = sadd.s32 %s189, 1
      %s191 = scalar_select %p188, %s189, %s190
      %p194 = pneg %p188
      %p195 = scmp.eq.s32.totalorder %s26, 3
      %p196 = por %p194, %p195
      %p197 = scmp.ne.s32.totalorder %s189, %s192
      %p198 = scmp.eq.s32.totalorder %s26, 0
      %p199 = por %p197, %p198
      %p200 = scmp.ne.s32.totalorder %s189, %s192
      %p201 = scmp.eq.s32.totalorder %s31, 3
      %p202 = por %p200, %p201
      %p203 = scmp.ne.s32.totalorder %s192, %s193
      %p204 = scmp.eq.s32.totalorder %s31, 0
      %p205 = por %p203, %p204
      %p206 = scmp.ne.s32.totalorder %s192, %s193
      %p207 = scmp.eq.s32.totalorder %s32, 3
      %p208 = por %p206, %p207
      %p210 = scmp.ne.s32.totalorder %s193, %s209
      %p211 = scmp.eq.s32.totalorder %s32, 0
      %p212 = por %p210, %p211
      %s213 = ssub.s32 %s33, %s45
      %p214 = scmp.eq.s32.totalorder %s213, 0
      %s216 = sadd.s32 %s215, 1
      %s217 = scalar_select %p214, %s215, %s216
      %p220 = pneg %p214
      %p221 = scmp.eq.s32.totalorder %s26, 3
      %p222 = por %p220, %p221
      %p223 = scmp.ne.s32.totalorder %s215, %s218
      %p224 = scmp.eq.s32.totalorder %s26, 0
      %p225 = por %p223, %p224
      %p226 = scmp.ne.s32.totalorder %s215, %s218
      %p227 = scmp.eq.s32.totalorder %s31, 3
      %p228 = por %p226, %p227
      %p229 = scmp.ne.s32.totalorder %s218, %s219
      %p230 = scmp.eq.s32.totalorder %s31, 0
      %p231 = por %p229, %p230
      %p232 = scmp.ne.s32.totalorder %s218, %s219
      %p233 = scmp.eq.s32.totalorder %s32, 3
      %p234 = por %p232, %p233
      %p236 = scmp.ne.s32.totalorder %s219, %s235
      %p237 = scmp.eq.s32.totalorder %s32, 0
      %p238 = por %p236, %p237
      %p239 = scmp.le.s32.totalorder 1, %s26
      %p240 = scmp.lt.s32.totalorder %s26, 5
      %p241 = pnand %p239, %p240
      %p242 = pneg %p241
      // Predicated region
      $region9: #{tpu_custom_call.1} parent=5 // pred_check
        _
      $region10: #{tpu_custom_call.1} parent=5 // pred_check_branch
        %244 = sbr.rel (%p241) target = $region12
      $region11: #{tpu_custom_call.1} parent=5 // pred_region
        %s245 = ssub.s32 %s26, 1
        // Predicated region
        $region13: #{tpu_custom_call.1} parent=11 // pred_check
          %p246 = pneg %p85
        $region14: #{tpu_custom_call.1} parent=11 // pred_check_branch
          %248 = sbr.rel (%p246) target = $region16
        $region15: #{tpu_custom_call.1} parent=11 // pred_region
          %s250 = ssub.s32 2048, 2048
          %251 = vsyncadd [#allocation6], %s250
          %s252 = sshll.u32 [#allocation5], 4
          %s253 = int_to_ptr.vmem [resolvable:$true] %s252
          %258 = dma.hbm_to_vmem [thread:$0]  %s1, 2048, %s253, [#allocation6], 128, 128, 8
        $region16: #{tpu_custom_call.1} parent=11 // pred_fallthru
          _
        // Predicated region
        $region17: #{tpu_custom_call.1} parent=11 // pred_check
          %p259 = pneg %p106
        $region18: #{tpu_custom_call.1} parent=11 // pred_check_branch
          %261 = sbr.rel (%p259) target = $region20
        $region19: #{tpu_custom_call.1} parent=11 // pred_region
          %s263 = ssub.s32 128, 128
          %264 = vsyncadd [#allocation6], %s263
          %s266 = sshll.u32 [#allocation7], 4
          %s267 = int_to_ptr.vmem [resolvable:$true] %s266
          %269 = dma.hbm_to_vmem [thread:$0]  %s2, 128, %s267, [#allocation6]
        $region20: #{tpu_custom_call.1} parent=11 // pred_fallthru
          _
        // Predicated region
        $region21: #{tpu_custom_call.1} parent=11 // pred_check
          %p270 = pneg %p153
        $region22: #{tpu_custom_call.1} parent=11 // pred_check_branch
          %272 = sbr.rel (%p270) target = $region24
        $region23: #{tpu_custom_call.1} parent=11 // pred_region
          _
        $region24: #{tpu_custom_call.1} parent=11 // pred_fallthru
          _
      $region12: #{tpu_custom_call.1} parent=5 // pred_fallthru
        _
      %p273 = scmp.lt.s32.totalorder %s26, 4
      // Predicated region
      $region25: #{tpu_custom_call.1} parent=5 // pred_check
        %p274 = pneg %p273
      $region26: #{tpu_custom_call.1} parent=5 // pred_check_branch
        %276 = sbr.rel (%p274) target = $region28
      $region27: #{tpu_custom_call.1} parent=5 // pred_region
        // Predicated region
        $region29: #{tpu_custom_call.1} parent=27 // pred_check
          %p277 = pneg %p58
        $region30: #{tpu_custom_call.1} parent=27 // pred_check_branch
          %279 = sbr.rel (%p277) target = $region32
        $region31: #{tpu_custom_call.1} parent=27 // pred_region
          %s280 = sand.u32 %s48, 1
          %s281 = scalar_lea.sflag [#allocation3], %s280
          %s282 = sand.u32 %s48, 1
          %s283 = smul.addr %s282, 32
          %s284 = scalar_lea.vmem [#allocation2], %s283
          %s285 = smul.u32 4, %s33
          %s287 = ssub.s32 512, 512
          %288 = vsyncadd %s281, %s287
          %s289 = smul.addr %s285, 128
          %s290 = scalar_lea.hbm %s0, %s289
          %s291 = sshll.u32 %s284, 4
          %s292 = int_to_ptr.vmem [resolvable:$true] %s291
          %297 = dma.hbm_to_vmem [thread:$0]  %s290, 512, %s292, %s281, 128, 128, 8
        $region32: #{tpu_custom_call.1} parent=27 // pred_fallthru
          _
        // Predicated region
        $region33: #{tpu_custom_call.1} parent=27 // pred_check
          %p298 = pneg %p126
        $region34: #{tpu_custom_call.1} parent=27 // pred_check_branch
          %300 = sbr.rel (%p298) target = $region36
        $region35: #{tpu_custom_call.1} parent=27 // pred_region
          %s301 = sand.u32 %s26, 1
          %s302 = scalar_lea.sflag [#allocation9], %s301
          %s303 = sand.u32 %s116, 1
          %s304 = smul.addr %s303, 8
          %s305 = scalar_lea.vmem [#allocation8], %s304
          %s307 = ssub.s32 128, 128
          %308 = vsyncadd %s302, %s307
          %s309 = smul.addr %s34, 128
          %s310 = scalar_lea.hbm %s3, %s309
          %s312 = sshll.u32 %s305, 4
          %s313 = int_to_ptr.vmem [resolvable:$true] %s312
          %315 = dma.hbm_to_vmem [thread:$0]  %s310, 128, %s313, %s302
        $region36: #{tpu_custom_call.1} parent=27 // pred_fallthru
          _
        // Predicated region
        $region37: #{tpu_custom_call.1} parent=27 // pred_check
          %p316 = pneg %p173
        $region38: #{tpu_custom_call.1} parent=27 // pred_check_branch
          %318 = sbr.rel (%p316) target = $region40
        $region39: #{tpu_custom_call.1} parent=27 // pred_region
          %s319 = sand.u32 %s26, 1
          %s320 = scalar_lea.sflag [#allocation9], %s319
          %s321 = sand.u32 %s163, 1
          %s322 = smul.addr %s321, 64
          %s323 = scalar_lea.vmem [#allocation10], %s322
          %s325 = ssub.s32 1024, 1024
          %326 = vsyncadd %s320, %s325
          %s327 = smul.addr %s34, 16
          %s328 = smul.addr %s327, 64
          %s329 = scalar_lea.hbm %s5, %s328
          %s330 = sshll.u32 %s323, 4
          %s331 = int_to_ptr.vmem [resolvable:$true] %s330
          %336 = dma.hbm_to_vmem [thread:$0]  %s329, 1024, %s331, %s320, 64, 64, 4
        $region40: #{tpu_custom_call.1} parent=27 // pred_fallthru
          _
        // Predicated region
        $region41: #{tpu_custom_call.1} parent=27 // pred_check
          %p337 = pneg %p199
        $region42: #{tpu_custom_call.1} parent=27 // pred_check_branch
          %339 = sbr.rel (%p337) target = $region44
        $region43: #{tpu_custom_call.1} parent=27 // pred_region
          %s340 = sand.u32 %s189, 1
          %s341 = scalar_lea.sflag [#allocation12], %s340
          %s342 = sand.u32 %s189, 1
          %s343 = smul.addr %s342, 64
          %s344 = scalar_lea.vmem [#allocation11], %s343
          %s346 = ssub.s32 1024, 1024
          %347 = vsyncadd %s341, %s346
          %s348 = smul.addr %s34, 16
          %s349 = smul.addr %s348, 64
          %s350 = scalar_lea.hbm %s6, %s349
          %s351 = sshll.u32 %s344, 4
          %s352 = int_to_ptr.vmem [resolvable:$true] %s351
          %357 = dma.hbm_to_vmem [thread:$0]  %s350, 1024, %s352, %s341, 64, 64, 4
        $region44: #{tpu_custom_call.1} parent=27 // pred_fallthru
          _
      $region28: #{tpu_custom_call.1} parent=5 // pred_fallthru
        _
      %p358 = scmp.le.s32.totalorder 1, %s26
      %p359 = scmp.lt.s32.totalorder %s26, 5
      %p360 = pnand %p358, %p359
      %p361 = pneg %p360
      // Predicated region
      $region45: #{tpu_custom_call.1} parent=5 // pred_check
        _
      $region46: #{tpu_custom_call.1} parent=5 // pred_check_branch
        %363 = sbr.rel (%p360) target = $region48
      $region47: #{tpu_custom_call.1} parent=5 // pred_region
        %s364 = ssub.s32 %s26, 1
        %s365 = sand.u32 %s51, 1
        %s366 = scalar_lea.sflag [#allocation3], %s365
        %s367 = sand.u32 %s51, 1
        %s368 = smul.addr %s367, 32
        %s369 = scalar_lea.vmem [#allocation2], %s368
        // Predicated region
        $region49: #{tpu_custom_call.1} parent=47 // pred_check
          %p370 = pneg %p64
        $region50: #{tpu_custom_call.1} parent=47 // pred_check_branch
          %372 = sbr.rel (%p370) target = $region52
        $region51: #{tpu_custom_call.1} parent=47 // pred_region
          %373 = dma.done %s366, 512
        $region52: #{tpu_custom_call.1} parent=47 // pred_fallthru
          _
        // Predicated region
        $region53: #{tpu_custom_call.1} parent=47 // pred_check
          %p374 = pneg %p85
        $region54: #{tpu_custom_call.1} parent=47 // pred_check_branch
          %376 = sbr.rel (%p374) target = $region56
        $region55: #{tpu_custom_call.1} parent=47 // pred_region
          %377 = dma.done [#allocation6], 2048
        $region56: #{tpu_custom_call.1} parent=47 // pred_fallthru
          _
        // Predicated region
        $region57: #{tpu_custom_call.1} parent=47 // pred_check
          %p378 = pneg %p106
        $region58: #{tpu_custom_call.1} parent=47 // pred_check_branch
          %380 = sbr.rel (%p378) target = $region60
        $region59: #{tpu_custom_call.1} parent=47 // pred_region
          %381 = dma.done [#allocation6], 128
        $region60: #{tpu_custom_call.1} parent=47 // pred_fallthru
          _
        %s382 = sand.u32 %s31, 1
        %s383 = scalar_lea.sflag [#allocation9], %s382
        %s384 = sand.u32 %s119, 1
        %s385 = smul.addr %s384, 8
        %s386 = scalar_lea.vmem [#allocation8], %s385
        // Predicated region
        $region61: #{tpu_custom_call.1} parent=47 // pred_check
          %p387 = pneg %p132
        $region62: #{tpu_custom_call.1} parent=47 // pred_check_branch
          %389 = sbr.rel (%p387) target = $region64
        $region63: #{tpu_custom_call.1} parent=47 // pred_region
          %390 = dma.done %s383, 128
        $region64: #{tpu_custom_call.1} parent=47 // pred_fallthru
          _
        %s391 = sand.u32 %s31, 1
        %s392 = scalar_lea.sflag [#allocation9], %s391
        %s393 = sand.u32 %s166, 1
        %s394 = smul.addr %s393, 64
        %s395 = scalar_lea.vmem [#allocation10], %s394
        // Predicated region
        $region65: #{tpu_custom_call.1} parent=47 // pred_check
          %p396 = pneg %p179
        $region66: #{tpu_custom_call.1} parent=47 // pred_check_branch
          %398 = sbr.rel (%p396) target = $region68
        $region67: #{tpu_custom_call.1} parent=47 // pred_region
          %399 = dma.done %s392, 1024
        $region68: #{tpu_custom_call.1} parent=47 // pred_fallthru
          _
        %s400 = sand.u32 %s192, 1
        %s401 = scalar_lea.sflag [#allocation12], %s400
        %s402 = sand.u32 %s192, 1
        %s403 = smul.addr %s402, 64
        %s404 = scalar_lea.vmem [#allocation11], %s403
        // Predicated region
        $region69: #{tpu_custom_call.1} parent=47 // pred_check
          %p405 = pneg %p205
        $region70: #{tpu_custom_call.1} parent=47 // pred_check_branch
          %407 = sbr.rel (%p405) target = $region72
        $region71: #{tpu_custom_call.1} parent=47 // pred_region
          %408 = dma.done %s401, 1024
        $region72: #{tpu_custom_call.1} parent=47 // pred_fallthru
          _
        %s409 = sand.u32 %s51, 1
        %s410 = scalar_lea.sflag [#allocation3], %s409
        %s411 = sand.u32 %s51, 1
        %s412 = smul.addr %s411, 32
        %s413 = scalar_lea.vmem [#allocation2], %s412
        %p414 = pneg %p64
        %p415 = pneg %p61
        %p416 = pneg %p85
        %p417 = pneg %p82
        %p418 = pneg %p106
        %p419 = pneg %p103
        %s420 = sand.u32 %s31, 1
        %s421 = scalar_lea.sflag [#allocation9], %s420
        %s422 = sand.u32 %s119, 1
        %s423 = smul.addr %s422, 8
        %s424 = scalar_lea.vmem [#allocation8], %s423
        %p425 = pneg %p132
        %p426 = pneg %p129
        %p427 = pneg %p153
        %p428 = pneg %p150
        %s429 = sand.u32 %s31, 1
        %s430 = scalar_lea.sflag [#allocation9], %s429
        %s431 = sand.u32 %s166, 1
        %s432 = smul.addr %s431, 64
        %s433 = scalar_lea.vmem [#allocation10], %s432
        %p434 = pneg %p179
        %p435 = pneg %p176
        %s436 = sand.u32 %s192, 1
        %s437 = scalar_lea.sflag [#allocation12], %s436
        %s438 = sand.u32 %s192, 1
        %s439 = smul.addr %s438, 64
        %s440 = scalar_lea.vmem [#allocation11], %s439
        %p441 = pneg %p205
        %p442 = pneg %p202
        %p443 = pneg %p231
        %p444 = pneg %p228
        %s445 = sand.u32 %s218, 1
        %s446 = scalar_lea.sflag [#allocation4], %s445
        %s447 = sand.u32 %s218, 1
        %s448 = smul.addr %s447, 32
        %s449 = scalar_lea.vmem [#allocation13], %s448
        %s450 = smul.u32 4, %s35
        %s451 = smul.u32 4, %s35
        %p453 = scmp.eq.s32.totalorder %s36, 0
        // Predicated region
        $region73: #{tpu_custom_call.1} parent=47 // pred_check
          %p454 = pneg %p453
        $region74: #{tpu_custom_call.1} parent=47 // pred_check_branch
          %456 = sbr.rel (%p454) target = $region76
        $region75: #{tpu_custom_call.1} parent=47 // pred_region
          %v457 = vld [vmem:[%s369] sm:$0xff]
          %v458 = vld [vmem:[%s369 + $0x8] sm:$0xff]
          %v459 = vld [vmem:[%s369 + $0x10] sm:$0xff]
          %v460 = vld [vmem:[%s369 + $0x18] sm:$0xff]
          %461 = vst [vmem:[%s449] sm:$0xff] %v457
          %462 = vst [vmem:[%s449 + $0x8] sm:$0xff] %v458
          %463 = vst [vmem:[%s449 + $0x10] sm:$0xff] %v459
          %464 = vst [vmem:[%s449 + $0x18] sm:$0xff] %v460
        $region76: #{tpu_custom_call.1} parent=47 // pred_fallthru
          _
        %v465 = vld [vmem:[%s449] sm:$0xff]
        %v466 = vld [vmem:[%s449 + $0x8] sm:$0xff]
        %v467 = vld [vmem:[%s449 + $0x10] sm:$0xff]
        %v468 = vld [vmem:[%s449 + $0x18] sm:$0xff]
        %v469 = vld [vmem:[%s386] sm:$0xff]
        %v470 = vpack.c.bf16 %v466, %v465
        %v471 = vpack.c.bf16 %v468, %v467
        %v472 = vld [vmem:[#allocation5] sm:$0xff]
        %v473 = vld [vmem:[#allocation5 + $0x8] sm:$0xff]
        %v474 = vld [vmem:[#allocation5 + $0x10] sm:$0xff]
        %v475 = vld [vmem:[#allocation5 + $0x18] sm:$0xff]
        %v476 = vld [vmem:[#allocation5 + $0x20] sm:$0xff]
        %v477 = vld [vmem:[#allocation5 + $0x28] sm:$0xff]
        %v478 = vld [vmem:[#allocation5 + $0x30] sm:$0xff]
        %v479 = vld [vmem:[#allocation5 + $0x38] sm:$0xff]
        %v480 = vld [vmem:[#allocation5 + $0x40] sm:$0xff]
        %v481 = vld [vmem:[#allocation5 + $0x48] sm:$0xff]
        %v482 = vld [vmem:[#allocation5 + $0x50] sm:$0xff]
        %v483 = vld [vmem:[#allocation5 + $0x58] sm:$0xff]
        %v484 = vld [vmem:[#allocation5 + $0x60] sm:$0xff]
        %v485 = vld [vmem:[#allocation5 + $0x68] sm:$0xff]
        %v486 = vld [vmem:[#allocation5 + $0x70] sm:$0xff]
        %v487 = vld [vmem:[#allocation5 + $0x78] sm:$0xff]
        %v504 = vunpack.c.l.b16 %v472
        %v505 = vunpack.c.h.b16 %v472
        %v506 = vunpack.c.l.b16 %v473
        %v507 = vunpack.c.h.b16 %v473
        %v508 = vunpack.c.l.b16 %v474
        %v509 = vunpack.c.h.b16 %v474
        %v510 = vunpack.c.l.b16 %v475
        %v511 = vunpack.c.h.b16 %v475
        %v512 = vunpack.c.l.b16 %v476
        %v513 = vunpack.c.h.b16 %v476
        %v514 = vunpack.c.l.b16 %v477
        %v515 = vunpack.c.h.b16 %v477
        %v516 = vunpack.c.l.b16 %v478
        %v517 = vunpack.c.h.b16 %v478
        %v518 = vunpack.c.l.b16 %v479
        %v519 = vunpack.c.h.b16 %v479
        %v520 = vunpack.c.l.b16 %v480
        %v521 = vunpack.c.h.b16 %v480
        %v522 = vunpack.c.l.b16 %v481
        %v523 = vunpack.c.h.b16 %v481
        %v524 = vunpack.c.l.b16 %v482
        %v525 = vunpack.c.h.b16 %v482
        %v526 = vunpack.c.l.b16 %v483
        %v527 = vunpack.c.h.b16 %v483
        %v528 = vunpack.c.l.b16 %v484
        %v529 = vunpack.c.h.b16 %v484
        %v530 = vunpack.c.l.b16 %v485
        %v531 = vunpack.c.h.b16 %v485
        %v532 = vunpack.c.l.b16 %v486
        %v533 = vunpack.c.h.b16 %v486
        %v534 = vunpack.c.l.b16 %v487
        %v535 = vunpack.c.h.b16 %v487
        %v536 = vpack.c.b16 %v506, %v504
        %v537 = vpack.c.b16 %v507, %v505
        %v538 = vpack.c.b16 %v510, %v508
        %v539 = vpack.c.b16 %v511, %v509
        %v540 = vpack.c.b16 %v514, %v512
        %v541 = vpack.c.b16 %v515, %v513
        %v542 = vpack.c.b16 %v518, %v516
        %v543 = vpack.c.b16 %v519, %v517
        %v544 = vpack.c.b16 %v522, %v520
        %v545 = vpack.c.b16 %v523, %v521
        %v546 = vpack.c.b16 %v526, %v524
        %v547 = vpack.c.b16 %v527, %v525
        %v548 = vpack.c.b16 %v530, %v528
        %v549 = vpack.c.b16 %v531, %v529
        %v550 = vpack.c.b16 %v534, %v532
        %v551 = vpack.c.b16 %v535, %v533
        %568 = vmatprep.subr.bf16.mxu0 %v551
        %569 = vmatpush1.bf16.msra.mxu0 %v550
        %570 = vmatprep.subr.bf16.mxu0 %v549
        %571 = vmatpush1.bf16.msra.mxu0 %v548
        %572 = vmatprep.subr.bf16.mxu0 %v547
        %573 = vmatpush1.bf16.msra.mxu0 %v546
        %574 = vmatprep.subr.bf16.mxu0 %v545
        %575 = vmatpush1.bf16.msra.mxu0 %v544
        %576 = vmatprep.subr.bf16.mxu0 %v543
        %577 = vmatpush1.bf16.msra.mxu0 %v542
        %578 = vmatprep.subr.bf16.mxu0 %v541
        %579 = vmatpush1.bf16.msra.mxu0 %v540
        %580 = vmatprep.subr.bf16.mxu0 %v539
        %581 = vmatpush1.bf16.msra.mxu0 %v538
        %582 = vmatprep.subr.bf16.mxu0 %v537
        %583 = vmatpush1.bf16.msra.mxu0 %v536
        %584 = vmatprep.subr.bf16.mxu0 0
        %585 = vmatpush2.bf16.msra.mxu0 0
        %586 = vmatprep.subr.bf16.mxu0 0
        %587 = vmatpush2.bf16.msra.mxu0 0
        %588 = vmatprep.subr.bf16.mxu0 0
        %589 = vmatpush2.bf16.msra.mxu0 0
        %590 = vmatprep.subr.bf16.mxu0 0
        %591 = vmatpush2.bf16.msra.mxu0 0
        %592 = vmatprep.subr.bf16.mxu0 0
        %593 = vmatpush2.bf16.msra.mxu0 0
        %594 = vmatprep.subr.bf16.mxu0 0
        %595 = vmatpush2.bf16.msra.mxu0 0
        %596 = vmatprep.subr.bf16.mxu0 0
        %597 = vmatpush2.bf16.msra.mxu0 0
        %598 = vmatprep.subr.bf16.mxu0 0
        %599 = vmatpush2.bf16.msra.mxu0 0
        %600 = vmatprep.mubr.bf16.mxu0 0
        %601 = vmatmul.mubr.bf16.gmra.mxu0 %v470
        %v602 = vpop.f32.mrf.mxu0
        %v603 = vadd.f32 0.0, %v602
        %v604 = vpop.f32.mrf.mxu0
        %v605 = vadd.f32 0.0, %v604
        %v606 = vpop.f32.mrf.mxu0
        %v607 = vadd.f32 0.0, %v606
        %v608 = vpop.f32.mrf.mxu0
        %v609 = vadd.f32 0.0, %v608
        %610 = vmatprep.mubr.bf16.mxu0 0
        %611 = vmatmul.mubr.bf16.gmra.mxu0 %v471
        %v612 = vpop.f32.mrf.mxu0
        %v613 = vadd.f32 0.0, %v612
        %v614 = vpop.f32.mrf.mxu0
        %v615 = vadd.f32 0.0, %v614
        %v616 = vpop.f32.mrf.mxu0
        %v617 = vadd.f32 0.0, %v616
        %v618 = vpop.f32.mrf.mxu0
        %v619 = vadd.f32 0.0, %v618
        %620 = vdwg.mxu0
        %v621 = vld [vmem:[#allocation7] sm:$0xff]
        %623 = vset.pattern.permute.xlu0 0
        %624 = vperm.xlu0 %623, %v621
        %v625 = vpop.permute.xlu0 %624
        %v627 = vlaneseq
        %v628 = vshrl.u32 %v627, 7
        %v629 = vsub.s32 0, %v628
        %v630 = vrot.slane %v603, %v629
        %v631 = vlaneseq
        %v632 = vshrl.u32 %v631, 7
        %v633 = vsub.s32 0, %v632
        %v634 = vrot.slane %v607, %v633
        %v635 = vlaneseq
        %v636 = vshrl.u32 %v635, 7
        %v637 = vsub.s32 0, %v636
        %v638 = vrot.slane %v613, %v637
        %v639 = vlaneseq
        %v640 = vshrl.u32 %v639, 7
        %v641 = vsub.s32 0, %v640
        %v642 = vrot.slane %v617, %v641
        %v643 = vmul.f32 %v625, %v630
        %v644 = vmul.f32 %v625, %v634
        %v645 = vmul.f32 %v625, %v638
        %v646 = vmul.f32 %v625, %v642
        %v647 = vadd.f32 %v643, 0.0
        %v648 = vadd.f32 %v644, 0.0
        %v649 = vadd.f32 %v645, 0.0
        %v650 = vadd.f32 %v646, 0.0
        %651 = vset.pattern.permute.xlu0 8
        %652 = vperm.xlu0 %651, %v621
        %v653 = vpop.permute.xlu0 %652
        %v655 = vlaneseq
        %v656 = vshrl.u32 %v655, 7
        %v657 = vsub.s32 0, %v656
        %v658 = vrot.slane %v605, %v657
        %v659 = vlaneseq
        %v660 = vshrl.u32 %v659, 7
        %v661 = vsub.s32 0, %v660
        %v662 = vrot.slane %v609, %v661
        %v663 = vlaneseq
        %v664 = vshrl.u32 %v663, 7
        %v665 = vsub.s32 0, %v664
        %v666 = vrot.slane %v615, %v665
        %v667 = vlaneseq
        %v668 = vshrl.u32 %v667, 7
        %v669 = vsub.s32 0, %v668
        %v670 = vrot.slane %v619, %v669
        %v671 = vmul.f32 %v653, %v658
        %v672 = vmul.f32 %v653, %v662
        %v673 = vmul.f32 %v653, %v666
        %v674 = vmul.f32 %v653, %v670
        %v675 = vadd.f32 %v647, %v671
        %v676 = vadd.f32 %v648, %v672
        %v677 = vadd.f32 %v649, %v673
        %v678 = vadd.f32 %v650, %v674
        %679 = vset.pattern.permute.xlu0 1
        %680 = vperm.xlu0 %679, %v621
        %v681 = vpop.permute.xlu0 %680
        %v683 = vlaneseq
        %v684 = vshrl.u32 %v683, 7
        %v685 = vsub.s32 1, %v684
        %v686 = vrot.slane %v603, %v685
        %v687 = vlaneseq
        %v688 = vshrl.u32 %v687, 7
        %v689 = vsub.s32 1, %v688
        %v690 = vrot.slane %v607, %v689
        %v691 = vlaneseq
        %v692 = vshrl.u32 %v691, 7
        %v693 = vsub.s32 1, %v692
        %v694 = vrot.slane %v613, %v693
        %v695 = vlaneseq
        %v696 = vshrl.u32 %v695, 7
        %v697 = vsub.s32 1, %v696
        %v698 = vrot.slane %v617, %v697
        %v699 = vmul.f32 %v681, %v686
        %v700 = vmul.f32 %v681, %v690
        %v701 = vmul.f32 %v681, %v694
        %v702 = vmul.f32 %v681, %v698
        %v703 = vadd.f32 %v675, %v699
        %v704 = vadd.f32 %v676, %v700
        %v705 = vadd.f32 %v677, %v701
        %v706 = vadd.f32 %v678, %v702
        %707 = vset.pattern.permute.xlu0 9
        %708 = vperm.xlu0 %707, %v621
        %v709 = vpop.permute.xlu0 %708
        %v711 = vlaneseq
        %v712 = vshrl.u32 %v711, 7
        %v713 = vsub.s32 1, %v712
        %v714 = vrot.slane %v605, %v713
        %v715 = vlaneseq
        %v716 = vshrl.u32 %v715, 7
        %v717 = vsub.s32 1, %v716
        %v718 = vrot.slane %v609, %v717
        %v719 = vlaneseq
        %v720 = vshrl.u32 %v719, 7
        %v721 = vsub.s32 1, %v720
        %v722 = vrot.slane %v615, %v721
        %v723 = vlaneseq
        %v724 = vshrl.u32 %v723, 7
        %v725 = vsub.s32 1, %v724
        %v726 = vrot.slane %v619, %v725
        %v727 = vmul.f32 %v709, %v714
        %v728 = vmul.f32 %v709, %v718
        %v729 = vmul.f32 %v709, %v722
        %v730 = vmul.f32 %v709, %v726
        %v731 = vadd.f32 %v703, %v727
        %v732 = vadd.f32 %v704, %v728
        %v733 = vadd.f32 %v705, %v729
        %v734 = vadd.f32 %v706, %v730
        %v735 = vadd.f32 %v465, %v731
        %v736 = vadd.f32 %v466, %v732
        %v737 = vadd.f32 %v467, %v733
        %v738 = vadd.f32 %v468, %v734
        %739 = vadd.xlane.f32.xlu0 %v735
        %v740 = vpop.xlane.xlu0 %739
        %741 = vadd.xlane.f32.xlu0 %v736
        %v742 = vpop.xlane.xlu0 %741
        %743 = vadd.xlane.f32.xlu0 %v737
        %v744 = vpop.xlane.xlu0 %743
        %745 = vadd.xlane.f32.xlu0 %v738
        %v746 = vpop.xlane.xlu0 %745
        %v747 = vmul.f32 %v740, 0.03125
        %v748 = vmul.f32 %v742, 0.03125
        %v749 = vmul.f32 %v744, 0.03125
        %v750 = vmul.f32 %v746, 0.03125
        %v751 = vsub.f32 %v735, %v747
        %v752 = vsub.f32 %v736, %v748
        %v753 = vsub.f32 %v737, %v749
        %v754 = vsub.f32 %v738, %v750
        %v755 = vmul.f32 %v751, %v751
        %v756 = vmul.f32 %v752, %v752
        %v757 = vmul.f32 %v753, %v753
        %v758 = vmul.f32 %v754, %v754
        %759 = vadd.xlane.f32.xlu0 %v755
        %v760 = vpop.xlane.xlu0 %759
        %761 = vadd.xlane.f32.xlu0 %v756
        %v762 = vpop.xlane.xlu0 %761
        %763 = vadd.xlane.f32.xlu0 %v757
        %v764 = vpop.xlane.xlu0 %763
        %765 = vadd.xlane.f32.xlu0 %v758
        %v766 = vpop.xlane.xlu0 %765
        %v767 = vmul.f32 %v747, 96.0
        %v768 = vmul.f32 %v748, 96.0
        %v769 = vmul.f32 %v749, 96.0
        %v770 = vmul.f32 %v750, 96.0
        %v771 = vmul.f32 %v767, %v747
        %v772 = vmul.f32 %v768, %v748
        %v773 = vmul.f32 %v769, %v749
        %v774 = vmul.f32 %v770, %v750
        %v775 = vsub.f32 %v760, %v771
        %v776 = vsub.f32 %v762, %v772
        %v777 = vsub.f32 %v764, %v773
        %v778 = vsub.f32 %v766, %v774
        %v779 = vmul.f32 %v775, 0.03125
        %v780 = vmul.f32 %v776, 0.03125
        %v781 = vmul.f32 %v777, 0.03125
        %v782 = vmul.f32 %v778, 0.03125
        %v783 = vmax.f32 %v779, 0.0
        %v784 = vmax.f32 %v780, 0.0
        %v785 = vmax.f32 %v781, 0.0
        %v786 = vmax.f32 %v782, 0.0
        %v787 = vadd.f32 %v783, 1e-05
        %v788 = vadd.f32 %v784, 1e-05
        %v789 = vadd.f32 %v785, 1e-05
        %v790 = vadd.f32 %v786, 1e-05
        %v791 = vrsqrt.pop %v787
        %v792 = vrsqrt.pop %v788
        %v793 = vrsqrt.pop %v789
        %v794 = vrsqrt.pop %v790
        %v795 = vmul.f32 %v751, %v791
        %v796 = vmul.f32 %v752, %v792
        %v797 = vmul.f32 %v753, %v793
        %v798 = vmul.f32 %v754, %v794
        %v799 = vlaneseq
        %v800 = vshrl.u32 %v799, 7
        %v801 = vsub.s32 0, %v800
        %v802 = vrot.slane %v469, %v801
        %v803 = vmul.f32 %v795, %v802
        %v804 = vmul.f32 %v796, %v802
        %v805 = vmul.f32 %v797, %v802
        %v806 = vmul.f32 %v798, %v802
        %v807 = vlaneseq
        %v808 = vshrl.u32 %v807, 7
        %v809 = vsub.s32 1, %v808
        %v810 = vrot.slane %v469, %v809
        %v811 = vadd.f32 %v803, %v810
        %v812 = vadd.f32 %v804, %v810
        %v813 = vadd.f32 %v805, %v810
        %v814 = vadd.f32 %v806, %v810
        %v815 = vadd.f32 %v465, %v811
        %v816 = vadd.f32 %v466, %v812
        %v817 = vadd.f32 %v467, %v813
        %v818 = vadd.f32 %v468, %v814
        %819 = vadd.xlane.f32.xlu0 %v815
        %v820 = vpop.xlane.xlu0 %819
        %821 = vadd.xlane.f32.xlu0 %v816
        %v822 = vpop.xlane.xlu0 %821
        %823 = vadd.xlane.f32.xlu0 %v817
        %v824 = vpop.xlane.xlu0 %823
        %825 = vadd.xlane.f32.xlu0 %v818
        %v826 = vpop.xlane.xlu0 %825
        %v827 = vmul.f32 %v820, 0.03125
        %v828 = vmul.f32 %v822, 0.03125
        %v829 = vmul.f32 %v824, 0.03125
        %v830 = vmul.f32 %v826, 0.03125
        %v831 = vsub.f32 %v815, %v827
        %v832 = vsub.f32 %v816, %v828
        %v833 = vsub.f32 %v817, %v829
        %v834 = vsub.f32 %v818, %v830
        %v835 = vmul.f32 %v831, %v831
        %v836 = vmul.f32 %v832, %v832
        %v837 = vmul.f32 %v833, %v833
        %v838 = vmul.f32 %v834, %v834
        %839 = vadd.xlane.f32.xlu0 %v835
        %v840 = vpop.xlane.xlu0 %839
        %841 = vadd.xlane.f32.xlu0 %v836
        %v842 = vpop.xlane.xlu0 %841
        %843 = vadd.xlane.f32.xlu0 %v837
        %v844 = vpop.xlane.xlu0 %843
        %845 = vadd.xlane.f32.xlu0 %v838
        %v846 = vpop.xlane.xlu0 %845
        %v847 = vmul.f32 %v827, 96.0
        %v848 = vmul.f32 %v828, 96.0
        %v849 = vmul.f32 %v829, 96.0
        %v850 = vmul.f32 %v830, 96.0
        %v851 = vmul.f32 %v847, %v827
        %v852 = vmul.f32 %v848, %v828
        %v853 = vmul.f32 %v849, %v829
        %v854 = vmul.f32 %v850, %v830
        %v855 = vsub.f32 %v840, %v851
        %v856 = vsub.f32 %v842, %v852
        %v857 = vsub.f32 %v844, %v853
        %v858 = vsub.f32 %v846, %v854
        %v859 = vmul.f32 %v855, 0.03125
        %v860 = vmul.f32 %v856, 0.03125
        %v861 = vmul.f32 %v857, 0.03125
        %v862 = vmul.f32 %v858, 0.03125
        %v863 = vmax.f32 %v859, 0.0
        %v864 = vmax.f32 %v860, 0.0
        %v865 = vmax.f32 %v861, 0.0
        %v866 = vmax.f32 %v862, 0.0
        %v867 = vadd.f32 %v863, 1e-05
        %v868 = vadd.f32 %v864, 1e-05
        %v869 = vadd.f32 %v865, 1e-05
        %v870 = vadd.f32 %v866, 1e-05
        %v871 = vrsqrt.pop %v867
        %v872 = vrsqrt.pop %v868
        %v873 = vrsqrt.pop %v869
        %v874 = vrsqrt.pop %v870
        %v875 = vmul.f32 %v831, %v871
        %v876 = vmul.f32 %v832, %v872
        %v877 = vmul.f32 %v833, %v873
        %v878 = vmul.f32 %v834, %v874
        %v879 = vlaneseq
        %v880 = vshrl.u32 %v879, 7
        %v881 = vsub.s32 2, %v880
        %v882 = vrot.slane %v469, %v881
        %v883 = vmul.f32 %v875, %v882
        %v884 = vmul.f32 %v876, %v882
        %v885 = vmul.f32 %v877, %v882
        %v886 = vmul.f32 %v878, %v882
        %v887 = vlaneseq
        %v888 = vshrl.u32 %v887, 7
        %v889 = vsub.s32 3, %v888
        %v890 = vrot.slane %v469, %v889
        %v891 = vadd.f32 %v883, %v890
        %v892 = vadd.f32 %v884, %v890
        %v893 = vadd.f32 %v885, %v890
        %v894 = vadd.f32 %v886, %v890
        %v895 = vpack.c.bf16 %v892, %v891
        %v896 = vpack.c.bf16 %v894, %v893
        %v897 = vld [vmem:[%s395] sm:$0xf]
        %v898 = vld [vmem:[%s395 + $0x4] sm:$0xf]
        %v899 = vld [vmem:[%s395 + $0x8] sm:$0xf]
        %v900 = vld [vmem:[%s395 + $0xc] sm:$0xf]
        %v901 = vld [vmem:[%s395 + $0x10] sm:$0xf]
        %v902 = vld [vmem:[%s395 + $0x14] sm:$0xf]
        %v903 = vld [vmem:[%s395 + $0x18] sm:$0xf]
        %v904 = vld [vmem:[%s395 + $0x1c] sm:$0xf]
        %v905 = vld [vmem:[%s395 + $0x20] sm:$0xf]
        %v906 = vld [vmem:[%s395 + $0x24] sm:$0xf]
        %v907 = vld [vmem:[%s395 + $0x28] sm:$0xf]
        %v908 = vld [vmem:[%s395 + $0x2c] sm:$0xf]
        %v909 = vld [vmem:[%s395 + $0x30] sm:$0xf]
        %v910 = vld [vmem:[%s395 + $0x34] sm:$0xf]
        %v911 = vld [vmem:[%s395 + $0x38] sm:$0xf]
        %v912 = vld [vmem:[%s395 + $0x3c] sm:$0xf]
        %v913 = vlaneseq
        %v914 = vshrl.u32 %v913, 7
        %v915 = vsub.s32 7, %v914
        %v916 = vrot.slane %v469, %v915
        %v933 = vunpack.c.l.b16 %v897
        %v934 = vunpack.c.l.b16 %v898
        %v935 = vunpack.c.l.b16 %v899
        %v936 = vunpack.c.l.b16 %v900
        %v937 = vunpack.c.l.b16 %v901
        %v938 = vunpack.c.l.b16 %v902
        %v939 = vunpack.c.l.b16 %v903
        %v940 = vunpack.c.l.b16 %v904
        %v941 = vunpack.c.l.b16 %v905
        %v942 = vunpack.c.l.b16 %v906
        %v943 = vunpack.c.l.b16 %v907
        %v944 = vunpack.c.l.b16 %v908
        %v945 = vunpack.c.l.b16 %v909
        %v946 = vunpack.c.l.b16 %v910
        %v947 = vunpack.c.l.b16 %v911
        %v948 = vunpack.c.l.b16 %v912
        %v949 = vpack.c.b16 %v934, %v933
        %v950 = vpack.c.b16 %v936, %v935
        %v951 = vpack.c.b16 %v938, %v937
        %v952 = vpack.c.b16 %v940, %v939
        %v953 = vpack.c.b16 %v942, %v941
        %v954 = vpack.c.b16 %v944, %v943
        %v955 = vpack.c.b16 %v946, %v945
        %v956 = vpack.c.b16 %v948, %v947
        %965 = vmatprep.subr.bf16.mxu0 0
        %966 = vmatpush1.bf16.msra.mxu0 %v956
        %967 = vmatprep.subr.bf16.mxu0 0
        %968 = vmatpush1.bf16.msra.mxu0 %v955
        %969 = vmatprep.subr.bf16.mxu0 0
        %970 = vmatpush1.bf16.msra.mxu0 %v954
        %971 = vmatprep.subr.bf16.mxu0 0
        %972 = vmatpush1.bf16.msra.mxu0 %v953
        %973 = vmatprep.subr.bf16.mxu0 0
        %974 = vmatpush1.bf16.msra.mxu0 %v952
        %975 = vmatprep.subr.bf16.mxu0 0
        %976 = vmatpush1.bf16.msra.mxu0 %v951
        %977 = vmatprep.subr.bf16.mxu0 0
        %978 = vmatpush1.bf16.msra.mxu0 %v950
        %979 = vmatprep.subr.bf16.mxu0 0
        %980 = vmatpush1.bf16.msra.mxu0 %v949
        %981 = vmatprep.subr.bf16.mxu0 0
        %982 = vmatpush2.bf16.msra.mxu0 0
        %983 = vmatprep.subr.bf16.mxu0 0
        %984 = vmatpush2.bf16.msra.mxu0 0
        %985 = vmatprep.subr.bf16.mxu0 0
        %986 = vmatpush2.bf16.msra.mxu0 0
        %987 = vmatprep.subr.bf16.mxu0 0
        %988 = vmatpush2.bf16.msra.mxu0 0
        %989 = vmatprep.subr.bf16.mxu0 0
        %990 = vmatpush2.bf16.msra.mxu0 0
        %991 = vmatprep.subr.bf16.mxu0 0
        %992 = vmatpush2.bf16.msra.mxu0 0
        %993 = vmatprep.subr.bf16.mxu0 0
        %994 = vmatpush2.bf16.msra.mxu0 0
        %995 = vmatprep.subr.bf16.mxu0 0
        %996 = vmatpush2.bf16.msra.mxu0 0
        %997 = vmatprep.mubr.bf16.mxu0 0
        %998 = vmatmul.mubr.bf16.gmra.mxu0 %v895
        %v999 = vpop.f32.mrf.mxu0
        %v1000 = vadd.f32 %v916, %v999
        %v1001 = vpop.f32.mrf.mxu0
        %v1002 = vpop.f32.mrf.mxu0
        %v1003 = vadd.f32 %v916, %v1002
        %v1004 = vpop.f32.mrf.mxu0
        %1005 = vmatprep.mubr.bf16.mxu0 0
        %1006 = vmatmul.mubr.bf16.gmra.mxu0 %v896
        %v1007 = vpop.f32.mrf.mxu0
        %v1008 = vadd.f32 %v916, %v1007
        %v1009 = vpop.f32.mrf.mxu0
        %v1010 = vpop.f32.mrf.mxu0
        %v1011 = vadd.f32 %v916, %v1010
        %v1012 = vpop.f32.mrf.mxu0
        %1013 = vdwg.mxu0
        %v1014 = vmax.f32 %v1000, 0.0
        %v1015 = vmax.f32 %v1003, 0.0
        %v1016 = vmax.f32 %v1008, 0.0
        %v1017 = vmax.f32 %v1011, 0.0
        %v1018 = vpack.c.bf16 %v1015, %v1014
        %v1019 = vpack.c.bf16 %v1017, %v1016
        %v1020 = vld [vmem:[%s404] sm:$0xf]
        %v1021 = vld [vmem:[%s404 + $0x4] sm:$0xf]
        %v1022 = vld [vmem:[%s404 + $0x8] sm:$0xf]
        %v1023 = vld [vmem:[%s404 + $0xc] sm:$0xf]
        %v1024 = vld [vmem:[%s404 + $0x10] sm:$0xf]
        %v1025 = vld [vmem:[%s404 + $0x14] sm:$0xf]
        %v1026 = vld [vmem:[%s404 + $0x18] sm:$0xf]
        %v1027 = vld [vmem:[%s404 + $0x1c] sm:$0xf]
        %v1028 = vld [vmem:[%s404 + $0x20] sm:$0xf]
        %v1029 = vld [vmem:[%s404 + $0x24] sm:$0xf]
        %v1030 = vld [vmem:[%s404 + $0x28] sm:$0xf]
        %v1031 = vld [vmem:[%s404 + $0x2c] sm:$0xf]
        %v1032 = vld [vmem:[%s404 + $0x30] sm:$0xf]
        %v1033 = vld [vmem:[%s404 + $0x34] sm:$0xf]
        %v1034 = vld [vmem:[%s404 + $0x38] sm:$0xf]
        %v1035 = vld [vmem:[%s404 + $0x3c] sm:$0xf]
        %v1036 = vlaneseq
        %v1037 = vshrl.u32 %v1036, 7
        %v1038 = vsub.s32 6, %v1037
        %v1039 = vrot.slane %v469, %v1038
        %v1056 = vunpack.c.l.b16 %v1020
        %v1057 = vunpack.c.l.b16 %v1021
        %v1058 = vunpack.c.l.b16 %v1022
        %v1059 = vunpack.c.l.b16 %v1023
        %v1060 = vunpack.c.l.b16 %v1024
        %v1061 = vunpack.c.l.b16 %v1025
        %v1062 = vunpack.c.l.b16 %v1026
        %v1063 = vunpack.c.l.b16 %v1027
        %v1064 = vunpack.c.l.b16 %v1028
        %v1065 = vunpack.c.l.b16 %v1029
        %v1066 = vunpack.c.l.b16 %v1030
        %v1067 = vunpack.c.l.b16 %v1031
        %v1068 = vunpack.c.l.b16 %v1032
        %v1069 = vunpack.c.l.b16 %v1033
        %v1070 = vunpack.c.l.b16 %v1034
        %v1071 = vunpack.c.l.b16 %v1035
        %v1072 = vpack.c.b16 %v1057, %v1056
        %v1073 = vpack.c.b16 %v1059, %v1058
        %v1074 = vpack.c.b16 %v1061, %v1060
        %v1075 = vpack.c.b16 %v1063, %v1062
        %v1076 = vpack.c.b16 %v1065, %v1064
        %v1077 = vpack.c.b16 %v1067, %v1066
        %v1078 = vpack.c.b16 %v1069, %v1068
        %v1079 = vpack.c.b16 %v1071, %v1070
        %1088 = vmatprep.subr.bf16.mxu0 0
        %1089 = vmatpush1.bf16.msra.mxu0 %v1079
        %1090 = vmatprep.subr.bf16.mxu0 0
        %1091 = vmatpush1.bf16.msra.mxu0 %v1078
        %1092 = vmatprep.subr.bf16.mxu0 0
        %1093 = vmatpush1.bf16.msra.mxu0 %v1077
        %1094 = vmatprep.subr.bf16.mxu0 0
        %1095 = vmatpush1.bf16.msra.mxu0 %v1076
        %1096 = vmatprep.subr.bf16.mxu0 0
        %1097 = vmatpush1.bf16.msra.mxu0 %v1075
        %1098 = vmatprep.subr.bf16.mxu0 0
        %1099 = vmatpush1.bf16.msra.mxu0 %v1074
        %1100 = vmatprep.subr.bf16.mxu0 0
        %1101 = vmatpush1.bf16.msra.mxu0 %v1073
        %1102 = vmatprep.subr.bf16.mxu0 0
        %1103 = vmatpush1.bf16.msra.mxu0 %v1072
        %1104 = vmatprep.subr.bf16.mxu0 0
        %1105 = vmatpush2.bf16.msra.mxu0 0
        %1106 = vmatprep.subr.bf16.mxu0 0
        %1107 = vmatpush2.bf16.msra.mxu0 0
        %1108 = vmatprep.subr.bf16.mxu0 0
        %1109 = vmatpush2.bf16.msra.mxu0 0
        %1110 = vmatprep.subr.bf16.mxu0 0
        %1111 = vmatpush2.bf16.msra.mxu0 0
        %1112 = vmatprep.subr.bf16.mxu0 0
        %1113 = vmatpush2.bf16.msra.mxu0 0
        %1114 = vmatprep.subr.bf16.mxu0 0
        %1115 = vmatpush2.bf16.msra.mxu0 0
        %1116 = vmatprep.subr.bf16.mxu0 0
        %1117 = vmatpush2.bf16.msra.mxu0 0
        %1118 = vmatprep.subr.bf16.mxu0 0
        %1119 = vmatpush2.bf16.msra.mxu0 0
        %1120 = vmatprep.mubr.bf16.mxu0 0
        %1121 = vmatmul.mubr.bf16.gmra.mxu0 %v1018
        %v1122 = vpop.f32.mrf.mxu0
        %v1123 = vadd.f32 %v1039, %v1122
        %v1124 = vpop.f32.mrf.mxu0
        %v1125 = vpop.f32.mrf.mxu0
        %v1126 = vadd.f32 %v1039, %v1125
        %v1127 = vpop.f32.mrf.mxu0
        %1128 = vmatprep.mubr.bf16.mxu0 0
        %1129 = vmatmul.mubr.bf16.gmra.mxu0 %v1019
        %v1130 = vpop.f32.mrf.mxu0
        %v1131 = vadd.f32 %v1039, %v1130
        %v1132 = vpop.f32.mrf.mxu0
        %v1133 = vpop.f32.mrf.mxu0
        %v1134 = vadd.f32 %v1039, %v1133
        %v1135 = vpop.f32.mrf.mxu0
        %1136 = vdwg.mxu0
        %v1137 = vadd.f32 %v891, %v1123
        %v1138 = vadd.f32 %v892, %v1126
        %v1139 = vadd.f32 %v893, %v1131
        %v1140 = vadd.f32 %v894, %v1134
        %1141 = vadd.xlane.f32.xlu0 %v1137
        %v1142 = vpop.xlane.xlu0 %1141
        %1143 = vadd.xlane.f32.xlu0 %v1138
        %v1144 = vpop.xlane.xlu0 %1143
        %1145 = vadd.xlane.f32.xlu0 %v1139
        %v1146 = vpop.xlane.xlu0 %1145
        %1147 = vadd.xlane.f32.xlu0 %v1140
        %v1148 = vpop.xlane.xlu0 %1147
        %v1149 = vmul.f32 %v1142, 0.03125
        %v1150 = vmul.f32 %v1144, 0.03125
        %v1151 = vmul.f32 %v1146, 0.03125
        %v1152 = vmul.f32 %v1148, 0.03125
        %v1153 = vsub.f32 %v1137, %v1149
        %v1154 = vsub.f32 %v1138, %v1150
        %v1155 = vsub.f32 %v1139, %v1151
        %v1156 = vsub.f32 %v1140, %v1152
        %v1157 = vmul.f32 %v1153, %v1153
        %v1158 = vmul.f32 %v1154, %v1154
        %v1159 = vmul.f32 %v1155, %v1155
        %v1160 = vmul.f32 %v1156, %v1156
        %1161 = vadd.xlane.f32.xlu0 %v1157
        %v1162 = vpop.xlane.xlu0 %1161
        %1163 = vadd.xlane.f32.xlu0 %v1158
        %v1164 = vpop.xlane.xlu0 %1163
        %1165 = vadd.xlane.f32.xlu0 %v1159
        %v1166 = vpop.xlane.xlu0 %1165
        %1167 = vadd.xlane.f32.xlu0 %v1160
        %v1168 = vpop.xlane.xlu0 %1167
        %v1169 = vmul.f32 %v1149, 96.0
        %v1170 = vmul.f32 %v1150, 96.0
        %v1171 = vmul.f32 %v1151, 96.0
        %v1172 = vmul.f32 %v1152, 96.0
        %v1173 = vmul.f32 %v1169, %v1149
        %v1174 = vmul.f32 %v1170, %v1150
        %v1175 = vmul.f32 %v1171, %v1151
        %v1176 = vmul.f32 %v1172, %v1152
        %v1177 = vsub.f32 %v1162, %v1173
        %v1178 = vsub.f32 %v1164, %v1174
        %v1179 = vsub.f32 %v1166, %v1175
        %v1180 = vsub.f32 %v1168, %v1176
        %v1181 = vmul.f32 %v1177, 0.03125
        %v1182 = vmul.f32 %v1178, 0.03125
        %v1183 = vmul.f32 %v1179, 0.03125
        %v1184 = vmul.f32 %v1180, 0.03125
        %v1185 = vmax.f32 %v1181, 0.0
        %v1186 = vmax.f32 %v1182, 0.0
        %v1187 = vmax.f32 %v1183, 0.0
        %v1188 = vmax.f32 %v1184, 0.0
        %v1189 = vadd.f32 %v1185, 1e-05
        %v1190 = vadd.f32 %v1186, 1e-05
        %v1191 = vadd.f32 %v1187, 1e-05
        %v1192 = vadd.f32 %v1188, 1e-05
        %v1193 = vrsqrt.pop %v1189
        %v1194 = vrsqrt.pop %v1190
        %v1195 = vrsqrt.pop %v1191
        %v1196 = vrsqrt.pop %v1192
        %v1197 = vmul.f32 %v1153, %v1193
        %v1198 = vmul.f32 %v1154, %v1194
        %v1199 = vmul.f32 %v1155, %v1195
        %v1200 = vmul.f32 %v1156, %v1196
        %v1201 = vlaneseq
        %v1202 = vshrl.u32 %v1201, 7
        %v1203 = vsub.s32 4, %v1202
        %v1204 = vrot.slane %v469, %v1203
        %v1205 = vmul.f32 %v1197, %v1204
        %v1206 = vmul.f32 %v1198, %v1204
        %v1207 = vmul.f32 %v1199, %v1204
        %v1208 = vmul.f32 %v1200, %v1204
        %v1209 = vlaneseq
        %v1210 = vshrl.u32 %v1209, 7
        %v1211 = vsub.s32 5, %v1210
        %v1212 = vrot.slane %v469, %v1211
        %v1213 = vadd.f32 %v1205, %v1212
        %v1214 = vadd.f32 %v1206, %v1212
        %v1215 = vadd.f32 %v1207, %v1212
        %v1216 = vadd.f32 %v1208, %v1212
        %p1217 = scmp.ne.s32.totalorder %s36, 1
        // Predicated region
        $region77: #{tpu_custom_call.1} parent=47 // pred_check
          %p1218 = pneg %p1217
        $region78: #{tpu_custom_call.1} parent=47 // pred_check_branch
          %1220 = sbr.rel (%p1218) target = $region80
        $region79: #{tpu_custom_call.1} parent=47 // pred_region
          %1221 = vst [vmem:[%s449] sm:$0xff] %v1213
          %1222 = vst [vmem:[%s449 + $0x8] sm:$0xff] %v1214
          %1223 = vst [vmem:[%s449 + $0x10] sm:$0xff] %v1215
          %1224 = vst [vmem:[%s449 + $0x18] sm:$0xff] %v1216
        $region80: #{tpu_custom_call.1} parent=47 // pred_fallthru
          _
        %p1225 = scmp.eq.s32.totalorder %s36, 1
        // Predicated region
        $region81: #{tpu_custom_call.1} parent=47 // pred_check
          %p1226 = pneg %p1225
        $region82: #{tpu_custom_call.1} parent=47 // pred_check_branch
          %1228 = sbr.rel (%p1226) target = $region84
        $region83: #{tpu_custom_call.1} parent=47 // pred_region
          %v1229 = vld [vmem:[%s4] sm:$0x3]
          %1230 = vadd.xlane.f32.xlu0 %v1213
          %v1231 = vpop.xlane.xlu0 %1230
          %1232 = vadd.xlane.f32.xlu0 %v1214
          %v1233 = vpop.xlane.xlu0 %1232
          %1234 = vadd.xlane.f32.xlu0 %v1215
          %v1235 = vpop.xlane.xlu0 %1234
          %1236 = vadd.xlane.f32.xlu0 %v1216
          %v1237 = vpop.xlane.xlu0 %1236
          %v1238 = vmul.f32 %v1231, 0.03125
          %v1239 = vmul.f32 %v1233, 0.03125
          %v1240 = vmul.f32 %v1235, 0.03125
          %v1241 = vmul.f32 %v1237, 0.03125
          %v1242 = vsub.f32 %v1213, %v1238
          %v1243 = vsub.f32 %v1214, %v1239
          %v1244 = vsub.f32 %v1215, %v1240
          %v1245 = vsub.f32 %v1216, %v1241
          %v1246 = vmul.f32 %v1242, %v1242
          %v1247 = vmul.f32 %v1243, %v1243
          %v1248 = vmul.f32 %v1244, %v1244
          %v1249 = vmul.f32 %v1245, %v1245
          %1250 = vadd.xlane.f32.xlu0 %v1246
          %v1251 = vpop.xlane.xlu0 %1250
          %1252 = vadd.xlane.f32.xlu0 %v1247
          %v1253 = vpop.xlane.xlu0 %1252
          %1254 = vadd.xlane.f32.xlu0 %v1248
          %v1255 = vpop.xlane.xlu0 %1254
          %1256 = vadd.xlane.f32.xlu0 %v1249
          %v1257 = vpop.xlane.xlu0 %1256
          %v1258 = vmul.f32 %v1238, 96.0
          %v1259 = vmul.f32 %v1239, 96.0
          %v1260 = vmul.f32 %v1240, 96.0
          %v1261 = vmul.f32 %v1241, 96.0
          %v1262 = vmul.f32 %v1258, %v1238
          %v1263 = vmul.f32 %v1259, %v1239
          %v1264 = vmul.f32 %v1260, %v1240
          %v1265 = vmul.f32 %v1261, %v1241
          %v1266 = vsub.f32 %v1251, %v1262
          %v1267 = vsub.f32 %v1253, %v1263
          %v1268 = vsub.f32 %v1255, %v1264
          %v1269 = vsub.f32 %v1257, %v1265
          %v1270 = vmul.f32 %v1266, 0.03125
          %v1271 = vmul.f32 %v1267, 0.03125
          %v1272 = vmul.f32 %v1268, 0.03125
          %v1273 = vmul.f32 %v1269, 0.03125
          %v1274 = vmax.f32 %v1270, 0.0
          %v1275 = vmax.f32 %v1271, 0.0
          %v1276 = vmax.f32 %v1272, 0.0
          %v1277 = vmax.f32 %v1273, 0.0
          %v1278 = vadd.f32 %v1274, 1e-05
          %v1279 = vadd.f32 %v1275, 1e-05
          %v1280 = vadd.f32 %v1276, 1e-05
          %v1281 = vadd.f32 %v1277, 1e-05
          %v1282 = vrsqrt.pop %v1278
          %v1283 = vrsqrt.pop %v1279
          %v1284 = vrsqrt.pop %v1280
          %v1285 = vrsqrt.pop %v1281
          %v1286 = vmul.f32 %v1242, %v1282
          %v1287 = vmul.f32 %v1243, %v1283
          %v1288 = vmul.f32 %v1244, %v1284
          %v1289 = vmul.f32 %v1245, %v1285
          %v1290 = vlaneseq
          %v1291 = vshrl.u32 %v1290, 7
          %v1292 = vsub.s32 0, %v1291
          %v1293 = vrot.slane %v1229, %v1292
          %v1294 = vmul.f32 %v1286, %v1293
          %v1295 = vmul.f32 %v1287, %v1293
          %v1296 = vmul.f32 %v1288, %v1293
          %v1297 = vmul.f32 %v1289, %v1293
          %v1298 = vlaneseq
          %v1299 = vshrl.u32 %v1298, 7
          %v1300 = vsub.s32 1, %v1299
          %v1301 = vrot.slane %v1229, %v1300
          %v1302 = vadd.f32 %v1294, %v1301
          %v1303 = vadd.f32 %v1295, %v1301
          %v1304 = vadd.f32 %v1296, %v1301
          %v1305 = vadd.f32 %v1297, %v1301
          %1306 = vst [vmem:[%s449] sm:$0xff] %v1302
          %1307 = vst [vmem:[%s449 + $0x8] sm:$0xff] %v1303
          %1308 = vst [vmem:[%s449 + $0x10] sm:$0xff] %v1304
          %1309 = vst [vmem:[%s449 + $0x18] sm:$0xff] %v1305
        $region84: #{tpu_custom_call.1} parent=47 // pred_fallthru
          _
        %s1310 = sand.u32 %s218, 1
        %s1311 = scalar_lea.sflag [#allocation4], %s1310
        %s1312 = sand.u32 %s218, 1
        %s1313 = smul.addr %s1312, 32
        %s1314 = scalar_lea.vmem [#allocation13], %s1313
        // Predicated region
        $region85: #{tpu_custom_call.1} parent=47 // pred_check
          %p1315 = pneg %p228
        $region86: #{tpu_custom_call.1} parent=47 // pred_check_branch
          %1317 = sbr.rel (%p1315) target = $region88
        $region87: #{tpu_custom_call.1} parent=47 // pred_region
          %s1318 = smul.u32 4, %s35
          %s1320 = ssub.s32 512, 512
          %1321 = vsyncadd %s1311, %s1320
          %s1322 = smul.addr %s1318, 128
          %s1323 = scalar_lea.hbm %s7, %s1322
          %s1324 = sshll.u32 %s1314, 4
          %s1325 = int_to_ptr.vmem [resolvable:$true] %s1324
          %1330 = dma.vmem_to_hbm [thread:$0]  %s1325, 512, %s1323, %s1311, 128, 128, 8
        $region88: #{tpu_custom_call.1} parent=47 // pred_fallthru
          _
      $region48: #{tpu_custom_call.1} parent=5 // pred_fallthru
        _
      %p1331 = scmp.le.s32.totalorder 2, %s26
      // Predicated region
      $region89: #{tpu_custom_call.1} parent=5 // pred_check
        %p1332 = pneg %p1331
      $region90: #{tpu_custom_call.1} parent=5 // pred_check_branch
        %1334 = sbr.rel (%p1332) target = $region92
      $region91: #{tpu_custom_call.1} parent=5 // pred_region
        %s1335 = ssub.s32 %s26, 2
        // Predicated region
        $region93: #{tpu_custom_call.1} parent=91 // pred_check
          %p1336 = pneg %p234
        $region94: #{tpu_custom_call.1} parent=91 // pred_check_branch
          %1338 = sbr.rel (%p1336) target = $region96
        $region95: #{tpu_custom_call.1} parent=91 // pred_region
          %s1339 = sand.u32 %s219, 1
          %s1340 = scalar_lea.sflag [#allocation4], %s1339
          %s1341 = sand.u32 %s219, 1
          %s1342 = smul.addr %s1341, 32
          %s1343 = scalar_lea.vmem [#allocation13], %s1342
          %1344 = dma.done %s1340, 512
        $region96: #{tpu_custom_call.1} parent=91 // pred_fallthru
          _
      $region92: #{tpu_custom_call.1} parent=5 // pred_fallthru
        _
    $region6: #{tpu_custom_call.1} parent=1 // loop_footer
      %s30 = sadd.s32 1, %s26
    $region7: #{tpu_custom_call.1} parent=1 // loop_footer_branch
      %25 = sbr.rel target = $region3
    $region8: #{tpu_custom_call.1} parent=1 // loop_exit
      _
    %1345 = vsyncpa [#allocation3], 1
    %s1346 = scalar_lea.sflag [#allocation3], 1
    %1347 = vsyncpa %s1346, 1
    %1348 = vsyncpa [#allocation6], 1
    %1349 = vsyncpa [#allocation9], 1
    %s1350 = scalar_lea.sflag [#allocation9], 1
    %1351 = vsyncpa %s1350, 1
    %1352 = vsyncpa [#allocation12], 1
    %s1353 = scalar_lea.sflag [#allocation12], 1
    %1354 = vsyncpa %s1353, 1
    %1355 = vsyncpa [#allocation4], 1
    %s1356 = scalar_lea.sflag [#allocation4], 1
    %1357 = vsyncpa %s1356, 1

// kernel: tpu_custom_call.1
$region0: #{tpu_custom_call.1}
  #allocation0 [shape = 'u32[]', space=smem, size = 0x4, offset = 0x4, fixed_abs, tag = 'smem constant byte address 0x4 - core index']
  #allocation1 [shape = 'u32[144,128]{1,0:T(1,128)}', space=vmem, size = 0x12000, scoped, tag = 'internal scratch']
  %s0 = inlined_call_operand.hbm [shape: f32[8,8,128], index: 0, kind: input, shape index: {}]
  %s1 = inlined_call_operand.hbm [shape: bf16[128,256], index: 1, kind: input, shape index: {}]
  %s2 = inlined_call_operand.hbm [shape: f32[8,16], index: 2, kind: input, shape index: {}]
  %s3 = inlined_call_operand.hbm [shape: f32[2,8,128], index: 3, kind: input, shape index: {}]
  %s4 = inlined_call_operand.vmem [shape: f32[2,128], index: 4, kind: input, shape index: {}]
  %s5 = inlined_call_operand.hbm [shape: bf16[2,128,128], index: 5, kind: input, shape index: {}]
  %s6 = inlined_call_operand.hbm [shape: bf16[2,128,128], index: 6, kind: input, shape index: {}]
  %s7 = inlined_call_operand.hbm [shape: f32[8,8,128], index: 7, kind: output, shape index: {}]
  %s8 = sld [smem:[#allocation0]]
  $region97: #{tpu_custom_call.1} parent=0
    _
  %s10 = ssub.s32 1, %s8
  %s11 = scalar_select 0, %s10, %s8
  $region1: #{tpu_custom_call.1} parent=0
    #allocation2 [shape = 'u8[32768]{0}', space=vmem, size = 0x8000, scoped, tag = 'input window, operand 0']
    #allocation3 [shape = 's32[2]{0}', space=sflag, size = 0x8, scoped, tag = 'scoped memory for tpu_custom_call.1']
    #allocation4 [shape = 's32[2]{0}', space=sflag, size = 0x8, scoped, tag = 'scoped memory for tpu_custom_call.1']
    #allocation5 [shape = 'u8[65536]{0}', space=vmem, size = 0x10000, scoped, tag = 'input window, operand 1, single buffered']
    #allocation6 [shape = 's32[1]{0}', space=sflag, size = 0x4, scoped, tag = 'scoped memory for tpu_custom_call.1']
    #allocation7 [shape = 'u8[4096]{0}', space=vmem, size = 0x1000, scoped, tag = 'input window, operand 2, single buffered']
    #allocation8 [shape = 'u8[8192]{0}', space=vmem, size = 0x2000, scoped, tag = 'input window, operand 3']
    #allocation9 [shape = 's32[2]{0}', space=sflag, size = 0x8, scoped, tag = 'scoped memory for tpu_custom_call.1']
    #allocation10 [shape = 'u8[65536]{0}', space=vmem, size = 0x10000, scoped, tag = 'input window, operand 5']
    #allocation11 [shape = 'u8[65536]{0}', space=vmem, size = 0x10000, scoped, tag = 'input window, operand 6']
    #allocation12 [shape = 's32[2]{0}', space=sflag, size = 0x8, scoped, tag = 'scoped memory for tpu_custom_call.1']
    #allocation13 [shape = 'u8[32768]{0}', space=vmem, size = 0x8000, scoped, tag = 'output window, operand 0']
    %12 = vsyncpa [#allocation3], 0
    %s13 = scalar_lea.sflag [#allocation3], 1
    %14 = vsyncpa %s13, 0
    %15 = vsyncpa [#allocation6], 0
    %16 = vsyncpa [#allocation9], 0
    %s17 = scalar_lea.sflag [#allocation9], 1
    %18 = vsyncpa %s17, 0
    %19 = vsyncpa [#allocation12], 0
    %s20 = scalar_lea.sflag [#allocation12], 1
    %21 = vsyncpa %s20, 0
    %22 = vsyncpa [#allocation4], 0
    %s23 = scalar_lea.sflag [#allocation4], 1
    %24 = vsyncpa %s23, 0
    loop: start=0, step=1, limit=6
    $region2: #{tpu_custom_call.1} parent=1 // loop_pre_header
      _
    $region3: #{tpu_custom_call.1} parent=1 // loop_header
      %s26 = sphi 0, %s30
      %p27 = scmp.ge.s32.totalorder %s26, 6
      %s33 = sphi 0, %s45
      %s34 = sphi 0, %s41
      %s35 = sphi 0, %s33
      %s36 = sphi 0, %s34
      %s37 = sphi 0, %s35
      %s38 = sphi 0, %s36
      %s48 = sphi 0, %s50
      %s51 = sphi 0, %s48
      %s52 = sphi 0, %s51
      %s68 = sphi 0, %s52
      %s72 = sphi 0, %s72
      %s74 = sphi 0, %s72
      %s75 = sphi 0, %s74
      %s89 = sphi 0, %s75
      %s93 = sphi 0, %s93
      %s95 = sphi 0, %s93
      %s96 = sphi 0, %s95
      %s110 = sphi 0, %s96
      %s116 = sphi 0, %s118
      %s119 = sphi 0, %s116
      %s120 = sphi 0, %s119
      %s136 = sphi 0, %s120
      %s140 = sphi 0, %s140
      %s142 = sphi 0, %s140
      %s143 = sphi 0, %s142
      %s157 = sphi 0, %s143
      %s163 = sphi 0, %s165
      %s166 = sphi 0, %s163
      %s167 = sphi 0, %s166
      %s183 = sphi 0, %s167
      %s189 = sphi 0, %s191
      %s192 = sphi 0, %s189
      %s193 = sphi 0, %s192
      %s209 = sphi 0, %s193
      %s215 = sphi 0, %s217
      %s218 = sphi 0, %s215
      %s219 = sphi 0, %s218
      %s235 = sphi 0, %s219
    $region4: #{tpu_custom_call.1} parent=1 // loop_header_branch
      %29 = sbr.rel (%p27) target = $region8
    $region5: #{tpu_custom_call.1} parent=1 // loop_body
      %s31 = ssub.s32 %s26, 1
      %s32 = ssub.s32 %s26, 2
      %s39 = sadd.s32 1, %s34
      %p40 = scmp.ge.s32.totalorder %s39, 2
      %s41 = scalar_select %p40, 0, %s39
      %s42 = sadd.s32 1, %s33
      %s43 = scalar_select %p40, %s42, %s33
      %p44 = scmp.ge.s32.totalorder %s43, 2
      %s45 = scalar_select %p44, 0, %s43
      %s46 = ssub.s32 %s33, %s45
      %p47 = scmp.eq.s32.totalorder %s46, 0
      %s49 = sadd.s32 %s48, 1
      %s50 = scalar_select %p47, %s48, %s49
      %p53 = pneg %p47
      %p54 = scmp.eq.s32.totalorder %s26, 3
      %p55 = por %p53, %p54
      %p56 = scmp.ne.s32.totalorder %s48, %s51
      %p57 = scmp.eq.s32.totalorder %s26, 0
      %p58 = por %p56, %p57
      %p59 = scmp.ne.s32.totalorder %s48, %s51
      %p60 = scmp.eq.s32.totalorder %s31, 3
      %p61 = por %p59, %p60
      %p62 = scmp.ne.s32.totalorder %s51, %s52
      %p63 = scmp.eq.s32.totalorder %s31, 0
      %p64 = por %p62, %p63
      %p65 = scmp.ne.s32.totalorder %s51, %s52
      %p66 = scmp.eq.s32.totalorder %s32, 3
      %p67 = por %p65, %p66
      %p69 = scmp.ne.s32.totalorder %s52, %s68
      %p70 = scmp.eq.s32.totalorder %s32, 0
      %p71 = por %p69, %p70
      %s73 = sadd.s32 %s72, 1
      %p76 = scmp.eq.s32.totalorder %s26, 3
      %p77 = scmp.ne.s32.totalorder %s72, %s74
      %p78 = scmp.eq.s32.totalorder %s26, 0
      %p79 = por %p77, %p78
      %p80 = scmp.ne.s32.totalorder %s72, %s74
      %p81 = scmp.eq.s32.totalorder %s31, 3
      %p82 = por %p80, %p81
      %p83 = scmp.ne.s32.totalorder %s74, %s75
      %p84 = scmp.eq.s32.totalorder %s31, 0
      %p85 = por %p83, %p84
      %p86 = scmp.ne.s32.totalorder %s74, %s75
      %p87 = scmp.eq.s32.totalorder %s32, 3
      %p88 = por %p86, %p87
      %p90 = scmp.ne.s32.totalorder %s75, %s89
      %p91 = scmp.eq.s32.totalorder %s32, 0
      %p92 = por %p90, %p91
      %s94 = sadd.s32 %s93, 1
      %p97 = scmp.eq.s32.totalorder %s26, 3
      %p98 = scmp.ne.s32.totalorder %s93, %s95
      %p99 = scmp.eq.s32.totalorder %s26, 0
      %p100 = por %p98, %p99
      %p101 = scmp.ne.s32.totalorder %s93, %s95
      %p102 = scmp.eq.s32.totalorder %s31, 3
      %p103 = por %p101, %p102
      %p104 = scmp.ne.s32.totalorder %s95, %s96
      %p105 = scmp.eq.s32.totalorder %s31, 0
      %p106 = por %p104, %p105
      %p107 = scmp.ne.s32.totalorder %s95, %s96
      %p108 = scmp.eq.s32.totalorder %s32, 3
      %p109 = por %p107, %p108
      %p111 = scmp.ne.s32.totalorder %s96, %s110
      %p112 = scmp.eq.s32.totalorder %s32, 0
      %p113 = por %p111, %p112
      %s114 = ssub.s32 %s34, %s41
      %p115 = scmp.eq.s32.totalorder %s114, 0
      %s117 = sadd.s32 %s116, 1
      %s118 = scalar_select %p115, %s116, %s117
      %p121 = pneg %p115
      %p122 = scmp.eq.s32.totalorder %s26, 3
      %p123 = por %p121, %p122
      %p124 = scmp.ne.s32.totalorder %s116, %s119
      %p125 = scmp.eq.s32.totalorder %s26, 0
      %p126 = por %p124, %p125
      %p127 = scmp.ne.s32.totalorder %s116, %s119
      %p128 = scmp.eq.s32.totalorder %s31, 3
      %p129 = por %p127, %p128
      %p130 = scmp.ne.s32.totalorder %s119, %s120
      %p131 = scmp.eq.s32.totalorder %s31, 0
      %p132 = por %p130, %p131
      %p133 = scmp.ne.s32.totalorder %s119, %s120
      %p134 = scmp.eq.s32.totalorder %s32, 3
      %p135 = por %p133, %p134
      %p137 = scmp.ne.s32.totalorder %s120, %s136
      %p138 = scmp.eq.s32.totalorder %s32, 0
      %p139 = por %p137, %p138
      %s141 = sadd.s32 %s140, 1
      %p144 = scmp.eq.s32.totalorder %s26, 3
      %p145 = scmp.ne.s32.totalorder %s140, %s142
      %p146 = scmp.eq.s32.totalorder %s26, 0
      %p147 = por %p145, %p146
      %p148 = scmp.ne.s32.totalorder %s140, %s142
      %p149 = scmp.eq.s32.totalorder %s31, 3
      %p150 = por %p148, %p149
      %p151 = scmp.ne.s32.totalorder %s142, %s143
      %p152 = scmp.eq.s32.totalorder %s31, 0
      %p153 = por %p151, %p152
      %p154 = scmp.ne.s32.totalorder %s142, %s143
      %p155 = scmp.eq.s32.totalorder %s32, 3
      %p156 = por %p154, %p155
      %p158 = scmp.ne.s32.totalorder %s143, %s157
      %p159 = scmp.eq.s32.totalorder %s32, 0
      %p160 = por %p158, %p159
      %s161 = ssub.s32 %s34, %s41
      %p162 = scmp.eq.s32.totalorder %s161, 0
      %s164 = sadd.s32 %s163, 1
      %s165 = scalar_select %p162, %s163, %s164
      %p168 = pneg %p162
      %p169 = scmp.eq.s32.totalorder %s26, 3
      %p170 = por %p168, %p169
      %p171 = scmp.ne.s32.totalorder %s163, %s166
      %p172 = scmp.eq.s32.totalorder %s26, 0
      %p173 = por %p171, %p172
      %p174 = scmp.ne.s32.totalorder %s163, %s166
      %p175 = scmp.eq.s32.totalorder %s31, 3
      %p176 = por %p174, %p175
      %p177 = scmp.ne.s32.totalorder %s166, %s167
      %p178 = scmp.eq.s32.totalorder %s31, 0
      %p179 = por %p177, %p178
      %p180 = scmp.ne.s32.totalorder %s166, %s167
      %p181 = scmp.eq.s32.totalorder %s32, 3
      %p182 = por %p180, %p181
      %p184 = scmp.ne.s32.totalorder %s167, %s183
      %p185 = scmp.eq.s32.totalorder %s32, 0
      %p186 = por %p184, %p185
      %s187 = ssub.s32 %s34, %s41
      %p188 = scmp.eq.s32.totalorder %s187, 0
      %s190 = sadd.s32 %s189, 1
      %s191 = scalar_select %p188, %s189, %s190
      %p194 = pneg %p188
      %p195 = scmp.eq.s32.totalorder %s26, 3
      %p196 = por %p194, %p195
      %p197 = scmp.ne.s32.totalorder %s189, %s192
      %p198 = scmp.eq.s32.totalorder %s26, 0
      %p199 = por %p197, %p198
      %p200 = scmp.ne.s32.totalorder %s189, %s192
      %p201 = scmp.eq.s32.totalorder %s31, 3
      %p202 = por %p200, %p201
      %p203 = scmp.ne.s32.totalorder %s192, %s193
      %p204 = scmp.eq.s32.totalorder %s31, 0
      %p205 = por %p203, %p204
      %p206 = scmp.ne.s32.totalorder %s192, %s193
      %p207 = scmp.eq.s32.totalorder %s32, 3
      %p208 = por %p206, %p207
      %p210 = scmp.ne.s32.totalorder %s193, %s209
      %p211 = scmp.eq.s32.totalorder %s32, 0
      %p212 = por %p210, %p211
      %s213 = ssub.s32 %s33, %s45
      %p214 = scmp.eq.s32.totalorder %s213, 0
      %s216 = sadd.s32 %s215, 1
      %s217 = scalar_select %p214, %s215, %s216
      %p220 = pneg %p214
      %p221 = scmp.eq.s32.totalorder %s26, 3
      %p222 = por %p220, %p221
      %p223 = scmp.ne.s32.totalorder %s215, %s218
      %p224 = scmp.eq.s32.totalorder %s26, 0
      %p225 = por %p223, %p224
      %p226 = scmp.ne.s32.totalorder %s215, %s218
      %p227 = scmp.eq.s32.totalorder %s31, 3
      %p228 = por %p226, %p227
      %p229 = scmp.ne.s32.totalorder %s218, %s219
      %p230 = scmp.eq.s32.totalorder %s31, 0
      %p231 = por %p229, %p230
      %p232 = scmp.ne.s32.totalorder %s218, %s219
      %p233 = scmp.eq.s32.totalorder %s32, 3
      %p234 = por %p232, %p233
      %p236 = scmp.ne.s32.totalorder %s219, %s235
      %p237 = scmp.eq.s32.totalorder %s32, 0
      %p238 = por %p236, %p237
      %p239 = scmp.le.s32.totalorder 1, %s26
      %p240 = scmp.lt.s32.totalorder %s26, 5
      %p241 = pnand %p239, %p240
      %p242 = pneg %p241
      // Predicated region
      $region9: #{tpu_custom_call.1} parent=5 // pred_check
        _
      $region10: #{tpu_custom_call.1} parent=5 // pred_check_branch
        %244 = sbr.rel (%p241) target = $region12
      $region11: #{tpu_custom_call.1} parent=5 // pred_region
        %s245 = ssub.s32 %s26, 1
        // Predicated region
        $region13: #{tpu_custom_call.1} parent=11 // pred_check
          %p246 = pneg %p85
        $region14: #{tpu_custom_call.1} parent=11 // pred_check_branch
          %248 = sbr.rel (%p246) target = $region16
        $region15: #{tpu_custom_call.1} parent=11 // pred_region
          %s250 = ssub.s32 2048, 2048
          %251 = vsyncadd [#allocation6], %s250
          %s252 = sshll.u32 [#allocation5], 4
          %s253 = int_to_ptr.vmem [resolvable:$true] %s252
          %258 = dma.hbm_to_vmem [thread:$0]  %s1, 2048, %s253, [#allocation6], 128, 128, 8
        $region16: #{tpu_custom_call.1} parent=11 // pred_fallthru
          _
        // Predicated region
        $region17: #{tpu_custom_call.1} parent=11 // pred_check
          %p259 = pneg %p106
        $region18: #{tpu_custom_call.1} parent=11 // pred_check_branch
          %261 = sbr.rel (%p259) target = $region20
        $region19: #{tpu_custom_call.1} parent=11 // pred_region
          %s263 = ssub.s32 128, 128
          %264 = vsyncadd [#allocation6], %s263
          %s266 = sshll.u32 [#allocation7], 4
          %s267 = int_to_ptr.vmem [resolvable:$true] %s266
          %269 = dma.hbm_to_vmem [thread:$0]  %s2, 128, %s267, [#allocation6]
        $region20: #{tpu_custom_call.1} parent=11 // pred_fallthru
          _
        // Predicated region
        $region21: #{tpu_custom_call.1} parent=11 // pred_check
          %p270 = pneg %p153
        $region22: #{tpu_custom_call.1} parent=11 // pred_check_branch
          %272 = sbr.rel (%p270) target = $region24
        $region23: #{tpu_custom_call.1} parent=11 // pred_region
          _
        $region24: #{tpu_custom_call.1} parent=11 // pred_fallthru
          _
      $region12: #{tpu_custom_call.1} parent=5 // pred_fallthru
        _
      %p273 = scmp.lt.s32.totalorder %s26, 4
      // Predicated region
      $region25: #{tpu_custom_call.1} parent=5 // pred_check
        %p274 = pneg %p273
      $region26: #{tpu_custom_call.1} parent=5 // pred_check_branch
        %276 = sbr.rel (%p274) target = $region28
      $region27: #{tpu_custom_call.1} parent=5 // pred_region
        // Predicated region
        $region29: #{tpu_custom_call.1} parent=27 // pred_check
          %p277 = pneg %p58
        $region30: #{tpu_custom_call.1} parent=27 // pred_check_branch
          %279 = sbr.rel (%p277) target = $region32
        $region31: #{tpu_custom_call.1} parent=27 // pred_region
          %s280 = sand.u32 %s48, 1
          %s281 = scalar_lea.sflag [#allocation3], %s280
          %s282 = sand.u32 %s48, 1
          %s283 = smul.addr %s282, 32
          %s284 = scalar_lea.vmem [#allocation2], %s283
          %s285 = smul.u32 4, %s33
          %s287 = ssub.s32 512, 512
          %288 = vsyncadd %s281, %s287
          %s289 = smul.addr %s285, 128
          %s290 = scalar_lea.hbm %s0, %s289
          %s291 = sshll.u32 %s284, 4
          %s292 = int_to_ptr.vmem [resolvable:$true] %s291
          %297 = dma.hbm_to_vmem [thread:$0]  %s290, 512, %s292, %s281, 128, 128, 8
        $region32: #{tpu_custom_call.1} parent=27 // pred_fallthru
          _
        // Predicated region
        $region33: #{tpu_custom_call.1} parent=27 // pred_check
          %p298 = pneg %p126
        $region34: #{tpu_custom_call.1} parent=27 // pred_check_branch
          %300 = sbr.rel (%p298) target = $region36
        $region35: #{tpu_custom_call.1} parent=27 // pred_region
          %s301 = sand.u32 %s26, 1
          %s302 = scalar_lea.sflag [#allocation9], %s301
          %s303 = sand.u32 %s116, 1
          %s304 = smul.addr %s303, 8
          %s305 = scalar_lea.vmem [#allocation8], %s304
          %s307 = ssub.s32 128, 128
          %308 = vsyncadd %s302, %s307
          %s309 = smul.addr %s34, 128
          %s310 = scalar_lea.hbm %s3, %s309
          %s312 = sshll.u32 %s305, 4
          %s313 = int_to_ptr.vmem [resolvable:$true] %s312
          %315 = dma.hbm_to_vmem [thread:$0]  %s310, 128, %s313, %s302
        $region36: #{tpu_custom_call.1} parent=27 // pred_fallthru
          _
        // Predicated region
        $region37: #{tpu_custom_call.1} parent=27 // pred_check
          %p316 = pneg %p173
        $region38: #{tpu_custom_call.1} parent=27 // pred_check_branch
          %318 = sbr.rel (%p316) target = $region40
        $region39: #{tpu_custom_call.1} parent=27 // pred_region
          %s319 = sand.u32 %s26, 1
          %s320 = scalar_lea.sflag [#allocation9], %s319
          %s321 = sand.u32 %s163, 1
          %s322 = smul.addr %s321, 64
          %s323 = scalar_lea.vmem [#allocation10], %s322
          %s325 = ssub.s32 1024, 1024
          %326 = vsyncadd %s320, %s325
          %s327 = smul.addr %s34, 16
          %s328 = smul.addr %s327, 64
          %s329 = scalar_lea.hbm %s5, %s328
          %s330 = sshll.u32 %s323, 4
          %s331 = int_to_ptr.vmem [resolvable:$true] %s330
          %336 = dma.hbm_to_vmem [thread:$0]  %s329, 1024, %s331, %s320, 64, 64, 4
        $region40: #{tpu_custom_call.1} parent=27 // pred_fallthru
          _
        // Predicated region
        $region41: #{tpu_custom_call.1} parent=27 // pred_check
          %p337 = pneg %p199
        $region42: #{tpu_custom_call.1} parent=27 // pred_check_branch
          %339 = sbr.rel (%p337) target = $region44
        $region43: #{tpu_custom_call.1} parent=27 // pred_region
          %s340 = sand.u32 %s189, 1
          %s341 = scalar_lea.sflag [#allocation12], %s340
          %s342 = sand.u32 %s189, 1
          %s343 = smul.addr %s342, 64
          %s344 = scalar_lea.vmem [#allocation11], %s343
          %s346 = ssub.s32 1024, 1024
          %347 = vsyncadd %s341, %s346
          %s348 = smul.addr %s34, 16
          %s349 = smul.addr %s348, 64
          %s350 = scalar_lea.hbm %s6, %s349
          %s351 = sshll.u32 %s344, 4
          %s352 = int_to_ptr.vmem [resolvable:$true] %s351
          %357 = dma.hbm_to_vmem [thread:$0]  %s350, 1024, %s352, %s341, 64, 64, 4
        $region44: #{tpu_custom_call.1} parent=27 // pred_fallthru
          _
      $region28: #{tpu_custom_call.1} parent=5 // pred_fallthru
        _
      %p358 = scmp.le.s32.totalorder 1, %s26
      %p359 = scmp.lt.s32.totalorder %s26, 5
      %p360 = pnand %p358, %p359
      %p361 = pneg %p360
      // Predicated region
      $region45: #{tpu_custom_call.1} parent=5 // pred_check
        _
      $region46: #{tpu_custom_call.1} parent=5 // pred_check_branch
        %363 = sbr.rel (%p360) target = $region48
      $region47: #{tpu_custom_call.1} parent=5 // pred_region
        %s364 = ssub.s32 %s26, 1
        %s365 = sand.u32 %s51, 1
        %s366 = scalar_lea.sflag [#allocation3], %s365
        %s367 = sand.u32 %s51, 1
        %s368 = smul.addr %s367, 32
        %s369 = scalar_lea.vmem [#allocation2], %s368
        // Predicated region
        $region49: #{tpu_custom_call.1} parent=47 // pred_check
          %p370 = pneg %p64
        $region50: #{tpu_custom_call.1} parent=47 // pred_check_branch
          %372 = sbr.rel (%p370) target = $region52
        $region51: #{tpu_custom_call.1} parent=47 // pred_region
          %373 = dma.done %s366, 512
        $region52: #{tpu_custom_call.1} parent=47 // pred_fallthru
          _
        // Predicated region
        $region53: #{tpu_custom_call.1} parent=47 // pred_check
          %p374 = pneg %p85
        $region54: #{tpu_custom_call.1} parent=47 // pred_check_branch
          %376 = sbr.rel (%p374) target = $region56
        $region55: #{tpu_custom_call.1} parent=47 // pred_region
          %377 = dma.done [#allocation6], 2048
        $region56: #{tpu_custom_call.1} parent=47 // pred_fallthru
          _
        // Predicated region
        $region57: #{tpu_custom_call.1} parent=47 // pred_check
          %p378 = pneg %p106
        $region58: #{tpu_custom_call.1} parent=47 // pred_check_branch
          %380 = sbr.rel (%p378) target = $region60
        $region59: #{tpu_custom_call.1} parent=47 // pred_region
          %381 = dma.done [#allocation6], 128
        $region60: #{tpu_custom_call.1} parent=47 // pred_fallthru
          _
        %s382 = sand.u32 %s31, 1
        %s383 = scalar_lea.sflag [#allocation9], %s382
        %s384 = sand.u32 %s119, 1
        %s385 = smul.addr %s384, 8
        %s386 = scalar_lea.vmem [#allocation8], %s385
        // Predicated region
        $region61: #{tpu_custom_call.1} parent=47 // pred_check
          %p387 = pneg %p132
        $region62: #{tpu_custom_call.1} parent=47 // pred_check_branch
          %389 = sbr.rel (%p387) target = $region64
        $region63: #{tpu_custom_call.1} parent=47 // pred_region
          %390 = dma.done %s383, 128
        $region64: #{tpu_custom_call.1} parent=47 // pred_fallthru
          _
        %s391 = sand.u32 %s31, 1
        %s392 = scalar_lea.sflag [#allocation9], %s391
        %s393 = sand.u32 %s166, 1
        %s394 = smul.addr %s393, 64
        %s395 = scalar_lea.vmem [#allocation10], %s394
        // Predicated region
        $region65: #{tpu_custom_call.1} parent=47 // pred_check
          %p396 = pneg %p179
        $region66: #{tpu_custom_call.1} parent=47 // pred_check_branch
          %398 = sbr.rel (%p396) target = $region68
        $region67: #{tpu_custom_call.1} parent=47 // pred_region
          %399 = dma.done %s392, 1024
        $region68: #{tpu_custom_call.1} parent=47 // pred_fallthru
          _
        %s400 = sand.u32 %s192, 1
        %s401 = scalar_lea.sflag [#allocation12], %s400
        %s402 = sand.u32 %s192, 1
        %s403 = smul.addr %s402, 64
        %s404 = scalar_lea.vmem [#allocation11], %s403
        // Predicated region
        $region69: #{tpu_custom_call.1} parent=47 // pred_check
          %p405 = pneg %p205
        $region70: #{tpu_custom_call.1} parent=47 // pred_check_branch
          %407 = sbr.rel (%p405) target = $region72
        $region71: #{tpu_custom_call.1} parent=47 // pred_region
          %408 = dma.done %s401, 1024
        $region72: #{tpu_custom_call.1} parent=47 // pred_fallthru
          _
        %s409 = sand.u32 %s51, 1
        %s410 = scalar_lea.sflag [#allocation3], %s409
        %s411 = sand.u32 %s51, 1
        %s412 = smul.addr %s411, 32
        %s413 = scalar_lea.vmem [#allocation2], %s412
        %p414 = pneg %p64
        %p415 = pneg %p61
        %p416 = pneg %p85
        %p417 = pneg %p82
        %p418 = pneg %p106
        %p419 = pneg %p103
        %s420 = sand.u32 %s31, 1
        %s421 = scalar_lea.sflag [#allocation9], %s420
        %s422 = sand.u32 %s119, 1
        %s423 = smul.addr %s422, 8
        %s424 = scalar_lea.vmem [#allocation8], %s423
        %p425 = pneg %p132
        %p426 = pneg %p129
        %p427 = pneg %p153
        %p428 = pneg %p150
        %s429 = sand.u32 %s31, 1
        %s430 = scalar_lea.sflag [#allocation9], %s429
        %s431 = sand.u32 %s166, 1
        %s432 = smul.addr %s431, 64
        %s433 = scalar_lea.vmem [#allocation10], %s432
        %p434 = pneg %p179
        %p435 = pneg %p176
        %s436 = sand.u32 %s192, 1
        %s437 = scalar_lea.sflag [#allocation12], %s436
        %s438 = sand.u32 %s192, 1
        %s439 = smul.addr %s438, 64
        %s440 = scalar_lea.vmem [#allocation11], %s439
        %p441 = pneg %p205
        %p442 = pneg %p202
        %p443 = pneg %p231
        %p444 = pneg %p228
        %s445 = sand.u32 %s218, 1
        %s446 = scalar_lea.sflag [#allocation4], %s445
        %s447 = sand.u32 %s218, 1
        %s448 = smul.addr %s447, 32
        %s449 = scalar_lea.vmem [#allocation13], %s448
        %s450 = smul.u32 4, %s35
        %s451 = smul.u32 4, %s35
        %p453 = scmp.eq.s32.totalorder %s36, 0
        // Predicated region
        $region73: #{tpu_custom_call.1} parent=47 // pred_check
          %p454 = pneg %p453
        $region74: #{tpu_custom_call.1} parent=47 // pred_check_branch
          %456 = sbr.rel (%p454) target = $region76
        $region75: #{tpu_custom_call.1} parent=47 // pred_region
          %v457 = vld [vmem:[%s369] sm:$0xff]
          %v458 = vld [vmem:[%s369 + $0x8] sm:$0xff]
          %v459 = vld [vmem:[%s369 + $0x10] sm:$0xff]
          %v460 = vld [vmem:[%s369 + $0x18] sm:$0xff]
          %461 = vst [vmem:[%s449] sm:$0xff] %v457
          %462 = vst [vmem:[%s449 + $0x8] sm:$0xff] %v458
          %463 = vst [vmem:[%s449 + $0x10] sm:$0xff] %v459
          %464 = vst [vmem:[%s449 + $0x18] sm:$0xff] %v460
        $region76: #{tpu_custom_call.1} parent=47 // pred_fallthru
          _
        %v465 = vld [vmem:[%s449] sm:$0xff]
        %v466 = vld [vmem:[%s449 + $0x8] sm:$0xff]
        %v467 = vld [vmem:[%s449 + $0x10] sm:$0xff]
        %v468 = vld [vmem:[%s449 + $0x18] sm:$0xff]
        %v469 = vld [vmem:[%s386] sm:$0xff]
        %v470 = vpack.c.bf16 %v466, %v465
        %v471 = vpack.c.bf16 %v468, %v467
        %v472 = vld [vmem:[#allocation5] sm:$0xff]
        %v473 = vld [vmem:[#allocation5 + $0x8] sm:$0xff]
        %v474 = vld [vmem:[#allocation5 + $0x10] sm:$0xff]
        %v475 = vld [vmem:[#allocation5 + $0x18] sm:$0xff]
        %v476 = vld [vmem:[#allocation5 + $0x20] sm:$0xff]
        %v477 = vld [vmem:[#allocation5 + $0x28] sm:$0xff]
        %v478 = vld [vmem:[#allocation5 + $0x30] sm:$0xff]
        %v479 = vld [vmem:[#allocation5 + $0x38] sm:$0xff]
        %v480 = vld [vmem:[#allocation5 + $0x40] sm:$0xff]
        %v481 = vld [vmem:[#allocation5 + $0x48] sm:$0xff]
        %v482 = vld [vmem:[#allocation5 + $0x50] sm:$0xff]
        %v483 = vld [vmem:[#allocation5 + $0x58] sm:$0xff]
        %v484 = vld [vmem:[#allocation5 + $0x60] sm:$0xff]
        %v485 = vld [vmem:[#allocation5 + $0x68] sm:$0xff]
        %v486 = vld [vmem:[#allocation5 + $0x70] sm:$0xff]
        %v487 = vld [vmem:[#allocation5 + $0x78] sm:$0xff]
        %v504 = vunpack.c.l.b16 %v472
        %v505 = vunpack.c.h.b16 %v472
        %v506 = vunpack.c.l.b16 %v473
        %v507 = vunpack.c.h.b16 %v473
        %v508 = vunpack.c.l.b16 %v474
        %v509 = vunpack.c.h.b16 %v474
        %v510 = vunpack.c.l.b16 %v475
        %v511 = vunpack.c.h.b16 %v475
        %v512 = vunpack.c.l.b16 %v476
        %v513 = vunpack.c.h.b16 %v476
        %v514 = vunpack.c.l.b16 %v477
        %v515 = vunpack.c.h.b16 %v477
        %v516 = vunpack.c.l.b16 %v478
        %v517 = vunpack.c.h.b16 %v478
        %v518 = vunpack.c.l.b16 %v479
        %v519 = vunpack.c.h.b16 %v479
        %v520 = vunpack.c.l.b16 %v480
        %v521 = vunpack.c.h.b16 %v480
        %v522 = vunpack.c.l.b16 %v481
        %v523 = vunpack.c.h.b16 %v481
        %v524 = vunpack.c.l.b16 %v482
        %v525 = vunpack.c.h.b16 %v482
        %v526 = vunpack.c.l.b16 %v483
        %v527 = vunpack.c.h.b16 %v483
        %v528 = vunpack.c.l.b16 %v484
        %v529 = vunpack.c.h.b16 %v484
        %v530 = vunpack.c.l.b16 %v485
        %v531 = vunpack.c.h.b16 %v485
        %v532 = vunpack.c.l.b16 %v486
        %v533 = vunpack.c.h.b16 %v486
        %v534 = vunpack.c.l.b16 %v487
        %v535 = vunpack.c.h.b16 %v487
        %v536 = vpack.c.b16 %v506, %v504
        %v537 = vpack.c.b16 %v507, %v505
        %v538 = vpack.c.b16 %v510, %v508
        %v539 = vpack.c.b16 %v511, %v509
        %v540 = vpack.c.b16 %v514, %v512
        %v541 = vpack.c.b16 %v515, %v513
        %v542 = vpack.c.b16 %v518, %v516
        %v543 = vpack.c.b16 %v519, %v517
        %v544 = vpack.c.b16 %v522, %v520
        %v545 = vpack.c.b16 %v523, %v521
        %v546 = vpack.c.b16 %v526, %v524
        %v547 = vpack.c.b16 %v527, %v525
        %v548 = vpack.c.b16 %v530, %v528
        %v549 = vpack.c.b16 %v531, %v529
        %v550 = vpack.c.b16 %v534, %v532
        %v551 = vpack.c.b16 %v535, %v533
        %568 = vmatprep.subr.bf16.mxu0 %v551
        %569 = vmatpush1.bf16.msra.mxu0 %v550
        %570 = vmatprep.subr.bf16.mxu0 %v549
        %571 = vmatpush1.bf16.msra.mxu0 %v548
        %572 = vmatprep.subr.bf16.mxu0 %v547
        %573 = vmatpush1.bf16.msra.mxu0 %v546
        %574 = vmatprep.subr.bf16.mxu0 %v545
        %575 = vmatpush1.bf16.msra.mxu0 %v544
        %576 = vmatprep.subr.bf16.mxu0 %v543
        %577 = vmatpush1.bf16.msra.mxu0 %v542
        %578 = vmatprep.subr.bf16.mxu0 %v541
        %579 = vmatpush1.bf16.msra.mxu0 %v540
        %580 = vmatprep.subr.bf16.mxu0 %v539
        %581 = vmatpush1.bf16.msra.mxu0 %v538
        %582 = vmatprep.subr.bf16.mxu0 %v537
        %583 = vmatpush1.bf16.msra.mxu0 %v536
        %584 = vmatprep.subr.bf16.mxu0 0
        %585 = vmatpush2.bf16.msra.mxu0 0
        %586 = vmatprep.subr.bf16.mxu0 0
        %587 = vmatpush2.bf16.msra.mxu0 0
        %588 = vmatprep.subr.bf16.mxu0 0
        %589 = vmatpush2.bf16.msra.mxu0 0
        %590 = vmatprep.subr.bf16.mxu0 0
        %591 = vmatpush2.bf16.msra.mxu0 0
        %592 = vmatprep.subr.bf16.mxu0 0
        %593 = vmatpush2.bf16.msra.mxu0 0
        %594 = vmatprep.subr.bf16.mxu0 0
        %595 = vmatpush2.bf16.msra.mxu0 0
        %596 = vmatprep.subr.bf16.mxu0 0
        %597 = vmatpush2.bf16.msra.mxu0 0
        %598 = vmatprep.subr.bf16.mxu0 0
        %599 = vmatpush2.bf16.msra.mxu0 0
        %600 = vmatprep.mubr.bf16.mxu0 0
        %601 = vmatmul.mubr.bf16.gmra.mxu0 %v470
        %v602 = vpop.f32.mrf.mxu0
        %v603 = vadd.f32 0.0, %v602
        %v604 = vpop.f32.mrf.mxu0
        %v605 = vadd.f32 0.0, %v604
        %v606 = vpop.f32.mrf.mxu0
        %v607 = vadd.f32 0.0, %v606
        %v608 = vpop.f32.mrf.mxu0
        %v609 = vadd.f32 0.0, %v608
        %610 = vmatprep.mubr.bf16.mxu0 0
        %611 = vmatmul.mubr.bf16.gmra.mxu0 %v471
        %v612 = vpop.f32.mrf.mxu0
        %v613 = vadd.f32 0.0, %v612
        %v614 = vpop.f32.mrf.mxu0
        %v615 = vadd.f32 0.0, %v614
        %v616 = vpop.f32.mrf.mxu0
        %v617 = vadd.f32 0.0, %v616
        %v618 = vpop.f32.mrf.mxu0
        %v619 = vadd.f32 0.0, %v618
        %620 = vdwg.mxu0
        %v621 = vld [vmem:[#allocation7] sm:$0xff]
        %623 = vset.pattern.permute.xlu0 0
        %624 = vperm.xlu0 %623, %v621
        %v625 = vpop.permute.xlu0 %624
        %v627 = vlaneseq
        %v628 = vshrl.u32 %v627, 7
        %v629 = vsub.s32 0, %v628
        %v630 = vrot.slane %v603, %v629
        %v631 = vlaneseq
        %v632 = vshrl.u32 %v631, 7
        %v633 = vsub.s32 0, %v632
        %v634 = vrot.slane %v607, %v633
        %v635 = vlaneseq
        %v636 = vshrl.u32 %v635, 7
        %v637 = vsub.s32 0, %v636
        %v638 = vrot.slane %v613, %v637
        %v639 = vlaneseq
        %v640 = vshrl.u32 %v639, 7
        %v641 = vsub.s32 0, %v640
        %v642 = vrot.slane %v617, %v641
        %v643 = vmul.f32 %v625, %v630
        %v644 = vmul.f32 %v625, %v634
        %v645 = vmul.f32 %v625, %v638
        %v646 = vmul.f32 %v625, %v642
        %v647 = vadd.f32 %v643, 0.0
        %v648 = vadd.f32 %v644, 0.0
        %v649 = vadd.f32 %v645, 0.0
        %v650 = vadd.f32 %v646, 0.0
        %651 = vset.pattern.permute.xlu0 8
        %652 = vperm.xlu0 %651, %v621
        %v653 = vpop.permute.xlu0 %652
        %v655 = vlaneseq
        %v656 = vshrl.u32 %v655, 7
        %v657 = vsub.s32 0, %v656
        %v658 = vrot.slane %v605, %v657
        %v659 = vlaneseq
        %v660 = vshrl.u32 %v659, 7
        %v661 = vsub.s32 0, %v660
        %v662 = vrot.slane %v609, %v661
        %v663 = vlaneseq
        %v664 = vshrl.u32 %v663, 7
        %v665 = vsub.s32 0, %v664
        %v666 = vrot.slane %v615, %v665
        %v667 = vlaneseq
        %v668 = vshrl.u32 %v667, 7
        %v669 = vsub.s32 0, %v668
        %v670 = vrot.slane %v619, %v669
        %v671 = vmul.f32 %v653, %v658
        %v672 = vmul.f32 %v653, %v662
        %v673 = vmul.f32 %v653, %v666
        %v674 = vmul.f32 %v653, %v670
        %v675 = vadd.f32 %v647, %v671
        %v676 = vadd.f32 %v648, %v672
        %v677 = vadd.f32 %v649, %v673
        %v678 = vadd.f32 %v650, %v674
        %679 = vset.pattern.permute.xlu0 1
        %680 = vperm.xlu0 %679, %v621
        %v681 = vpop.permute.xlu0 %680
        %v683 = vlaneseq
        %v684 = vshrl.u32 %v683, 7
        %v685 = vsub.s32 1, %v684
        %v686 = vrot.slane %v603, %v685
        %v687 = vlaneseq
        %v688 = vshrl.u32 %v687, 7
        %v689 = vsub.s32 1, %v688
        %v690 = vrot.slane %v607, %v689
        %v691 = vlaneseq
        %v692 = vshrl.u32 %v691, 7
        %v693 = vsub.s32 1, %v692
        %v694 = vrot.slane %v613, %v693
        %v695 = vlaneseq
        %v696 = vshrl.u32 %v695, 7
        %v697 = vsub.s32 1, %v696
        %v698 = vrot.slane %v617, %v697
        %v699 = vmul.f32 %v681, %v686
        %v700 = vmul.f32 %v681, %v690
        %v701 = vmul.f32 %v681, %v694
        %v702 = vmul.f32 %v681, %v698
        %v703 = vadd.f32 %v675, %v699
        %v704 = vadd.f32 %v676, %v700
        %v705 = vadd.f32 %v677, %v701
        %v706 = vadd.f32 %v678, %v702
        %707 = vset.pattern.permute.xlu0 9
        %708 = vperm.xlu0 %707, %v621
        %v709 = vpop.permute.xlu0 %708
        %v711 = vlaneseq
        %v712 = vshrl.u32 %v711, 7
        %v713 = vsub.s32 1, %v712
        %v714 = vrot.slane %v605, %v713
        %v715 = vlaneseq
        %v716 = vshrl.u32 %v715, 7
        %v717 = vsub.s32 1, %v716
        %v718 = vrot.slane %v609, %v717
        %v719 = vlaneseq
        %v720 = vshrl.u32 %v719, 7
        %v721 = vsub.s32 1, %v720
        %v722 = vrot.slane %v615, %v721
        %v723 = vlaneseq
        %v724 = vshrl.u32 %v723, 7
        %v725 = vsub.s32 1, %v724
        %v726 = vrot.slane %v619, %v725
        %v727 = vmul.f32 %v709, %v714
        %v728 = vmul.f32 %v709, %v718
        %v729 = vmul.f32 %v709, %v722
        %v730 = vmul.f32 %v709, %v726
        %v731 = vadd.f32 %v703, %v727
        %v732 = vadd.f32 %v704, %v728
        %v733 = vadd.f32 %v705, %v729
        %v734 = vadd.f32 %v706, %v730
        %v735 = vadd.f32 %v465, %v731
        %v736 = vadd.f32 %v466, %v732
        %v737 = vadd.f32 %v467, %v733
        %v738 = vadd.f32 %v468, %v734
        %739 = vadd.xlane.f32.xlu0 %v735
        %v740 = vpop.xlane.xlu0 %739
        %741 = vadd.xlane.f32.xlu0 %v736
        %v742 = vpop.xlane.xlu0 %741
        %743 = vadd.xlane.f32.xlu0 %v737
        %v744 = vpop.xlane.xlu0 %743
        %745 = vadd.xlane.f32.xlu0 %v738
        %v746 = vpop.xlane.xlu0 %745
        %v747 = vmul.f32 %v740, 0.03125
        %v748 = vmul.f32 %v742, 0.03125
        %v749 = vmul.f32 %v744, 0.03125
        %v750 = vmul.f32 %v746, 0.03125
        %v751 = vsub.f32 %v735, %v747
        %v752 = vsub.f32 %v736, %v748
        %v753 = vsub.f32 %v737, %v749
        %v754 = vsub.f32 %v738, %v750
        %v755 = vmul.f32 %v751, %v751
        %v756 = vmul.f32 %v752, %v752
        %v757 = vmul.f32 %v753, %v753
        %v758 = vmul.f32 %v754, %v754
        %759 = vadd.xlane.f32.xlu0 %v755
        %v760 = vpop.xlane.xlu0 %759
        %761 = vadd.xlane.f32.xlu0 %v756
        %v762 = vpop.xlane.xlu0 %761
        %763 = vadd.xlane.f32.xlu0 %v757
        %v764 = vpop.xlane.xlu0 %763
        %765 = vadd.xlane.f32.xlu0 %v758
        %v766 = vpop.xlane.xlu0 %765
        %v767 = vmul.f32 %v747, 96.0
        %v768 = vmul.f32 %v748, 96.0
        %v769 = vmul.f32 %v749, 96.0
        %v770 = vmul.f32 %v750, 96.0
        %v771 = vmul.f32 %v767, %v747
        %v772 = vmul.f32 %v768, %v748
        %v773 = vmul.f32 %v769, %v749
        %v774 = vmul.f32 %v770, %v750
        %v775 = vsub.f32 %v760, %v771
        %v776 = vsub.f32 %v762, %v772
        %v777 = vsub.f32 %v764, %v773
        %v778 = vsub.f32 %v766, %v774
        %v779 = vmul.f32 %v775, 0.03125
        %v780 = vmul.f32 %v776, 0.03125
        %v781 = vmul.f32 %v777, 0.03125
        %v782 = vmul.f32 %v778, 0.03125
        %v783 = vmax.f32 %v779, 0.0
        %v784 = vmax.f32 %v780, 0.0
        %v785 = vmax.f32 %v781, 0.0
        %v786 = vmax.f32 %v782, 0.0
        %v787 = vadd.f32 %v783, 1e-05
        %v788 = vadd.f32 %v784, 1e-05
        %v789 = vadd.f32 %v785, 1e-05
        %v790 = vadd.f32 %v786, 1e-05
        %v791 = vrsqrt.pop %v787
        %v792 = vrsqrt.pop %v788
        %v793 = vrsqrt.pop %v789
        %v794 = vrsqrt.pop %v790
        %v795 = vmul.f32 %v751, %v791
        %v796 = vmul.f32 %v752, %v792
        %v797 = vmul.f32 %v753, %v793
        %v798 = vmul.f32 %v754, %v794
        %v799 = vlaneseq
        %v800 = vshrl.u32 %v799, 7
        %v801 = vsub.s32 0, %v800
        %v802 = vrot.slane %v469, %v801
        %v803 = vmul.f32 %v795, %v802
        %v804 = vmul.f32 %v796, %v802
        %v805 = vmul.f32 %v797, %v802
        %v806 = vmul.f32 %v798, %v802
        %v807 = vlaneseq
        %v808 = vshrl.u32 %v807, 7
        %v809 = vsub.s32 1, %v808
        %v810 = vrot.slane %v469, %v809
        %v811 = vadd.f32 %v803, %v810
        %v812 = vadd.f32 %v804, %v810
        %v813 = vadd.f32 %v805, %v810
        %v814 = vadd.f32 %v806, %v810
        %v815 = vadd.f32 %v465, %v811
        %v816 = vadd.f32 %v466, %v812
        %v817 = vadd.f32 %v467, %v813
        %v818 = vadd.f32 %v468, %v814
        %819 = vadd.xlane.f32.xlu0 %v815
        %v820 = vpop.xlane.xlu0 %819
        %821 = vadd.xlane.f32.xlu0 %v816
        %v822 = vpop.xlane.xlu0 %821
        %823 = vadd.xlane.f32.xlu0 %v817
        %v824 = vpop.xlane.xlu0 %823
        %825 = vadd.xlane.f32.xlu0 %v818
        %v826 = vpop.xlane.xlu0 %825
        %v827 = vmul.f32 %v820, 0.03125
        %v828 = vmul.f32 %v822, 0.03125
        %v829 = vmul.f32 %v824, 0.03125
        %v830 = vmul.f32 %v826, 0.03125
        %v831 = vsub.f32 %v815, %v827
        %v832 = vsub.f32 %v816, %v828
        %v833 = vsub.f32 %v817, %v829
        %v834 = vsub.f32 %v818, %v830
        %v835 = vmul.f32 %v831, %v831
        %v836 = vmul.f32 %v832, %v832
        %v837 = vmul.f32 %v833, %v833
        %v838 = vmul.f32 %v834, %v834
        %839 = vadd.xlane.f32.xlu0 %v835
        %v840 = vpop.xlane.xlu0 %839
        %841 = vadd.xlane.f32.xlu0 %v836
        %v842 = vpop.xlane.xlu0 %841
        %843 = vadd.xlane.f32.xlu0 %v837
        %v844 = vpop.xlane.xlu0 %843
        %845 = vadd.xlane.f32.xlu0 %v838
        %v846 = vpop.xlane.xlu0 %845
        %v847 = vmul.f32 %v827, 96.0
        %v848 = vmul.f32 %v828, 96.0
        %v849 = vmul.f32 %v829, 96.0
        %v850 = vmul.f32 %v830, 96.0
        %v851 = vmul.f32 %v847, %v827
        %v852 = vmul.f32 %v848, %v828
        %v853 = vmul.f32 %v849, %v829
        %v854 = vmul.f32 %v850, %v830
        %v855 = vsub.f32 %v840, %v851
        %v856 = vsub.f32 %v842, %v852
        %v857 = vsub.f32 %v844, %v853
        %v858 = vsub.f32 %v846, %v854
        %v859 = vmul.f32 %v855, 0.03125
        %v860 = vmul.f32 %v856, 0.03125
        %v861 = vmul.f32 %v857, 0.03125
        %v862 = vmul.f32 %v858, 0.03125
        %v863 = vmax.f32 %v859, 0.0
        %v864 = vmax.f32 %v860, 0.0
        %v865 = vmax.f32 %v861, 0.0
        %v866 = vmax.f32 %v862, 0.0
        %v867 = vadd.f32 %v863, 1e-05
        %v868 = vadd.f32 %v864, 1e-05
        %v869 = vadd.f32 %v865, 1e-05
        %v870 = vadd.f32 %v866, 1e-05
        %v871 = vrsqrt.pop %v867
        %v872 = vrsqrt.pop %v868
        %v873 = vrsqrt.pop %v869
        %v874 = vrsqrt.pop %v870
        %v875 = vmul.f32 %v831, %v871
        %v876 = vmul.f32 %v832, %v872
        %v877 = vmul.f32 %v833, %v873
        %v878 = vmul.f32 %v834, %v874
        %v879 = vlaneseq
        %v880 = vshrl.u32 %v879, 7
        %v881 = vsub.s32 2, %v880
        %v882 = vrot.slane %v469, %v881
        %v883 = vmul.f32 %v875, %v882
        %v884 = vmul.f32 %v876, %v882
        %v885 = vmul.f32 %v877, %v882
        %v886 = vmul.f32 %v878, %v882
        %v887 = vlaneseq
        %v888 = vshrl.u32 %v887, 7
        %v889 = vsub.s32 3, %v888
        %v890 = vrot.slane %v469, %v889
        %v891 = vadd.f32 %v883, %v890
        %v892 = vadd.f32 %v884, %v890
        %v893 = vadd.f32 %v885, %v890
        %v894 = vadd.f32 %v886, %v890
        %v895 = vpack.c.bf16 %v892, %v891
        %v896 = vpack.c.bf16 %v894, %v893
        %v897 = vld [vmem:[%s395] sm:$0xf]
        %v898 = vld [vmem:[%s395 + $0x4] sm:$0xf]
        %v899 = vld [vmem:[%s395 + $0x8] sm:$0xf]
        %v900 = vld [vmem:[%s395 + $0xc] sm:$0xf]
        %v901 = vld [vmem:[%s395 + $0x10] sm:$0xf]
        %v902 = vld [vmem:[%s395 + $0x14] sm:$0xf]
        %v903 = vld [vmem:[%s395 + $0x18] sm:$0xf]
        %v904 = vld [vmem:[%s395 + $0x1c] sm:$0xf]
        %v905 = vld [vmem:[%s395 + $0x20] sm:$0xf]
        %v906 = vld [vmem:[%s395 + $0x24] sm:$0xf]
        %v907 = vld [vmem:[%s395 + $0x28] sm:$0xf]
        %v908 = vld [vmem:[%s395 + $0x2c] sm:$0xf]
        %v909 = vld [vmem:[%s395 + $0x30] sm:$0xf]
        %v910 = vld [vmem:[%s395 + $0x34] sm:$0xf]
        %v911 = vld [vmem:[%s395 + $0x38] sm:$0xf]
        %v912 = vld [vmem:[%s395 + $0x3c] sm:$0xf]
        %v913 = vlaneseq
        %v914 = vshrl.u32 %v913, 7
        %v915 = vsub.s32 7, %v914
        %v916 = vrot.slane %v469, %v915
        %v933 = vunpack.c.l.b16 %v897
        %v934 = vunpack.c.l.b16 %v898
        %v935 = vunpack.c.l.b16 %v899
        %v936 = vunpack.c.l.b16 %v900
        %v937 = vunpack.c.l.b16 %v901
        %v938 = vunpack.c.l.b16 %v902
        %v939 = vunpack.c.l.b16 %v903
        %v940 = vunpack.c.l.b16 %v904
        %v941 = vunpack.c.l.b16 %v905
        %v942 = vunpack.c.l.b16 %v906
        %v943 = vunpack.c.l.b16 %v907
        %v944 = vunpack.c.l.b16 %v908
        %v945 = vunpack.c.l.b16 %v909
        %v946 = vunpack.c.l.b16 %v910
        %v947 = vunpack.c.l.b16 %v911
        %v948 = vunpack.c.l.b16 %v912
        %v949 = vpack.c.b16 %v934, %v933
        %v950 = vpack.c.b16 %v936, %v935
        %v951 = vpack.c.b16 %v938, %v937
        %v952 = vpack.c.b16 %v940, %v939
        %v953 = vpack.c.b16 %v942, %v941
        %v954 = vpack.c.b16 %v944, %v943
        %v955 = vpack.c.b16 %v946, %v945
        %v956 = vpack.c.b16 %v948, %v947
        %965 = vmatprep.subr.bf16.mxu0 0
        %966 = vmatpush1.bf16.msra.mxu0 %v956
        %967 = vmatprep.subr.bf16.mxu0 0
        %968 = vmatpush1.bf16.msra.mxu0 %v955
        %969 = vmatprep.subr.bf16.mxu0 0
        %970 = vmatpush1.bf16.msra.mxu0 %v954
        %971 = vmatprep.subr.bf16.mxu0 0
        %972 = vmatpush1.bf16.msra.mxu0 %v953
        %973 = vmatprep.subr.bf16.mxu0 0
        %974 = vmatpush1.bf16.msra.mxu0 %v952
        %975 = vmatprep.subr.bf16.mxu0 0
        %976 = vmatpush1.bf16.msra.mxu0 %v951
        %977 = vmatprep.subr.bf16.mxu0 0
        %978 = vmatpush1.bf16.msra.mxu0 %v950
        %979 = vmatprep.subr.bf16.mxu0 0
        %980 = vmatpush1.bf16.msra.mxu0 %v949
        %981 = vmatprep.subr.bf16.mxu0 0
        %982 = vmatpush2.bf16.msra.mxu0 0
        %983 = vmatprep.subr.bf16.mxu0 0
        %984 = vmatpush2.bf16.msra.mxu0 0
        %985 = vmatprep.subr.bf16.mxu0 0
        %986 = vmatpush2.bf16.msra.mxu0 0
        %987 = vmatprep.subr.bf16.mxu0 0
        %988 = vmatpush2.bf16.msra.mxu0 0
        %989 = vmatprep.subr.bf16.mxu0 0
        %990 = vmatpush2.bf16.msra.mxu0 0
        %991 = vmatprep.subr.bf16.mxu0 0
        %992 = vmatpush2.bf16.msra.mxu0 0
        %993 = vmatprep.subr.bf16.mxu0 0
        %994 = vmatpush2.bf16.msra.mxu0 0
        %995 = vmatprep.subr.bf16.mxu0 0
        %996 = vmatpush2.bf16.msra.mxu0 0
        %997 = vmatprep.mubr.bf16.mxu0 0
        %998 = vmatmul.mubr.bf16.gmra.mxu0 %v895
        %v999 = vpop.f32.mrf.mxu0
        %v1000 = vadd.f32 %v916, %v999
        %v1001 = vpop.f32.mrf.mxu0
        %v1002 = vpop.f32.mrf.mxu0
        %v1003 = vadd.f32 %v916, %v1002
        %v1004 = vpop.f32.mrf.mxu0
        %1005 = vmatprep.mubr.bf16.mxu0 0
        %1006 = vmatmul.mubr.bf16.gmra.mxu0 %v896
        %v1007 = vpop.f32.mrf.mxu0
        %v1008 = vadd.f32 %v916, %v1007
        %v1009 = vpop.f32.mrf.mxu0
        %v1010 = vpop.f32.mrf.mxu0
        %v1011 = vadd.f32 %v916, %v1010
        %v1012 = vpop.f32.mrf.mxu0
        %1013 = vdwg.mxu0
        %v1014 = vmax.f32 %v1000, 0.0
        %v1015 = vmax.f32 %v1003, 0.0
        %v1016 = vmax.f32 %v1008, 0.0
        %v1017 = vmax.f32 %v1011, 0.0
        %v1018 = vpack.c.bf16 %v1015, %v1014
        %v1019 = vpack.c.bf16 %v1017, %v1016
        %v1020 = vld [vmem:[%s404] sm:$0xf]
        %v1021 = vld [vmem:[%s404 + $0x4] sm:$0xf]
        %v1022 = vld [vmem:[%s404 + $0x8] sm:$0xf]
        %v1023 = vld [vmem:[%s404 + $0xc] sm:$0xf]
        %v1024 = vld [vmem:[%s404 + $0x10] sm:$0xf]
        %v1025 = vld [vmem:[%s404 + $0x14] sm:$0xf]
        %v1026 = vld [vmem:[%s404 + $0x18] sm:$0xf]
        %v1027 = vld [vmem:[%s404 + $0x1c] sm:$0xf]
        %v1028 = vld [vmem:[%s404 + $0x20] sm:$0xf]
        %v1029 = vld [vmem:[%s404 + $0x24] sm:$0xf]
        %v1030 = vld [vmem:[%s404 + $0x28] sm:$0xf]
        %v1031 = vld [vmem:[%s404 + $0x2c] sm:$0xf]
        %v1032 = vld [vmem:[%s404 + $0x30] sm:$0xf]
        %v1033 = vld [vmem:[%s404 + $0x34] sm:$0xf]
        %v1034 = vld [vmem:[%s404 + $0x38] sm:$0xf]
        %v1035 = vld [vmem:[%s404 + $0x3c] sm:$0xf]
        %v1036 = vlaneseq
        %v1037 = vshrl.u32 %v1036, 7
        %v1038 = vsub.s32 6, %v1037
        %v1039 = vrot.slane %v469, %v1038
        %v1056 = vunpack.c.l.b16 %v1020
        %v1057 = vunpack.c.l.b16 %v1021
        %v1058 = vunpack.c.l.b16 %v1022
        %v1059 = vunpack.c.l.b16 %v1023
        %v1060 = vunpack.c.l.b16 %v1024
        %v1061 = vunpack.c.l.b16 %v1025
        %v1062 = vunpack.c.l.b16 %v1026
        %v1063 = vunpack.c.l.b16 %v1027
        %v1064 = vunpack.c.l.b16 %v1028
        %v1065 = vunpack.c.l.b16 %v1029
        %v1066 = vunpack.c.l.b16 %v1030
        %v1067 = vunpack.c.l.b16 %v1031
        %v1068 = vunpack.c.l.b16 %v1032
        %v1069 = vunpack.c.l.b16 %v1033
        %v1070 = vunpack.c.l.b16 %v1034
        %v1071 = vunpack.c.l.b16 %v1035
        %v1072 = vpack.c.b16 %v1057, %v1056
        %v1073 = vpack.c.b16 %v1059, %v1058
        %v1074 = vpack.c.b16 %v1061, %v1060
        %v1075 = vpack.c.b16 %v1063, %v1062
        %v1076 = vpack.c.b16 %v1065, %v1064
        %v1077 = vpack.c.b16 %v1067, %v1066
        %v1078 = vpack.c.b16 %v1069, %v1068
        %v1079 = vpack.c.b16 %v1071, %v1070
        %1088 = vmatprep.subr.bf16.mxu0 0
        %1089 = vmatpush1.bf16.msra.mxu0 %v1079
        %1090 = vmatprep.subr.bf16.mxu0 0
        %1091 = vmatpush1.bf16.msra.mxu0 %v1078
        %1092 = vmatprep.subr.bf16.mxu0 0
        %1093 = vmatpush1.bf16.msra.mxu0 %v1077
        %1094 = vmatprep.subr.bf16.mxu0 0
        %1095 = vmatpush1.bf16.msra.mxu0 %v1076
        %1096 = vmatprep.subr.bf16.mxu0 0
        %1097 = vmatpush1.bf16.msra.mxu0 %v1075
        %1098 = vmatprep.subr.bf16.mxu0 0
        %1099 = vmatpush1.bf16.msra.mxu0 %v1074
        %1100 = vmatprep.subr.bf16.mxu0 0
        %1101 = vmatpush1.bf16.msra.mxu0 %v1073
        %1102 = vmatprep.subr.bf16.mxu0 0
        %1103 = vmatpush1.bf16.msra.mxu0 %v1072
        %1104 = vmatprep.subr.bf16.mxu0 0
        %1105 = vmatpush2.bf16.msra.mxu0 0
        %1106 = vmatprep.subr.bf16.mxu0 0
        %1107 = vmatpush2.bf16.msra.mxu0 0
        %1108 = vmatprep.subr.bf16.mxu0 0
        %1109 = vmatpush2.bf16.msra.mxu0 0
        %1110 = vmatprep.subr.bf16.mxu0 0
        %1111 = vmatpush2.bf16.msra.mxu0 0
        %1112 = vmatprep.subr.bf16.mxu0 0
        %1113 = vmatpush2.bf16.msra.mxu0 0
        %1114 = vmatprep.subr.bf16.mxu0 0
        %1115 = vmatpush2.bf16.msra.mxu0 0
        %1116 = vmatprep.subr.bf16.mxu0 0
        %1117 = vmatpush2.bf16.msra.mxu0 0
        %1118 = vmatprep.subr.bf16.mxu0 0
        %1119 = vmatpush2.bf16.msra.mxu0 0
        %1120 = vmatprep.mubr.bf16.mxu0 0
        %1121 = vmatmul.mubr.bf16.gmra.mxu0 %v1018
        %v1122 = vpop.f32.mrf.mxu0
        %v1123 = vadd.f32 %v1039, %v1122
        %v1124 = vpop.f32.mrf.mxu0
        %v1125 = vpop.f32.mrf.mxu0
        %v1126 = vadd.f32 %v1039, %v1125
        %v1127 = vpop.f32.mrf.mxu0
        %1128 = vmatprep.mubr.bf16.mxu0 0
        %1129 = vmatmul.mubr.bf16.gmra.mxu0 %v1019
        %v1130 = vpop.f32.mrf.mxu0
        %v1131 = vadd.f32 %v1039, %v1130
        %v1132 = vpop.f32.mrf.mxu0
        %v1133 = vpop.f32.mrf.mxu0
        %v1134 = vadd.f32 %v1039, %v1133
        %v1135 = vpop.f32.mrf.mxu0
        %1136 = vdwg.mxu0
        %v1137 = vadd.f32 %v891, %v1123
        %v1138 = vadd.f32 %v892, %v1126
        %v1139 = vadd.f32 %v893, %v1131
        %v1140 = vadd.f32 %v894, %v1134
        %1141 = vadd.xlane.f32.xlu0 %v1137
        %v1142 = vpop.xlane.xlu0 %1141
        %1143 = vadd.xlane.f32.xlu0 %v1138
        %v1144 = vpop.xlane.xlu0 %1143
        %1145 = vadd.xlane.f32.xlu0 %v1139
        %v1146 = vpop.xlane.xlu0 %1145
        %1147 = vadd.xlane.f32.xlu0 %v1140
        %v1148 = vpop.xlane.xlu0 %1147
        %v1149 = vmul.f32 %v1142, 0.03125
        %v1150 = vmul.f32 %v1144, 0.03125
        %v1151 = vmul.f32 %v1146, 0.03125
        %v1152 = vmul.f32 %v1148, 0.03125
        %v1153 = vsub.f32 %v1137, %v1149
        %v1154 = vsub.f32 %v1138, %v1150
        %v1155 = vsub.f32 %v1139, %v1151
        %v1156 = vsub.f32 %v1140, %v1152
        %v1157 = vmul.f32 %v1153, %v1153
        %v1158 = vmul.f32 %v1154, %v1154
        %v1159 = vmul.f32 %v1155, %v1155
        %v1160 = vmul.f32 %v1156, %v1156
        %1161 = vadd.xlane.f32.xlu0 %v1157
        %v1162 = vpop.xlane.xlu0 %1161
        %1163 = vadd.xlane.f32.xlu0 %v1158
        %v1164 = vpop.xlane.xlu0 %1163
        %1165 = vadd.xlane.f32.xlu0 %v1159
        %v1166 = vpop.xlane.xlu0 %1165
        %1167 = vadd.xlane.f32.xlu0 %v1160
        %v1168 = vpop.xlane.xlu0 %1167
        %v1169 = vmul.f32 %v1149, 96.0
        %v1170 = vmul.f32 %v1150, 96.0
        %v1171 = vmul.f32 %v1151, 96.0
        %v1172 = vmul.f32 %v1152, 96.0
        %v1173 = vmul.f32 %v1169, %v1149
        %v1174 = vmul.f32 %v1170, %v1150
        %v1175 = vmul.f32 %v1171, %v1151
        %v1176 = vmul.f32 %v1172, %v1152
        %v1177 = vsub.f32 %v1162, %v1173
        %v1178 = vsub.f32 %v1164, %v1174
        %v1179 = vsub.f32 %v1166, %v1175
        %v1180 = vsub.f32 %v1168, %v1176
        %v1181 = vmul.f32 %v1177, 0.03125
        %v1182 = vmul.f32 %v1178, 0.03125
        %v1183 = vmul.f32 %v1179, 0.03125
        %v1184 = vmul.f32 %v1180, 0.03125
        %v1185 = vmax.f32 %v1181, 0.0
        %v1186 = vmax.f32 %v1182, 0.0
        %v1187 = vmax.f32 %v1183, 0.0
        %v1188 = vmax.f32 %v1184, 0.0
        %v1189 = vadd.f32 %v1185, 1e-05
        %v1190 = vadd.f32 %v1186, 1e-05
        %v1191 = vadd.f32 %v1187, 1e-05
        %v1192 = vadd.f32 %v1188, 1e-05
        %v1193 = vrsqrt.pop %v1189
        %v1194 = vrsqrt.pop %v1190
        %v1195 = vrsqrt.pop %v1191
        %v1196 = vrsqrt.pop %v1192
        %v1197 = vmul.f32 %v1153, %v1193
        %v1198 = vmul.f32 %v1154, %v1194
        %v1199 = vmul.f32 %v1155, %v1195
        %v1200 = vmul.f32 %v1156, %v1196
        %v1201 = vlaneseq
        %v1202 = vshrl.u32 %v1201, 7
        %v1203 = vsub.s32 4, %v1202
        %v1204 = vrot.slane %v469, %v1203
        %v1205 = vmul.f32 %v1197, %v1204
        %v1206 = vmul.f32 %v1198, %v1204
        %v1207 = vmul.f32 %v1199, %v1204
        %v1208 = vmul.f32 %v1200, %v1204
        %v1209 = vlaneseq
        %v1210 = vshrl.u32 %v1209, 7
        %v1211 = vsub.s32 5, %v1210
        %v1212 = vrot.slane %v469, %v1211
        %v1213 = vadd.f32 %v1205, %v1212
        %v1214 = vadd.f32 %v1206, %v1212
        %v1215 = vadd.f32 %v1207, %v1212
        %v1216 = vadd.f32 %v1208, %v1212
        %p1217 = scmp.ne.s32.totalorder %s36, 1
        // Predicated region
        $region77: #{tpu_custom_call.1} parent=47 // pred_check
          %p1218 = pneg %p1217
        $region78: #{tpu_custom_call.1} parent=47 // pred_check_branch
          %1220 = sbr.rel (%p1218) target = $region80
        $region79: #{tpu_custom_call.1} parent=47 // pred_region
          %1221 = vst [vmem:[%s449] sm:$0xff] %v1213
          %1222 = vst [vmem:[%s449 + $0x8] sm:$0xff] %v1214
          %1223 = vst [vmem:[%s449 + $0x10] sm:$0xff] %v1215
          %1224 = vst [vmem:[%s449 + $0x18] sm:$0xff] %v1216
        $region80: #{tpu_custom_call.1} parent=47 // pred_fallthru
          _
        %p1225 = scmp.eq.s32.totalorder %s36, 1
        // Predicated region
        $region81: #{tpu_custom_call.1} parent=47 // pred_check
          %p1226 = pneg %p1225
        $region82: #{tpu_custom_call.1} parent=47 // pred_check_branch
          %1228 = sbr.rel (%p1226) target = $region84
        $region83: #{tpu_custom_call.1} parent=47 // pred_region
          %v1229 = vld [vmem:[%s4] sm:$0x3]
          %1230 = vadd.xlane.f32.xlu0 %v1213
          %v1231 = vpop.xlane.xlu0 %1230
          %1232 = vadd.xlane.f32.xlu0 %v1214
          %v1233 = vpop.xlane.xlu0 %1232
          %1234 = vadd.xlane.f32.xlu0 %v1215
          %v1235 = vpop.xlane.xlu0 %1234
          %1236 = vadd.xlane.f32.xlu0 %v1216
          %v1237 = vpop.xlane.xlu0 %1236
          %v1238 = vmul.f32 %v1231, 0.03125
          %v1239 = vmul.f32 %v1233, 0.03125
          %v1240 = vmul.f32 %v1235, 0.03125
          %v1241 = vmul.f32 %v1237, 0.03125
          %v1242 = vsub.f32 %v1213, %v1238
          %v1243 = vsub.f32 %v1214, %v1239
          %v1244 = vsub.f32 %v1215, %v1240
          %v1245 = vsub.f32 %v1216, %v1241
          %v1246 = vmul.f32 %v1242, %v1242
          %v1247 = vmul.f32 %v1243, %v1243
          %v1248 = vmul.f32 %v1244, %v1244
          %v1249 = vmul.f32 %v1245, %v1245
          %1250 = vadd.xlane.f32.xlu0 %v1246
          %v1251 = vpop.xlane.xlu0 %1250
          %1252 = vadd.xlane.f32.xlu0 %v1247
          %v1253 = vpop.xlane.xlu0 %1252
          %1254 = vadd.xlane.f32.xlu0 %v1248
          %v1255 = vpop.xlane.xlu0 %1254
          %1256 = vadd.xlane.f32.xlu0 %v1249
          %v1257 = vpop.xlane.xlu0 %1256
          %v1258 = vmul.f32 %v1238, 96.0
          %v1259 = vmul.f32 %v1239, 96.0
          %v1260 = vmul.f32 %v1240, 96.0
          %v1261 = vmul.f32 %v1241, 96.0
          %v1262 = vmul.f32 %v1258, %v1238
          %v1263 = vmul.f32 %v1259, %v1239
          %v1264 = vmul.f32 %v1260, %v1240
          %v1265 = vmul.f32 %v1261, %v1241
          %v1266 = vsub.f32 %v1251, %v1262
          %v1267 = vsub.f32 %v1253, %v1263
          %v1268 = vsub.f32 %v1255, %v1264
          %v1269 = vsub.f32 %v1257, %v1265
          %v1270 = vmul.f32 %v1266, 0.03125
          %v1271 = vmul.f32 %v1267, 0.03125
          %v1272 = vmul.f32 %v1268, 0.03125
          %v1273 = vmul.f32 %v1269, 0.03125
          %v1274 = vmax.f32 %v1270, 0.0
          %v1275 = vmax.f32 %v1271, 0.0
          %v1276 = vmax.f32 %v1272, 0.0
          %v1277 = vmax.f32 %v1273, 0.0
          %v1278 = vadd.f32 %v1274, 1e-05
          %v1279 = vadd.f32 %v1275, 1e-05
          %v1280 = vadd.f32 %v1276, 1e-05
          %v1281 = vadd.f32 %v1277, 1e-05
          %v1282 = vrsqrt.pop %v1278
          %v1283 = vrsqrt.pop %v1279
          %v1284 = vrsqrt.pop %v1280
          %v1285 = vrsqrt.pop %v1281
          %v1286 = vmul.f32 %v1242, %v1282
          %v1287 = vmul.f32 %v1243, %v1283
          %v1288 = vmul.f32 %v1244, %v1284
          %v1289 = vmul.f32 %v1245, %v1285
          %v1290 = vlaneseq
          %v1291 = vshrl.u32 %v1290, 7
          %v1292 = vsub.s32 0, %v1291
          %v1293 = vrot.slane %v1229, %v1292
          %v1294 = vmul.f32 %v1286, %v1293
          %v1295 = vmul.f32 %v1287, %v1293
          %v1296 = vmul.f32 %v1288, %v1293
          %v1297 = vmul.f32 %v1289, %v1293
          %v1298 = vlaneseq
          %v1299 = vshrl.u32 %v1298, 7
          %v1300 = vsub.s32 1, %v1299
          %v1301 = vrot.slane %v1229, %v1300
          %v1302 = vadd.f32 %v1294, %v1301
          %v1303 = vadd.f32 %v1295, %v1301
          %v1304 = vadd.f32 %v1296, %v1301
          %v1305 = vadd.f32 %v1297, %v1301
          %1306 = vst [vmem:[%s449] sm:$0xff] %v1302
          %1307 = vst [vmem:[%s449 + $0x8] sm:$0xff] %v1303
          %1308 = vst [vmem:[%s449 + $0x10] sm:$0xff] %v1304
          %1309 = vst [vmem:[%s449 + $0x18] sm:$0xff] %v1305
        $region84: #{tpu_custom_call.1} parent=47 // pred_fallthru
          _
        %s1310 = sand.u32 %s218, 1
        %s1311 = scalar_lea.sflag [#allocation4], %s1310
        %s1312 = sand.u32 %s218, 1
        %s1313 = smul.addr %s1312, 32
        %s1314 = scalar_lea.vmem [#allocation13], %s1313
        // Predicated region
        $region85: #{tpu_custom_call.1} parent=47 // pred_check
          %p1315 = pneg %p228
        $region86: #{tpu_custom_call.1} parent=47 // pred_check_branch
          %1317 = sbr.rel (%p1315) target = $region88
        $region87: #{tpu_custom_call.1} parent=47 // pred_region
          %s1318 = smul.u32 4, %s35
          %s1320 = ssub.s32 512, 512
          %1321 = vsyncadd %s1311, %s1320
          %s1322 = smul.addr %s1318, 128
          %s1323 = scalar_lea.hbm %s7, %s1322
          %s1324 = sshll.u32 %s1314, 4
          %s1325 = int_to_ptr.vmem [resolvable:$true] %s1324
          %1330 = dma.vmem_to_hbm [thread:$0]  %s1325, 512, %s1323, %s1311, 128, 128, 8
        $region88: #{tpu_custom_call.1} parent=47 // pred_fallthru
          _
      $region48: #{tpu_custom_call.1} parent=5 // pred_fallthru
        _
      %p1331 = scmp.le.s32.totalorder 2, %s26
      // Predicated region
      $region89: #{tpu_custom_call.1} parent=5 // pred_check
        %p1332 = pneg %p1331
      $region90: #{tpu_custom_call.1} parent=5 // pred_check_branch
        %1334 = sbr.rel (%p1332) target = $region92
      $region91: #{tpu_custom_call.1} parent=5 // pred_region
        %s1335 = ssub.s32 %s26, 2
        // Predicated region
        $region93: #{tpu_custom_call.1} parent=91 // pred_check
          %p1336 = pneg %p234
        $region94: #{tpu_custom_call.1} parent=91 // pred_check_branch
          %1338 = sbr.rel (%p1336) target = $region96
        $region95: #{tpu_custom_call.1} parent=91 // pred_region
          %s1339 = sand.u32 %s219, 1
          %s1340 = scalar_lea.sflag [#allocation4], %s1339
          %s1341 = sand.u32 %s219, 1
          %s1342 = smul.addr %s1341, 32
          %s1343 = scalar_lea.vmem [#allocation13], %s1342
          %1344 = dma.done %s1340, 512
        $region96: #{tpu_custom_call.1} parent=91 // pred_fallthru
          _
      $region92: #{tpu_custom_call.1} parent=5 // pred_fallthru
        _
    $region6: #{tpu_custom_call.1} parent=1 // loop_footer
      %s30 = sadd.s32 1, %s26
    $region7: #{tpu_custom_call.1} parent=1 // loop_footer_branch
      %25 = sbr.rel target = $region3
    $region8: #{tpu_custom_call.1} parent=1 // loop_exit
      _
    %1345 = vsyncpa [#allocation3], 1
    %s1346 = scalar_lea.sflag [#allocation3], 1
    %1347 = vsyncpa %s1346, 1
    %1348 = vsyncpa [#allocation6], 1
    %1349 = vsyncpa [#allocation9], 1
    %s1350 = scalar_lea.sflag [#allocation9], 1
    %1351 = vsyncpa %s1350, 1
    %1352 = vsyncpa [#allocation12], 1
    %s1353 = scalar_lea.sflag [#allocation12], 1
    %1354 = vsyncpa %s1353, 1
    %1355 = vsyncpa [#allocation4], 1
    %s1356 = scalar_lea.sflag [#allocation4], 1
    %1357 = vsyncpa %s1356, 1

</llo_original>
